<compile_context>
chip_gen: v6e
topology: v6e:2x2x1
jax: 0.10.0
libtpu: 0.0.40
codegen_flags: <defaults>
</compile_context>

<pallas_src>
import math

import numpy as np
import jax
import jax.numpy as jnp
from jax.experimental import pallas as pl
from jax.experimental.pallas import tpu as pltpu

S_NOISE = 1.003
S_CHURN = 5.0
S_TMIN = 0.3
S_TMAX = 2.0


def _heun_sampler_kernel(coef_ref, t0_ref, n0_ref, y_ref, z_ref,
                         w1x_ref, w1y_ref, w2_ref, b1_ref, wt_ref, b2_ref,
                         o_ref):
    """Full Heun 2nd-order sampler loop fused with the synthetic denoiser.

    coef_ref : (S*8,) f32 SMEM  per-step [noise_coef, t_hat, 1/t_hat, t_next,
                                          1/t_next, dt, c1, c2]
    t0_ref   : (1,)   f32 SMEM  timesteps[0]
    n0_ref   : (N*C, P) VMEM    initial gaussian noise (HBM-aliased with output)
    y_ref    : (N*C, P) VMEM    conditioning (batch packed into sublanes)
    z_ref    : (S, N*C, P)      per-step churn noise (raw randn)
    w1x_ref  : (N*Hd, N*C)      block-diagonal first-layer weight acting on x
    w1y_ref  : (N*Hd, N*C)      block-diagonal first-layer weight acting on y
    w2_ref   : (N*C, N*Hd)      block-diagonal second-layer weight
    b1_ref   : (N*Hd, 1)        first-layer bias (batch-tiled)
    wt_ref   : (N*Hd, 1)        time-embedding weight (batch-tiled)
    b2_ref   : (N*C, 1)         second-layer bias (batch-tiled)
    o_ref    : (N*C, P)         final sample
    """
    S = z_ref.shape[0]

    w1x = w1x_ref[...].astype(jnp.bfloat16)
    w2 = w2_ref[...].astype(jnp.bfloat16)
    b1 = b1_ref[...]
    wt = wt_ref[...]
    b2 = b2_ref[...]

    # Loop-invariant conditioning contribution, hoisted out of the step loop.
    hy = jnp.dot(w1y_ref[...].astype(jnp.bfloat16),
                 y_ref[...].astype(jnp.bfloat16),
                 preferred_element_type=jnp.float32)

    def denoise(x, bt):
        # single-pass bf16 MXU matmuls with f32 accumulation; one dot per layer
        # covers the whole packed batch.
        h = jnp.dot(w1x, x.astype(jnp.bfloat16),
                    preferred_element_type=jnp.float32)
        h = jnp.maximum(h + hy + bt, 0.0)
        return jnp.dot(w2, h.astype(jnp.bfloat16),
                       preferred_element_type=jnp.float32) + b2

    # x_0 = timesteps[0] * randn  (folded into the kernel init)
    x = t0_ref[0] * n0_ref[...]

    # S is small and static -> static unroll (LLO visibility across step boundaries).
    for i in range(S):
        noise_coef = coef_ref[8 * i + 0]
        t_hat = coef_ref[8 * i + 1]
        inv_t_hat = coef_ref[8 * i + 2]
        t_next = coef_ref[8 * i + 3]
        inv_t_next = coef_ref[8 * i + 4]
        dt = coef_ref[8 * i + 5]
        c1 = coef_ref[8 * i + 6]
        c2 = coef_ref[8 * i + 7]

        x_hat = x + noise_coef * z_ref[i]                       # churned sample
        d = (x_hat - denoise(x_hat, b1 + t_hat * wt)) * inv_t_hat
        x_eul = x_hat + dt * d                                  # Euler predictor
        d_p = (x_eul - denoise(x_eul, b1 + t_next * wt)) * inv_t_next
        x = x_hat + dt * (c1 * d + c2 * d_p)                    # Heun corrector

    o_ref[...] = x


@jax.jit
def _run(coefs, t0, n0_f, y_f, z_f, w1, w2, b1, wt, b2):
    NC, P = n0_f.shape
    C = w2.shape[0]
    N = NC // C

    # Block-diagonal weights so one MXU dot covers the whole packed batch.
    eye = jnp.eye(N, dtype=jnp.float32)
    w1x_bd = jnp.kron(eye, w1[:, :C])           # (N*Hd, N*C)
    w1y_bd = jnp.kron(eye, w1[:, C:])           # (N*Hd, N*C)
    w2_bd = jnp.kron(eye, w2)                   # (N*C, N*Hd)
    b1_bd = jnp.tile(b1, (N, 1))                # (N*Hd, 1)
    wt_bd = jnp.tile(wt, (N, 1))                # (N*Hd, 1)
    b2_bd = jnp.tile(b2, (N, 1))                # (N*C, 1)

    vmem = pl.BlockSpec(memory_space=pltpu.MemorySpace.VMEM)
    smem = pl.BlockSpec(memory_space=pltpu.MemorySpace.SMEM)

    return pl.pallas_call(
        _heun_sampler_kernel,
        out_shape=jax.ShapeDtypeStruct((NC, P), jnp.float32),
        in_specs=[smem, smem, vmem, vmem, vmem,
                  vmem, vmem, vmem, vmem, vmem, vmem],
        out_specs=vmem,
        input_output_aliases={2: 0},            # noise buffer reused for the output
    )(coefs, t0, n0_f, y_f, z_f, w1x_bd, w1y_bd, w2_bd, b1_bd, wt_bd, b2_bd)


def heun_2nd_sampler_hybrid(y_wav, noise_init, step_noise, timesteps, params,
                            s_noise=S_NOISE, s_churn=S_CHURN,
                            s_tmin=S_TMIN, s_tmax=S_TMAX):
    """y_wav, noise_init: (N, C, H, W); step_noise: (steps-1, N, C, H, W); timesteps: np (steps,)."""
    N, C, H, W = y_wav.shape
    P = H * W
    steps = len(timesteps)
    S = steps - 1

    # host-side per-step scalar math (mirrors the numpy/python scalars in the torch module)
    coefs = np.zeros((S * 8,), dtype=np.float32)
    for i in range(S):
        t, t_next = float(timesteps[i]), float(timesteps[i + 1])
        gamma = min(s_churn / steps, math.sqrt(2.0) - 1.0) if (s_tmin <= t <= s_tmax) else 0.0
        t_hat = t + gamma * t
        second = i < steps - 1                       # literal module condition
        coefs[8 * i + 0] = s_noise * math.sqrt(max(t_hat * t_hat - t * t, 0.0))
        coefs[8 * i + 1] = t_hat
        coefs[8 * i + 2] = 1.0 / t_hat
        coefs[8 * i + 3] = t_next
        coefs[8 * i + 4] = (1.0 / t_next) if (second and t_next != 0.0) else 0.0
        coefs[8 * i + 5] = t_next - t_hat
        coefs[8 * i + 6] = 0.5 if second else 1.0
        coefs[8 * i + 7] = 0.5 if second else 0.0
    t0 = np.asarray([float(timesteps[0])], dtype=np.float32)

    # free reshapes (no transpose): batch folded into the sublane axis, P on lanes
    y_f = y_wav.reshape(N * C, P)
    n0_f = noise_init.reshape(N * C, P)
    z_f = step_noise.reshape(S, N * C, P)

    out_f = _run(jnp.asarray(coefs), jnp.asarray(t0), n0_f, y_f, z_f,
                 params["w1"], params["w2"], params["b1"], params["wt"], params["b2"])
    return out_f.reshape(N, C, H, W)


def _reference(y_wav, noise_init, step_noise, timesteps, params,
               s_noise=S_NOISE, s_churn=S_CHURN, s_tmin=S_TMIN, s_tmax=S_TMAX):
    """Pure-JAX mirror of the torch module's forward() with the synthetic denoiser."""
    N, C, H, W = y_wav.shape
    P = H * W
    y = y_wav.reshape(N, C, P)
    z_all = step_noise.reshape(-1, N, C, P)
    w1, w2, b1, wt, b2 = (params[k] for k in ("w1", "w2", "b1", "wt", "b2"))
    steps = len(timesteps)
    w1_bf = w1.astype(jnp.bfloat16)
    w2_bf = w2.astype(jnp.bfloat16)

    def denoiser(x_t, t):
        xy = jnp.concatenate([x_t, y], axis=1).astype(jnp.bfloat16)   # (N, 2C, P)
        h = jnp.einsum("hk,nkp->nhp", w1_bf, xy,
                       preferred_element_type=jnp.float32)
        h = jnp.maximum(h + (b1 + t * wt)[None, :, :], 0.0)
        return jnp.einsum("ch,nhp->ncp", w2_bf, h.astype(jnp.bfloat16),
                          preferred_element_type=jnp.float32) + b2[None, :, :]

    x_next = float(timesteps[0]) * noise_init.reshape(N, C, P)
    for i in range(steps - 1):
        t, t_next = float(timesteps[i]), float(timesteps[i + 1])
        x = x_next
        gamma = min(s_churn / steps, math.sqrt(2.0) - 1.0) if (s_tmin <= t <= s_tmax) else 0.0
        t_hat = t + gamma * t
        x_hat = x + s_noise * math.sqrt(max(t_hat * t_hat - t * t, 0.0)) * z_all[i]
        denoised = denoiser(x_hat, t_hat)
        d = (x_hat - denoised) / t_hat
        x_next = x_hat + (t_next - t_hat) * d
        if i < steps - 1:
            denoised_p = denoiser(x_next, t_next)
            d_p = (x_next - denoised_p) / t_next
            x_next = x_hat + (t_next - t_hat) * 0.5 * (d + d_p)
    return x_next.reshape(N, C, H, W)


if __name__ == "__main__":
    N, C, H, W = 2, 4, 16, 16
    Hd = 32
    steps = 8                                        # small demo step count

    # EDM / Karras-style sigma schedule (host-side, like the module's sigma_scheduler)
    rho, s_min, s_max = 7.0, 0.05, 3.0
    ramp = np.linspace(0.0, 1.0, steps)
    timesteps = (s_max ** (1.0 / rho) + ramp * (s_min ** (1.0 / rho) - s_max ** (1.0 / rho))) ** rho

    key = jax.random.PRNGKey(0)
    ky, kn, kz, k1, k2, k3, k4, k5 = jax.random.split(key, 8)
    y_wav = jax.random.normal(ky, (N, C, H, W), dtype=jnp.float32)
    noise_init = jax.random.normal(kn, (N, C, H, W), dtype=jnp.float32)
    step_noise = jax.random.normal(kz, (steps - 1, N, C, H, W), dtype=jnp.float32)

    # deterministic synthetic denoiser parameters (w1 = fused [Wx | Wy] over 2C channels)
    params = {
        "w1": 0.1 * jax.random.normal(k1, (Hd, 2 * C), dtype=jnp.float32),
        "b1": 0.01 * jax.random.normal(k2, (Hd, 1), dtype=jnp.float32),
        "wt": 0.1 * jax.random.normal(k3, (Hd, 1), dtype=jnp.float32),
        "w2": 0.1 * jax.random.normal(k4, (C, Hd), dtype=jnp.float32),
        "b2": 0.01 * jax.random.normal(k5, (C, 1), dtype=jnp.float32),
    }

    out = heun_2nd_sampler_hybrid(y_wav, noise_init, step_noise, timesteps, params)
    out = jax.block_until_ready(out)

    ref = _reference(y_wav, noise_init, step_noise, timesteps, params)
    assert out.shape == (N, C, H, W)
    # tolerance reflects single-pass bf16 MXU operands in both kernel and reference
    assert jnp.allclose(out, ref, atol=2e-3, rtol=2e-3), "mismatch vs JAX reference"

    print("KERNEL_OK")
</pallas_src>

<mosaic_0001>
module attributes {stable_mosaic.version = 11 : i64} {
  func.func @_heun_sampler_kernel(%arg0: memref<56xf32, #tpu.memory_space<smem>>, %arg1: memref<1xf32, #tpu.memory_space<smem>>, %arg2: memref<8x256xf32, #tpu.memory_space<vmem>>, %arg3: memref<8x256xf32, #tpu.memory_space<vmem>>, %arg4: memref<7x8x256xf32, #tpu.memory_space<vmem>>, %arg5: memref<64x8xf32, #tpu.memory_space<vmem>>, %arg6: memref<64x8xf32, #tpu.memory_space<vmem>>, %arg7: memref<8x64xf32, #tpu.memory_space<vmem>>, %arg8: memref<64x1xf32, #tpu.memory_space<vmem>>, %arg9: memref<64x1xf32, #tpu.memory_space<vmem>>, %arg10: memref<8x1xf32, #tpu.memory_space<vmem>>, %arg11: memref<8x256xf32, #tpu.memory_space<vmem>>) attributes {dimension_semantics = [], scalar_prefetch = 0 : i64, scratch_operands = 0 : i64, tpu.core_type = #tpu.core_type<tc>} {
    %c0 = arith.constant 0 : index
    %c0_0 = arith.constant 0 : index
    %0 = vector.load %arg5[%c0, %c0_0] : memref<64x8xf32, #tpu.memory_space<vmem>>, vector<64x8xf32>
    %1 = arith.truncf %0 : vector<64x8xf32> to vector<64x8xbf16>
    %c0_1 = arith.constant 0 : index
    %c0_2 = arith.constant 0 : index
    %2 = vector.load %arg7[%c0_1, %c0_2] : memref<8x64xf32, #tpu.memory_space<vmem>>, vector<8x64xf32>
    %3 = arith.truncf %2 : vector<8x64xf32> to vector<8x64xbf16>
    %c0_3 = arith.constant 0 : index
    %c0_4 = arith.constant 0 : index
    %4 = vector.load %arg8[%c0_3, %c0_4] : memref<64x1xf32, #tpu.memory_space<vmem>>, vector<64x1xf32>
    %c0_5 = arith.constant 0 : index
    %c0_6 = arith.constant 0 : index
    %5 = vector.load %arg9[%c0_5, %c0_6] : memref<64x1xf32, #tpu.memory_space<vmem>>, vector<64x1xf32>
    %c0_7 = arith.constant 0 : index
    %c0_8 = arith.constant 0 : index
    %6 = vector.load %arg10[%c0_7, %c0_8] : memref<8x1xf32, #tpu.memory_space<vmem>>, vector<8x1xf32>
    %c0_9 = arith.constant 0 : index
    %c0_10 = arith.constant 0 : index
    %7 = vector.load %arg6[%c0_9, %c0_10] : memref<64x8xf32, #tpu.memory_space<vmem>>, vector<64x8xf32>
    %8 = arith.truncf %7 : vector<64x8xf32> to vector<64x8xbf16>
    %c0_11 = arith.constant 0 : index
    %c0_12 = arith.constant 0 : index
    %9 = vector.load %arg3[%c0_11, %c0_12] : memref<8x256xf32, #tpu.memory_space<vmem>>, vector<8x256xf32>
    %10 = arith.truncf %9 : vector<8x256xf32> to vector<8x256xbf16>
    %cst = arith.constant dense<0.000000e+00> : vector<64x256xf32>
    %11 = tpu.matmul %8, %10, %cst {dimension_numbers = #tpu.dot_dimension_numbers<[1], [0], [0], [1], [0, 0, 1, 1], [], []>} : vector<64x8xbf16>, vector<8x256xbf16>, vector<64x256xf32> -> vector<64x256xf32>
    %c0_13 = arith.constant 0 : index
    %12 = memref.load %arg1[%c0_13] : memref<1xf32, #tpu.memory_space<smem>>
    %c0_14 = arith.constant 0 : index
    %c0_15 = arith.constant 0 : index
    %13 = vector.load %arg2[%c0_14, %c0_15] : memref<8x256xf32, #tpu.memory_space<vmem>>, vector<8x256xf32>
    %14 = vector.broadcast %12 : f32 to vector<8x256xf32>
    %15 = arith.mulf %14, %13 : vector<8x256xf32>
    %c0_16 = arith.constant 0 : index
    %16 = memref.load %arg0[%c0_16] : memref<56xf32, #tpu.memory_space<smem>>
    %c1 = arith.constant 1 : index
    %17 = memref.load %arg0[%c1] : memref<56xf32, #tpu.memory_space<smem>>
    %c2 = arith.constant 2 : index
    %18 = memref.load %arg0[%c2] : memref<56xf32, #tpu.memory_space<smem>>
    %c3 = arith.constant 3 : index
    %19 = memref.load %arg0[%c3] : memref<56xf32, #tpu.memory_space<smem>>
    %c4 = arith.constant 4 : index
    %20 = memref.load %arg0[%c4] : memref<56xf32, #tpu.memory_space<smem>>
    %c5 = arith.constant 5 : index
    %21 = memref.load %arg0[%c5] : memref<56xf32, #tpu.memory_space<smem>>
    %c6 = arith.constant 6 : index
    %22 = memref.load %arg0[%c6] : memref<56xf32, #tpu.memory_space<smem>>
    %c7 = arith.constant 7 : index
    %23 = memref.load %arg0[%c7] : memref<56xf32, #tpu.memory_space<smem>>
    %c0_17 = arith.constant 0 : index
    %c0_18 = arith.constant 0 : index
    %c0_19 = arith.constant 0 : index
    %24 = vector.load %arg4[%c0_17, %c0_18, %c0_19] : memref<7x8x256xf32, #tpu.memory_space<vmem>>, vector<1x8x256xf32>
    %25 = vector.shape_cast %24 : vector<1x8x256xf32> to vector<8x256xf32>
    %26 = vector.broadcast %16 : f32 to vector<8x256xf32>
    %27 = arith.mulf %26, %25 : vector<8x256xf32>
    %28 = arith.addf %15, %27 : vector<8x256xf32>
    %29 = vector.broadcast %17 : f32 to vector<64x1xf32>
    %30 = arith.mulf %29, %5 : vector<64x1xf32>
    %31 = arith.addf %4, %30 : vector<64x1xf32>
    %32 = arith.truncf %28 : vector<8x256xf32> to vector<8x256xbf16>
    %cst_20 = arith.constant dense<0.000000e+00> : vector<64x256xf32>
    %33 = tpu.matmul %1, %32, %cst_20 {dimension_numbers = #tpu.dot_dimension_numbers<[1], [0], [0], [1], [0, 0, 1, 1], [], []>} : vector<64x8xbf16>, vector<8x256xbf16>, vector<64x256xf32> -> vector<64x256xf32>
    %34 = arith.addf %33, %11 : vector<64x256xf32>
    %35 = vector.broadcast %31 : vector<64x1xf32> to vector<64x256xf32>
    %36 = arith.addf %34, %35 : vector<64x256xf32>
    %cst_21 = arith.constant 0.000000e+00 : f32
    %37 = vector.broadcast %cst_21 : f32 to vector<64x256xf32>
    %38 = arith.maximumf %36, %37 : vector<64x256xf32>
    %39 = arith.truncf %38 : vector<64x256xf32> to vector<64x256xbf16>
    %cst_22 = arith.constant dense<0.000000e+00> : vector<8x256xf32>
    %40 = tpu.matmul %3, %39, %cst_22 {dimension_numbers = #tpu.dot_dimension_numbers<[1], [0], [0], [1], [0, 0, 1, 1], [], []>} : vector<8x64xbf16>, vector<64x256xbf16>, vector<8x256xf32> -> vector<8x256xf32>
    %41 = vector.broadcast %6 : vector<8x1xf32> to vector<8x256xf32>
    %42 = arith.addf %40, %41 : vector<8x256xf32>
    %43 = arith.subf %28, %42 : vector<8x256xf32>
    %44 = vector.broadcast %18 : f32 to vector<8x256xf32>
    %45 = arith.mulf %43, %44 : vector<8x256xf32>
    %46 = vector.broadcast %21 : f32 to vector<8x256xf32>
    %47 = arith.mulf %46, %45 : vector<8x256xf32>
    %48 = arith.addf %28, %47 : vector<8x256xf32>
    %49 = vector.broadcast %19 : f32 to vector<64x1xf32>
    %50 = arith.mulf %49, %5 : vector<64x1xf32>
    %51 = arith.addf %4, %50 : vector<64x1xf32>
    %52 = arith.truncf %48 : vector<8x256xf32> to vector<8x256xbf16>
    %cst_23 = arith.constant dense<0.000000e+00> : vector<64x256xf32>
    %53 = tpu.matmul %1, %52, %cst_23 {dimension_numbers = #tpu.dot_dimension_numbers<[1], [0], [0], [1], [0, 0, 1, 1], [], []>} : vector<64x8xbf16>, vector<8x256xbf16>, vector<64x256xf32> -> vector<64x256xf32>
    %54 = arith.addf %53, %11 : vector<64x256xf32>
    %55 = vector.broadcast %51 : vector<64x1xf32> to vector<64x256xf32>
    %56 = arith.addf %54, %55 : vector<64x256xf32>
    %cst_24 = arith.constant 0.000000e+00 : f32
    %57 = vector.broadcast %cst_24 : f32 to vector<64x256xf32>
    %58 = arith.maximumf %56, %57 : vector<64x256xf32>
    %59 = arith.truncf %58 : vector<64x256xf32> to vector<64x256xbf16>
    %cst_25 = arith.constant dense<0.000000e+00> : vector<8x256xf32>
    %60 = tpu.matmul %3, %59, %cst_25 {dimension_numbers = #tpu.dot_dimension_numbers<[1], [0], [0], [1], [0, 0, 1, 1], [], []>} : vector<8x64xbf16>, vector<64x256xbf16>, vector<8x256xf32> -> vector<8x256xf32>
    %61 = vector.broadcast %6 : vector<8x1xf32> to vector<8x256xf32>
    %62 = arith.addf %60, %61 : vector<8x256xf32>
    %63 = arith.subf %48, %62 : vector<8x256xf32>
    %64 = vector.broadcast %20 : f32 to vector<8x256xf32>
    %65 = arith.mulf %63, %64 : vector<8x256xf32>
    %66 = vector.broadcast %22 : f32 to vector<8x256xf32>
    %67 = arith.mulf %66, %45 : vector<8x256xf32>
    %68 = vector.broadcast %23 : f32 to vector<8x256xf32>
    %69 = arith.mulf %68, %65 : vector<8x256xf32>
    %70 = arith.addf %67, %69 : vector<8x256xf32>
    %71 = vector.broadcast %21 : f32 to vector<8x256xf32>
    %72 = arith.mulf %71, %70 : vector<8x256xf32>
    %73 = arith.addf %28, %72 : vector<8x256xf32>
    %c8 = arith.constant 8 : index
    %74 = memref.load %arg0[%c8] : memref<56xf32, #tpu.memory_space<smem>>
    %c9 = arith.constant 9 : index
    %75 = memref.load %arg0[%c9] : memref<56xf32, #tpu.memory_space<smem>>
    %c10 = arith.constant 10 : index
    %76 = memref.load %arg0[%c10] : memref<56xf32, #tpu.memory_space<smem>>
    %c11 = arith.constant 11 : index
    %77 = memref.load %arg0[%c11] : memref<56xf32, #tpu.memory_space<smem>>
    %c12 = arith.constant 12 : index
    %78 = memref.load %arg0[%c12] : memref<56xf32, #tpu.memory_space<smem>>
    %c13 = arith.constant 13 : index
    %79 = memref.load %arg0[%c13] : memref<56xf32, #tpu.memory_space<smem>>
    %c14 = arith.constant 14 : index
    %80 = memref.load %arg0[%c14] : memref<56xf32, #tpu.memory_space<smem>>
    %c15 = arith.constant 15 : index
    %81 = memref.load %arg0[%c15] : memref<56xf32, #tpu.memory_space<smem>>
    %c1_26 = arith.constant 1 : index
    %c0_27 = arith.constant 0 : index
    %c0_28 = arith.constant 0 : index
    %82 = vector.load %arg4[%c1_26, %c0_27, %c0_28] : memref<7x8x256xf32, #tpu.memory_space<vmem>>, vector<1x8x256xf32>
    %83 = vector.shape_cast %82 : vector<1x8x256xf32> to vector<8x256xf32>
    %84 = vector.broadcast %74 : f32 to vector<8x256xf32>
    %85 = arith.mulf %84, %83 : vector<8x256xf32>
    %86 = arith.addf %73, %85 : vector<8x256xf32>
    %87 = vector.broadcast %75 : f32 to vector<64x1xf32>
    %88 = arith.mulf %87, %5 : vector<64x1xf32>
    %89 = arith.addf %4, %88 : vector<64x1xf32>
    %90 = arith.truncf %86 : vector<8x256xf32> to vector<8x256xbf16>
    %cst_29 = arith.constant dense<0.000000e+00> : vector<64x256xf32>
    %91 = tpu.matmul %1, %90, %cst_29 {dimension_numbers = #tpu.dot_dimension_numbers<[1], [0], [0], [1], [0, 0, 1, 1], [], []>} : vector<64x8xbf16>, vector<8x256xbf16>, vector<64x256xf32> -> vector<64x256xf32>
    %92 = arith.addf %91, %11 : vector<64x256xf32>
    %93 = vector.broadcast %89 : vector<64x1xf32> to vector<64x256xf32>
    %94 = arith.addf %92, %93 : vector<64x256xf32>
    %cst_30 = arith.constant 0.000000e+00 : f32
    %95 = vector.broadcast %cst_30 : f32 to vector<64x256xf32>
    %96 = arith.maximumf %94, %95 : vector<64x256xf32>
    %97 = arith.truncf %96 : vector<64x256xf32> to vector<64x256xbf16>
    %cst_31 = arith.constant dense<0.000000e+00> : vector<8x256xf32>
    %98 = tpu.matmul %3, %97, %cst_31 {dimension_numbers = #tpu.dot_dimension_numbers<[1], [0], [0], [1], [0, 0, 1, 1], [], []>} : vector<8x64xbf16>, vector<64x256xbf16>, vector<8x256xf32> -> vector<8x256xf32>
    %99 = vector.broadcast %6 : vector<8x1xf32> to vector<8x256xf32>
    %100 = arith.addf %98, %99 : vector<8x256xf32>
    %101 = arith.subf %86, %100 : vector<8x256xf32>
    %102 = vector.broadcast %76 : f32 to vector<8x256xf32>
    %103 = arith.mulf %101, %102 : vector<8x256xf32>
    %104 = vector.broadcast %79 : f32 to vector<8x256xf32>
    %105 = arith.mulf %104, %103 : vector<8x256xf32>
    %106 = arith.addf %86, %105 : vector<8x256xf32>
    %107 = vector.broadcast %77 : f32 to vector<64x1xf32>
    %108 = arith.mulf %107, %5 : vector<64x1xf32>
    %109 = arith.addf %4, %108 : vector<64x1xf32>
    %110 = arith.truncf %106 : vector<8x256xf32> to vector<8x256xbf16>
    %cst_32 = arith.constant dense<0.000000e+00> : vector<64x256xf32>
    %111 = tpu.matmul %1, %110, %cst_32 {dimension_numbers = #tpu.dot_dimension_numbers<[1], [0], [0], [1], [0, 0, 1, 1], [], []>} : vector<64x8xbf16>, vector<8x256xbf16>, vector<64x256xf32> -> vector<64x256xf32>
    %112 = arith.addf %111, %11 : vector<64x256xf32>
    %113 = vector.broadcast %109 : vector<64x1xf32> to vector<64x256xf32>
    %114 = arith.addf %112, %113 : vector<64x256xf32>
    %cst_33 = arith.constant 0.000000e+00 : f32
    %115 = vector.broadcast %cst_33 : f32 to vector<64x256xf32>
    %116 = arith.maximumf %114, %115 : vector<64x256xf32>
    %117 = arith.truncf %116 : vector<64x256xf32> to vector<64x256xbf16>
    %cst_34 = arith.constant dense<0.000000e+00> : vector<8x256xf32>
    %118 = tpu.matmul %3, %117, %cst_34 {dimension_numbers = #tpu.dot_dimension_numbers<[1], [0], [0], [1], [0, 0, 1, 1], [], []>} : vector<8x64xbf16>, vector<64x256xbf16>, vector<8x256xf32> -> vector<8x256xf32>
    %119 = vector.broadcast %6 : vector<8x1xf32> to vector<8x256xf32>
    %120 = arith.addf %118, %119 : vector<8x256xf32>
    %121 = arith.subf %106, %120 : vector<8x256xf32>
    %122 = vector.broadcast %78 : f32 to vector<8x256xf32>
    %123 = arith.mulf %121, %122 : vector<8x256xf32>
    %124 = vector.broadcast %80 : f32 to vector<8x256xf32>
    %125 = arith.mulf %124, %103 : vector<8x256xf32>
    %126 = vector.broadcast %81 : f32 to vector<8x256xf32>
    %127 = arith.mulf %126, %123 : vector<8x256xf32>
    %128 = arith.addf %125, %127 : vector<8x256xf32>
    %129 = vector.broadcast %79 : f32 to vector<8x256xf32>
    %130 = arith.mulf %129, %128 : vector<8x256xf32>
    %131 = arith.addf %86, %130 : vector<8x256xf32>
    %c16 = arith.constant 16 : index
    %132 = memref.load %arg0[%c16] : memref<56xf32, #tpu.memory_space<smem>>
    %c17 = arith.constant 17 : index
    %133 = memref.load %arg0[%c17] : memref<56xf32, #tpu.memory_space<smem>>
    %c18 = arith.constant 18 : index
    %134 = memref.load %arg0[%c18] : memref<56xf32, #tpu.memory_space<smem>>
    %c19 = arith.constant 19 : index
    %135 = memref.load %arg0[%c19] : memref<56xf32, #tpu.memory_space<smem>>
    %c20 = arith.constant 20 : index
    %136 = memref.load %arg0[%c20] : memref<56xf32, #tpu.memory_space<smem>>
    %c21 = arith.constant 21 : index
    %137 = memref.load %arg0[%c21] : memref<56xf32, #tpu.memory_space<smem>>
    %c22 = arith.constant 22 : index
    %138 = memref.load %arg0[%c22] : memref<56xf32, #tpu.memory_space<smem>>
    %c23 = arith.constant 23 : index
    %139 = memref.load %arg0[%c23] : memref<56xf32, #tpu.memory_space<smem>>
    %c2_35 = arith.constant 2 : index
    %c0_36 = arith.constant 0 : index
    %c0_37 = arith.constant 0 : index
    %140 = vector.load %arg4[%c2_35, %c0_36, %c0_37] : memref<7x8x256xf32, #tpu.memory_space<vmem>>, vector<1x8x256xf32>
    %141 = vector.shape_cast %140 : vector<1x8x256xf32> to vector<8x256xf32>
    %142 = vector.broadcast %132 : f32 to vector<8x256xf32>
    %143 = arith.mulf %142, %141 : vector<8x256xf32>
    %144 = arith.addf %131, %143 : vector<8x256xf32>
    %145 = vector.broadcast %133 : f32 to vector<64x1xf32>
    %146 = arith.mulf %145, %5 : vector<64x1xf32>
    %147 = arith.addf %4, %146 : vector<64x1xf32>
    %148 = arith.truncf %144 : vector<8x256xf32> to vector<8x256xbf16>
    %cst_38 = arith.constant dense<0.000000e+00> : vector<64x256xf32>
    %149 = tpu.matmul %1, %148, %cst_38 {dimension_numbers = #tpu.dot_dimension_numbers<[1], [0], [0], [1], [0, 0, 1, 1], [], []>} : vector<64x8xbf16>, vector<8x256xbf16>, vector<64x256xf32> -> vector<64x256xf32>
    %150 = arith.addf %149, %11 : vector<64x256xf32>
    %151 = vector.broadcast %147 : vector<64x1xf32> to vector<64x256xf32>
    %152 = arith.addf %150, %151 : vector<64x256xf32>
    %cst_39 = arith.constant 0.000000e+00 : f32
    %153 = vector.broadcast %cst_39 : f32 to vector<64x256xf32>
    %154 = arith.maximumf %152, %153 : vector<64x256xf32>
    %155 = arith.truncf %154 : vector<64x256xf32> to vector<64x256xbf16>
    %cst_40 = arith.constant dense<0.000000e+00> : vector<8x256xf32>
    %156 = tpu.matmul %3, %155, %cst_40 {dimension_numbers = #tpu.dot_dimension_numbers<[1], [0], [0], [1], [0, 0, 1, 1], [], []>} : vector<8x64xbf16>, vector<64x256xbf16>, vector<8x256xf32> -> vector<8x256xf32>
    %157 = vector.broadcast %6 : vector<8x1xf32> to vector<8x256xf32>
    %158 = arith.addf %156, %157 : vector<8x256xf32>
    %159 = arith.subf %144, %158 : vector<8x256xf32>
    %160 = vector.broadcast %134 : f32 to vector<8x256xf32>
    %161 = arith.mulf %159, %160 : vector<8x256xf32>
    %162 = vector.broadcast %137 : f32 to vector<8x256xf32>
    %163 = arith.mulf %162, %161 : vector<8x256xf32>
    %164 = arith.addf %144, %163 : vector<8x256xf32>
    %165 = vector.broadcast %135 : f32 to vector<64x1xf32>
    %166 = arith.mulf %165, %5 : vector<64x1xf32>
    %167 = arith.addf %4, %166 : vector<64x1xf32>
    %168 = arith.truncf %164 : vector<8x256xf32> to vector<8x256xbf16>
    %cst_41 = arith.constant dense<0.000000e+00> : vector<64x256xf32>
    %169 = tpu.matmul %1, %168, %cst_41 {dimension_numbers = #tpu.dot_dimension_numbers<[1], [0], [0], [1], [0, 0, 1, 1], [], []>} : vector<64x8xbf16>, vector<8x256xbf16>, vector<64x256xf32> -> vector<64x256xf32>
    %170 = arith.addf %169, %11 : vector<64x256xf32>
    %171 = vector.broadcast %167 : vector<64x1xf32> to vector<64x256xf32>
    %172 = arith.addf %170, %171 : vector<64x256xf32>
    %cst_42 = arith.constant 0.000000e+00 : f32
    %173 = vector.broadcast %cst_42 : f32 to vector<64x256xf32>
    %174 = arith.maximumf %172, %173 : vector<64x256xf32>
    %175 = arith.truncf %174 : vector<64x256xf32> to vector<64x256xbf16>
    %cst_43 = arith.constant dense<0.000000e+00> : vector<8x256xf32>
    %176 = tpu.matmul %3, %175, %cst_43 {dimension_numbers = #tpu.dot_dimension_numbers<[1], [0], [0], [1], [0, 0, 1, 1], [], []>} : vector<8x64xbf16>, vector<64x256xbf16>, vector<8x256xf32> -> vector<8x256xf32>
    %177 = vector.broadcast %6 : vector<8x1xf32> to vector<8x256xf32>
    %178 = arith.addf %176, %177 : vector<8x256xf32>
    %179 = arith.subf %164, %178 : vector<8x256xf32>
    %180 = vector.broadcast %136 : f32 to vector<8x256xf32>
    %181 = arith.mulf %179, %180 : vector<8x256xf32>
    %182 = vector.broadcast %138 : f32 to vector<8x256xf32>
    %183 = arith.mulf %182, %161 : vector<8x256xf32>
    %184 = vector.broadcast %139 : f32 to vector<8x256xf32>
    %185 = arith.mulf %184, %181 : vector<8x256xf32>
    %186 = arith.addf %183, %185 : vector<8x256xf32>
    %187 = vector.broadcast %137 : f32 to vector<8x256xf32>
    %188 = arith.mulf %187, %186 : vector<8x256xf32>
    %189 = arith.addf %144, %188 : vector<8x256xf32>
    %c24 = arith.constant 24 : index
    %190 = memref.load %arg0[%c24] : memref<56xf32, #tpu.memory_space<smem>>
    %c25 = arith.constant 25 : index
    %191 = memref.load %arg0[%c25] : memref<56xf32, #tpu.memory_space<smem>>
    %c26 = arith.constant 26 : index
    %192 = memref.load %arg0[%c26] : memref<56xf32, #tpu.memory_space<smem>>
    %c27 = arith.constant 27 : index
    %193 = memref.load %arg0[%c27] : memref<56xf32, #tpu.memory_space<smem>>
    %c28 = arith.constant 28 : index
    %194 = memref.load %arg0[%c28] : memref<56xf32, #tpu.memory_space<smem>>
    %c29 = arith.constant 29 : index
    %195 = memref.load %arg0[%c29] : memref<56xf32, #tpu.memory_space<smem>>
    %c30 = arith.constant 30 : index
    %196 = memref.load %arg0[%c30] : memref<56xf32, #tpu.memory_space<smem>>
    %c31 = arith.constant 31 : index
    %197 = memref.load %arg0[%c31] : memref<56xf32, #tpu.memory_space<smem>>
    %c3_44 = arith.constant 3 : index
    %c0_45 = arith.constant 0 : index
    %c0_46 = arith.constant 0 : index
    %198 = vector.load %arg4[%c3_44, %c0_45, %c0_46] : memref<7x8x256xf32, #tpu.memory_space<vmem>>, vector<1x8x256xf32>
    %199 = vector.shape_cast %198 : vector<1x8x256xf32> to vector<8x256xf32>
    %200 = vector.broadcast %190 : f32 to vector<8x256xf32>
    %201 = arith.mulf %200, %199 : vector<8x256xf32>
    %202 = arith.addf %189, %201 : vector<8x256xf32>
    %203 = vector.broadcast %191 : f32 to vector<64x1xf32>
    %204 = arith.mulf %203, %5 : vector<64x1xf32>
    %205 = arith.addf %4, %204 : vector<64x1xf32>
    %206 = arith.truncf %202 : vector<8x256xf32> to vector<8x256xbf16>
    %cst_47 = arith.constant dense<0.000000e+00> : vector<64x256xf32>
    %207 = tpu.matmul %1, %206, %cst_47 {dimension_numbers = #tpu.dot_dimension_numbers<[1], [0], [0], [1], [0, 0, 1, 1], [], []>} : vector<64x8xbf16>, vector<8x256xbf16>, vector<64x256xf32> -> vector<64x256xf32>
    %208 = arith.addf %207, %11 : vector<64x256xf32>
    %209 = vector.broadcast %205 : vector<64x1xf32> to vector<64x256xf32>
    %210 = arith.addf %208, %209 : vector<64x256xf32>
    %cst_48 = arith.constant 0.000000e+00 : f32
    %211 = vector.broadcast %cst_48 : f32 to vector<64x256xf32>
    %212 = arith.maximumf %210, %211 : vector<64x256xf32>
    %213 = arith.truncf %212 : vector<64x256xf32> to vector<64x256xbf16>
    %cst_49 = arith.constant dense<0.000000e+00> : vector<8x256xf32>
    %214 = tpu.matmul %3, %213, %cst_49 {dimension_numbers = #tpu.dot_dimension_numbers<[1], [0], [0], [1], [0, 0, 1, 1], [], []>} : vector<8x64xbf16>, vector<64x256xbf16>, vector<8x256xf32> -> vector<8x256xf32>
    %215 = vector.broadcast %6 : vector<8x1xf32> to vector<8x256xf32>
    %216 = arith.addf %214, %215 : vector<8x256xf32>
    %217 = arith.subf %202, %216 : vector<8x256xf32>
    %218 = vector.broadcast %192 : f32 to vector<8x256xf32>
    %219 = arith.mulf %217, %218 : vector<8x256xf32>
    %220 = vector.broadcast %195 : f32 to vector<8x256xf32>
    %221 = arith.mulf %220, %219 : vector<8x256xf32>
    %222 = arith.addf %202, %221 : vector<8x256xf32>
    %223 = vector.broadcast %193 : f32 to vector<64x1xf32>
    %224 = arith.mulf %223, %5 : vector<64x1xf32>
    %225 = arith.addf %4, %224 : vector<64x1xf32>
    %226 = arith.truncf %222 : vector<8x256xf32> to vector<8x256xbf16>
    %cst_50 = arith.constant dense<0.000000e+00> : vector<64x256xf32>
    %227 = tpu.matmul %1, %226, %cst_50 {dimension_numbers = #tpu.dot_dimension_numbers<[1], [0], [0], [1], [0, 0, 1, 1], [], []>} : vector<64x8xbf16>, vector<8x256xbf16>, vector<64x256xf32> -> vector<64x256xf32>
    %228 = arith.addf %227, %11 : vector<64x256xf32>
    %229 = vector.broadcast %225 : vector<64x1xf32> to vector<64x256xf32>
    %230 = arith.addf %228, %229 : vector<64x256xf32>
    %cst_51 = arith.constant 0.000000e+00 : f32
    %231 = vector.broadcast %cst_51 : f32 to vector<64x256xf32>
    %232 = arith.maximumf %230, %231 : vector<64x256xf32>
    %233 = arith.truncf %232 : vector<64x256xf32> to vector<64x256xbf16>
    %cst_52 = arith.constant dense<0.000000e+00> : vector<8x256xf32>
    %234 = tpu.matmul %3, %233, %cst_52 {dimension_numbers = #tpu.dot_dimension_numbers<[1], [0], [0], [1], [0, 0, 1, 1], [], []>} : vector<8x64xbf16>, vector<64x256xbf16>, vector<8x256xf32> -> vector<8x256xf32>
    %235 = vector.broadcast %6 : vector<8x1xf32> to vector<8x256xf32>
    %236 = arith.addf %234, %235 : vector<8x256xf32>
    %237 = arith.subf %222, %236 : vector<8x256xf32>
    %238 = vector.broadcast %194 : f32 to vector<8x256xf32>
    %239 = arith.mulf %237, %238 : vector<8x256xf32>
    %240 = vector.broadcast %196 : f32 to vector<8x256xf32>
    %241 = arith.mulf %240, %219 : vector<8x256xf32>
    %242 = vector.broadcast %197 : f32 to vector<8x256xf32>
    %243 = arith.mulf %242, %239 : vector<8x256xf32>
    %244 = arith.addf %241, %243 : vector<8x256xf32>
    %245 = vector.broadcast %195 : f32 to vector<8x256xf32>
    %246 = arith.mulf %245, %244 : vector<8x256xf32>
    %247 = arith.addf %202, %246 : vector<8x256xf32>
    %c32 = arith.constant 32 : index
    %248 = memref.load %arg0[%c32] : memref<56xf32, #tpu.memory_space<smem>>
    %c33 = arith.constant 33 : index
    %249 = memref.load %arg0[%c33] : memref<56xf32, #tpu.memory_space<smem>>
    %c34 = arith.constant 34 : index
    %250 = memref.load %arg0[%c34] : memref<56xf32, #tpu.memory_space<smem>>
    %c35 = arith.constant 35 : index
    %251 = memref.load %arg0[%c35] : memref<56xf32, #tpu.memory_space<smem>>
    %c36 = arith.constant 36 : index
    %252 = memref.load %arg0[%c36] : memref<56xf32, #tpu.memory_space<smem>>
    %c37 = arith.constant 37 : index
    %253 = memref.load %arg0[%c37] : memref<56xf32, #tpu.memory_space<smem>>
    %c38 = arith.constant 38 : index
    %254 = memref.load %arg0[%c38] : memref<56xf32, #tpu.memory_space<smem>>
    %c39 = arith.constant 39 : index
    %255 = memref.load %arg0[%c39] : memref<56xf32, #tpu.memory_space<smem>>
    %c4_53 = arith.constant 4 : index
    %c0_54 = arith.constant 0 : index
    %c0_55 = arith.constant 0 : index
    %256 = vector.load %arg4[%c4_53, %c0_54, %c0_55] : memref<7x8x256xf32, #tpu.memory_space<vmem>>, vector<1x8x256xf32>
    %257 = vector.shape_cast %256 : vector<1x8x256xf32> to vector<8x256xf32>
    %258 = vector.broadcast %248 : f32 to vector<8x256xf32>
    %259 = arith.mulf %258, %257 : vector<8x256xf32>
    %260 = arith.addf %247, %259 : vector<8x256xf32>
    %261 = vector.broadcast %249 : f32 to vector<64x1xf32>
    %262 = arith.mulf %261, %5 : vector<64x1xf32>
    %263 = arith.addf %4, %262 : vector<64x1xf32>
    %264 = arith.truncf %260 : vector<8x256xf32> to vector<8x256xbf16>
    %cst_56 = arith.constant dense<0.000000e+00> : vector<64x256xf32>
    %265 = tpu.matmul %1, %264, %cst_56 {dimension_numbers = #tpu.dot_dimension_numbers<[1], [0], [0], [1], [0, 0, 1, 1], [], []>} : vector<64x8xbf16>, vector<8x256xbf16>, vector<64x256xf32> -> vector<64x256xf32>
    %266 = arith.addf %265, %11 : vector<64x256xf32>
    %267 = vector.broadcast %263 : vector<64x1xf32> to vector<64x256xf32>
    %268 = arith.addf %266, %267 : vector<64x256xf32>
    %cst_57 = arith.constant 0.000000e+00 : f32
    %269 = vector.broadcast %cst_57 : f32 to vector<64x256xf32>
    %270 = arith.maximumf %268, %269 : vector<64x256xf32>
    %271 = arith.truncf %270 : vector<64x256xf32> to vector<64x256xbf16>
    %cst_58 = arith.constant dense<0.000000e+00> : vector<8x256xf32>
    %272 = tpu.matmul %3, %271, %cst_58 {dimension_numbers = #tpu.dot_dimension_numbers<[1], [0], [0], [1], [0, 0, 1, 1], [], []>} : vector<8x64xbf16>, vector<64x256xbf16>, vector<8x256xf32> -> vector<8x256xf32>
    %273 = vector.broadcast %6 : vector<8x1xf32> to vector<8x256xf32>
    %274 = arith.addf %272, %273 : vector<8x256xf32>
    %275 = arith.subf %260, %274 : vector<8x256xf32>
    %276 = vector.broadcast %250 : f32 to vector<8x256xf32>
    %277 = arith.mulf %275, %276 : vector<8x256xf32>
    %278 = vector.broadcast %253 : f32 to vector<8x256xf32>
    %279 = arith.mulf %278, %277 : vector<8x256xf32>
    %280 = arith.addf %260, %279 : vector<8x256xf32>
    %281 = vector.broadcast %251 : f32 to vector<64x1xf32>
    %282 = arith.mulf %281, %5 : vector<64x1xf32>
    %283 = arith.addf %4, %282 : vector<64x1xf32>
    %284 = arith.truncf %280 : vector<8x256xf32> to vector<8x256xbf16>
    %cst_59 = arith.constant dense<0.000000e+00> : vector<64x256xf32>
    %285 = tpu.matmul %1, %284, %cst_59 {dimension_numbers = #tpu.dot_dimension_numbers<[1], [0], [0], [1], [0, 0, 1, 1], [], []>} : vector<64x8xbf16>, vector<8x256xbf16>, vector<64x256xf32> -> vector<64x256xf32>
    %286 = arith.addf %285, %11 : vector<64x256xf32>
    %287 = vector.broadcast %283 : vector<64x1xf32> to vector<64x256xf32>
    %288 = arith.addf %286, %287 : vector<64x256xf32>
    %cst_60 = arith.constant 0.000000e+00 : f32
    %289 = vector.broadcast %cst_60 : f32 to vector<64x256xf32>
    %290 = arith.maximumf %288, %289 : vector<64x256xf32>
    %291 = arith.truncf %290 : vector<64x256xf32> to vector<64x256xbf16>
    %cst_61 = arith.constant dense<0.000000e+00> : vector<8x256xf32>
    %292 = tpu.matmul %3, %291, %cst_61 {dimension_numbers = #tpu.dot_dimension_numbers<[1], [0], [0], [1], [0, 0, 1, 1], [], []>} : vector<8x64xbf16>, vector<64x256xbf16>, vector<8x256xf32> -> vector<8x256xf32>
    %293 = vector.broadcast %6 : vector<8x1xf32> to vector<8x256xf32>
    %294 = arith.addf %292, %293 : vector<8x256xf32>
    %295 = arith.subf %280, %294 : vector<8x256xf32>
    %296 = vector.broadcast %252 : f32 to vector<8x256xf32>
    %297 = arith.mulf %295, %296 : vector<8x256xf32>
    %298 = vector.broadcast %254 : f32 to vector<8x256xf32>
    %299 = arith.mulf %298, %277 : vector<8x256xf32>
    %300 = vector.broadcast %255 : f32 to vector<8x256xf32>
    %301 = arith.mulf %300, %297 : vector<8x256xf32>
    %302 = arith.addf %299, %301 : vector<8x256xf32>
    %303 = vector.broadcast %253 : f32 to vector<8x256xf32>
    %304 = arith.mulf %303, %302 : vector<8x256xf32>
    %305 = arith.addf %260, %304 : vector<8x256xf32>
    %c40 = arith.constant 40 : index
    %306 = memref.load %arg0[%c40] : memref<56xf32, #tpu.memory_space<smem>>
    %c41 = arith.constant 41 : index
    %307 = memref.load %arg0[%c41] : memref<56xf32, #tpu.memory_space<smem>>
    %c42 = arith.constant 42 : index
    %308 = memref.load %arg0[%c42] : memref<56xf32, #tpu.memory_space<smem>>
    %c43 = arith.constant 43 : index
    %309 = memref.load %arg0[%c43] : memref<56xf32, #tpu.memory_space<smem>>
    %c44 = arith.constant 44 : index
    %310 = memref.load %arg0[%c44] : memref<56xf32, #tpu.memory_space<smem>>
    %c45 = arith.constant 45 : index
    %311 = memref.load %arg0[%c45] : memref<56xf32, #tpu.memory_space<smem>>
    %c46 = arith.constant 46 : index
    %312 = memref.load %arg0[%c46] : memref<56xf32, #tpu.memory_space<smem>>
    %c47 = arith.constant 47 : index
    %313 = memref.load %arg0[%c47] : memref<56xf32, #tpu.memory_space<smem>>
    %c5_62 = arith.constant 5 : index
    %c0_63 = arith.constant 0 : index
    %c0_64 = arith.constant 0 : index
    %314 = vector.load %arg4[%c5_62, %c0_63, %c0_64] : memref<7x8x256xf32, #tpu.memory_space<vmem>>, vector<1x8x256xf32>
    %315 = vector.shape_cast %314 : vector<1x8x256xf32> to vector<8x256xf32>
    %316 = vector.broadcast %306 : f32 to vector<8x256xf32>
    %317 = arith.mulf %316, %315 : vector<8x256xf32>
    %318 = arith.addf %305, %317 : vector<8x256xf32>
    %319 = vector.broadcast %307 : f32 to vector<64x1xf32>
    %320 = arith.mulf %319, %5 : vector<64x1xf32>
    %321 = arith.addf %4, %320 : vector<64x1xf32>
    %322 = arith.truncf %318 : vector<8x256xf32> to vector<8x256xbf16>
    %cst_65 = arith.constant dense<0.000000e+00> : vector<64x256xf32>
    %323 = tpu.matmul %1, %322, %cst_65 {dimension_numbers = #tpu.dot_dimension_numbers<[1], [0], [0], [1], [0, 0, 1, 1], [], []>} : vector<64x8xbf16>, vector<8x256xbf16>, vector<64x256xf32> -> vector<64x256xf32>
    %324 = arith.addf %323, %11 : vector<64x256xf32>
    %325 = vector.broadcast %321 : vector<64x1xf32> to vector<64x256xf32>
    %326 = arith.addf %324, %325 : vector<64x256xf32>
    %cst_66 = arith.constant 0.000000e+00 : f32
    %327 = vector.broadcast %cst_66 : f32 to vector<64x256xf32>
    %328 = arith.maximumf %326, %327 : vector<64x256xf32>
    %329 = arith.truncf %328 : vector<64x256xf32> to vector<64x256xbf16>
    %cst_67 = arith.constant dense<0.000000e+00> : vector<8x256xf32>
    %330 = tpu.matmul %3, %329, %cst_67 {dimension_numbers = #tpu.dot_dimension_numbers<[1], [0], [0], [1], [0, 0, 1, 1], [], []>} : vector<8x64xbf16>, vector<64x256xbf16>, vector<8x256xf32> -> vector<8x256xf32>
    %331 = vector.broadcast %6 : vector<8x1xf32> to vector<8x256xf32>
    %332 = arith.addf %330, %331 : vector<8x256xf32>
    %333 = arith.subf %318, %332 : vector<8x256xf32>
    %334 = vector.broadcast %308 : f32 to vector<8x256xf32>
    %335 = arith.mulf %333, %334 : vector<8x256xf32>
    %336 = vector.broadcast %311 : f32 to vector<8x256xf32>
    %337 = arith.mulf %336, %335 : vector<8x256xf32>
    %338 = arith.addf %318, %337 : vector<8x256xf32>
    %339 = vector.broadcast %309 : f32 to vector<64x1xf32>
    %340 = arith.mulf %339, %5 : vector<64x1xf32>
    %341 = arith.addf %4, %340 : vector<64x1xf32>
    %342 = arith.truncf %338 : vector<8x256xf32> to vector<8x256xbf16>
    %cst_68 = arith.constant dense<0.000000e+00> : vector<64x256xf32>
    %343 = tpu.matmul %1, %342, %cst_68 {dimension_numbers = #tpu.dot_dimension_numbers<[1], [0], [0], [1], [0, 0, 1, 1], [], []>} : vector<64x8xbf16>, vector<8x256xbf16>, vector<64x256xf32> -> vector<64x256xf32>
    %344 = arith.addf %343, %11 : vector<64x256xf32>
    %345 = vector.broadcast %341 : vector<64x1xf32> to vector<64x256xf32>
    %346 = arith.addf %344, %345 : vector<64x256xf32>
    %cst_69 = arith.constant 0.000000e+00 : f32
    %347 = vector.broadcast %cst_69 : f32 to vector<64x256xf32>
    %348 = arith.maximumf %346, %347 : vector<64x256xf32>
    %349 = arith.truncf %348 : vector<64x256xf32> to vector<64x256xbf16>
    %cst_70 = arith.constant dense<0.000000e+00> : vector<8x256xf32>
    %350 = tpu.matmul %3, %349, %cst_70 {dimension_numbers = #tpu.dot_dimension_numbers<[1], [0], [0], [1], [0, 0, 1, 1], [], []>} : vector<8x64xbf16>, vector<64x256xbf16>, vector<8x256xf32> -> vector<8x256xf32>
    %351 = vector.broadcast %6 : vector<8x1xf32> to vector<8x256xf32>
    %352 = arith.addf %350, %351 : vector<8x256xf32>
    %353 = arith.subf %338, %352 : vector<8x256xf32>
    %354 = vector.broadcast %310 : f32 to vector<8x256xf32>
    %355 = arith.mulf %353, %354 : vector<8x256xf32>
    %356 = vector.broadcast %312 : f32 to vector<8x256xf32>
    %357 = arith.mulf %356, %335 : vector<8x256xf32>
    %358 = vector.broadcast %313 : f32 to vector<8x256xf32>
    %359 = arith.mulf %358, %355 : vector<8x256xf32>
    %360 = arith.addf %357, %359 : vector<8x256xf32>
    %361 = vector.broadcast %311 : f32 to vector<8x256xf32>
    %362 = arith.mulf %361, %360 : vector<8x256xf32>
    %363 = arith.addf %318, %362 : vector<8x256xf32>
    %c48 = arith.constant 48 : index
    %364 = memref.load %arg0[%c48] : memref<56xf32, #tpu.memory_space<smem>>
    %c49 = arith.constant 49 : index
    %365 = memref.load %arg0[%c49] : memref<56xf32, #tpu.memory_space<smem>>
    %c50 = arith.constant 50 : index
    %366 = memref.load %arg0[%c50] : memref<56xf32, #tpu.memory_space<smem>>
    %c51 = arith.constant 51 : index
    %367 = memref.load %arg0[%c51] : memref<56xf32, #tpu.memory_space<smem>>
    %c52 = arith.constant 52 : index
    %368 = memref.load %arg0[%c52] : memref<56xf32, #tpu.memory_space<smem>>
    %c53 = arith.constant 53 : index
    %369 = memref.load %arg0[%c53] : memref<56xf32, #tpu.memory_space<smem>>
    %c54 = arith.constant 54 : index
    %370 = memref.load %arg0[%c54] : memref<56xf32, #tpu.memory_space<smem>>
    %c55 = arith.constant 55 : index
    %371 = memref.load %arg0[%c55] : memref<56xf32, #tpu.memory_space<smem>>
    %c6_71 = arith.constant 6 : index
    %c0_72 = arith.constant 0 : index
    %c0_73 = arith.constant 0 : index
    %372 = vector.load %arg4[%c6_71, %c0_72, %c0_73] : memref<7x8x256xf32, #tpu.memory_space<vmem>>, vector<1x8x256xf32>
    %373 = vector.shape_cast %372 : vector<1x8x256xf32> to vector<8x256xf32>
    %374 = vector.broadcast %364 : f32 to vector<8x256xf32>
    %375 = arith.mulf %374, %373 : vector<8x256xf32>
    %376 = arith.addf %363, %375 : vector<8x256xf32>
    %377 = vector.broadcast %365 : f32 to vector<64x1xf32>
    %378 = arith.mulf %377, %5 : vector<64x1xf32>
    %379 = arith.addf %4, %378 : vector<64x1xf32>
    %380 = arith.truncf %376 : vector<8x256xf32> to vector<8x256xbf16>
    %cst_74 = arith.constant dense<0.000000e+00> : vector<64x256xf32>
    %381 = tpu.matmul %1, %380, %cst_74 {dimension_numbers = #tpu.dot_dimension_numbers<[1], [0], [0], [1], [0, 0, 1, 1], [], []>} : vector<64x8xbf16>, vector<8x256xbf16>, vector<64x256xf32> -> vector<64x256xf32>
    %382 = arith.addf %381, %11 : vector<64x256xf32>
    %383 = vector.broadcast %379 : vector<64x1xf32> to vector<64x256xf32>
    %384 = arith.addf %382, %383 : vector<64x256xf32>
    %cst_75 = arith.constant 0.000000e+00 : f32
    %385 = vector.broadcast %cst_75 : f32 to vector<64x256xf32>
    %386 = arith.maximumf %384, %385 : vector<64x256xf32>
    %387 = arith.truncf %386 : vector<64x256xf32> to vector<64x256xbf16>
    %cst_76 = arith.constant dense<0.000000e+00> : vector<8x256xf32>
    %388 = tpu.matmul %3, %387, %cst_76 {dimension_numbers = #tpu.dot_dimension_numbers<[1], [0], [0], [1], [0, 0, 1, 1], [], []>} : vector<8x64xbf16>, vector<64x256xbf16>, vector<8x256xf32> -> vector<8x256xf32>
    %389 = vector.broadcast %6 : vector<8x1xf32> to vector<8x256xf32>
    %390 = arith.addf %388, %389 : vector<8x256xf32>
    %391 = arith.subf %376, %390 : vector<8x256xf32>
    %392 = vector.broadcast %366 : f32 to vector<8x256xf32>
    %393 = arith.mulf %391, %392 : vector<8x256xf32>
    %394 = vector.broadcast %369 : f32 to vector<8x256xf32>
    %395 = arith.mulf %394, %393 : vector<8x256xf32>
    %396 = arith.addf %376, %395 : vector<8x256xf32>
    %397 = vector.broadcast %367 : f32 to vector<64x1xf32>
    %398 = arith.mulf %397, %5 : vector<64x1xf32>
    %399 = arith.addf %4, %398 : vector<64x1xf32>
    %400 = arith.truncf %396 : vector<8x256xf32> to vector<8x256xbf16>
    %cst_77 = arith.constant dense<0.000000e+00> : vector<64x256xf32>
    %401 = tpu.matmul %1, %400, %cst_77 {dimension_numbers = #tpu.dot_dimension_numbers<[1], [0], [0], [1], [0, 0, 1, 1], [], []>} : vector<64x8xbf16>, vector<8x256xbf16>, vector<64x256xf32> -> vector<64x256xf32>
    %402 = arith.addf %401, %11 : vector<64x256xf32>
    %403 = vector.broadcast %399 : vector<64x1xf32> to vector<64x256xf32>
    %404 = arith.addf %402, %403 : vector<64x256xf32>
    %cst_78 = arith.constant 0.000000e+00 : f32
    %405 = vector.broadcast %cst_78 : f32 to vector<64x256xf32>
    %406 = arith.maximumf %404, %405 : vector<64x256xf32>
    %407 = arith.truncf %406 : vector<64x256xf32> to vector<64x256xbf16>
    %cst_79 = arith.constant dense<0.000000e+00> : vector<8x256xf32>
    %408 = tpu.matmul %3, %407, %cst_79 {dimension_numbers = #tpu.dot_dimension_numbers<[1], [0], [0], [1], [0, 0, 1, 1], [], []>} : vector<8x64xbf16>, vector<64x256xbf16>, vector<8x256xf32> -> vector<8x256xf32>
    %409 = vector.broadcast %6 : vector<8x1xf32> to vector<8x256xf32>
    %410 = arith.addf %408, %409 : vector<8x256xf32>
    %411 = arith.subf %396, %410 : vector<8x256xf32>
    %412 = vector.broadcast %368 : f32 to vector<8x256xf32>
    %413 = arith.mulf %411, %412 : vector<8x256xf32>
    %414 = vector.broadcast %370 : f32 to vector<8x256xf32>
    %415 = arith.mulf %414, %393 : vector<8x256xf32>
    %416 = vector.broadcast %371 : f32 to vector<8x256xf32>
    %417 = arith.mulf %416, %413 : vector<8x256xf32>
    %418 = arith.addf %415, %417 : vector<8x256xf32>
    %419 = vector.broadcast %369 : f32 to vector<8x256xf32>
    %420 = arith.mulf %419, %418 : vector<8x256xf32>
    %421 = arith.addf %376, %420 : vector<8x256xf32>
    %c0_80 = arith.constant 0 : index
    %c0_81 = arith.constant 0 : index
    %422 = vector.load %arg11[%c0_80, %c0_81] : memref<8x256xf32, #tpu.memory_space<vmem>>, vector<8x256xf32>
    tpu.vector_store %arg11[%c0_80, %c0_81], %421 {strides = array<i32>} : memref<8x256xf32, #tpu.memory_space<vmem>>, vector<8x256xf32>,
    return
  }
}

</mosaic_0001>

<llo_original>
// kernel: _run.1
$region0: #{_run.1}
  #allocation0 [shape = 'u32[]', space=smem, size = 0x4, offset = 0x4, fixed_abs, tag = 'smem constant byte address 0x4 - core index']
  #allocation1 [shape = 'u32[144,128]{1,0:T(1,128)}', space=vmem, size = 0x12000, scoped, tag = 'internal scratch']
  #allocation2 [shape = 'f32[1]{0:T(128)S(6)}', space=smem, size = 0x200, scoped, tag = 'scoped memory for _run.1']
  %s0 = inlined_call_operand.vmem [shape: f32[56], index: 0, kind: input, shape index: {}]
  %s1 = inlined_call_operand.<no memory space> [shape: f32[1], index: 1, kind: input, shape index: {}]
  %s2 = inlined_call_operand.hbm [shape: f32[8,256], index: 2, kind: input, shape index: {}, may-alias: {2,11}]
  %s3 = inlined_call_operand.vmem [shape: f32[8,256], index: 3, kind: input, shape index: {}]
  %s4 = inlined_call_operand.vmem [shape: f32[7,8,256], index: 4, kind: input, shape index: {}]
  %s5 = inlined_call_operand.vmem [shape: f32[64,8], index: 5, kind: input, shape index: {}]
  %s6 = inlined_call_operand.vmem [shape: f32[64,8], index: 6, kind: input, shape index: {}]
  %s7 = inlined_call_operand.vmem [shape: f32[8,64], index: 7, kind: input, shape index: {}]
  %s8 = inlined_call_operand.vmem [shape: f32[64,1], index: 8, kind: input, shape index: {}]
  %s9 = inlined_call_operand.vmem [shape: f32[64,1], index: 9, kind: input, shape index: {}]
  %s10 = inlined_call_operand.vmem [shape: f32[8,1], index: 10, kind: input, shape index: {}]
  %s11 = inlined_call_operand.hbm [shape: f32[8,256], index: 11, kind: output, shape index: {}, may-alias: {2,11}]
  %s12 = sld [smem:[#allocation0]]
  $region62: #{_run.1} parent=0
    _
  %s14 = ssub.s32 1, %s12
  %s15 = scalar_select 0, %s14, %s12
  %16 = sst [smem:[#allocation2]] %s1
  $region1: #{_run.1} parent=0
    #allocation3 [shape = 'u8[512]{0}', space=smem, size = 0x200, scoped, tag = 'input window, operand 0, single buffered']
    #allocation4 [shape = 's32[1]{0}', space=sflag, size = 0x4, scoped, tag = 'scoped memory for _run.1']
    #allocation5 [shape = 's32[1]{0}', space=sflag, size = 0x4, scoped, tag = 'scoped memory for _run.1']
    #allocation6 [shape = 's32[1]{0}', space=sflag, size = 0x4, scoped, tag = 'scoped memory for _run.1']
    #allocation7 [shape = 'u8[8192]{0}', space=vmem, size = 0x2000, scoped, tag = 'input window, operand 2, single buffered']
    #allocation8 [shape = 'u8[8192]{0}', space=vmem, size = 0x2000, scoped, tag = 'output window, operand 0, single buffered']
    %17 = vsyncpa [#allocation6], 0
    %18 = vsyncpa [#allocation4], 0
    %19 = vsyncpa [#allocation5], 0
    // Predicated region
    $region2: #{_run.1} parent=1 // pred_check
      _
    $region3: #{_run.1} parent=1 // pred_check_branch
      %21 = sbr.rel (0) target = $region5
    $region4: #{_run.1} parent=1 // pred_region
      %s23 = ssub.s32 16, 16
      %24 = vsyncadd [#allocation6], %s23
      %s26 = sshll.u32 %s0, 4
      %s27 = int_to_ptr.vmem [resolvable:$true] %s26
      %29 = dma.vmem_to_smem %s27, 16, [#allocation3], [#allocation6]
    $region5: #{_run.1} parent=1 // pred_fallthru
      _
    // Predicated region
    $region6: #{_run.1} parent=1 // pred_check
      _
    $region7: #{_run.1} parent=1 // pred_check_branch
      %31 = sbr.rel (0) target = $region9
    $region8: #{_run.1} parent=1 // pred_region
      _
    $region9: #{_run.1} parent=1 // pred_fallthru
      _
    // Predicated region
    $region10: #{_run.1} parent=1 // pred_check
      _
    $region11: #{_run.1} parent=1 // pred_check_branch
      %33 = sbr.rel (0) target = $region13
    $region12: #{_run.1} parent=1 // pred_region
      %s35 = ssub.s32 256, 256
      %36 = vsyncadd [#allocation4], %s35
      %s38 = sshll.u32 [#allocation7], 4
      %s39 = int_to_ptr.vmem [resolvable:$true] %s38
      %41 = dma.hbm_to_vmem [thread:$0]  %s2, 256, %s39, [#allocation4]
    $region13: #{_run.1} parent=1 // pred_fallthru
      _
    // Predicated region
    $region14: #{_run.1} parent=1 // pred_check
      _
    $region15: #{_run.1} parent=1 // pred_check_branch
      %43 = sbr.rel (0) target = $region17
    $region16: #{_run.1} parent=1 // pred_region
      _
    $region17: #{_run.1} parent=1 // pred_fallthru
      _
    // Predicated region
    $region18: #{_run.1} parent=1 // pred_check
      _
    $region19: #{_run.1} parent=1 // pred_check_branch
      %45 = sbr.rel (0) target = $region21
    $region20: #{_run.1} parent=1 // pred_region
      _
    $region21: #{_run.1} parent=1 // pred_fallthru
      _
    // Predicated region
    $region22: #{_run.1} parent=1 // pred_check
      _
    $region23: #{_run.1} parent=1 // pred_check_branch
      %47 = sbr.rel (0) target = $region25
    $region24: #{_run.1} parent=1 // pred_region
      _
    $region25: #{_run.1} parent=1 // pred_fallthru
      _
    // Predicated region
    $region26: #{_run.1} parent=1 // pred_check
      _
    $region27: #{_run.1} parent=1 // pred_check_branch
      %49 = sbr.rel (0) target = $region29
    $region28: #{_run.1} parent=1 // pred_region
      _
    $region29: #{_run.1} parent=1 // pred_fallthru
      _
    // Predicated region
    $region30: #{_run.1} parent=1 // pred_check
      _
    $region31: #{_run.1} parent=1 // pred_check_branch
      %51 = sbr.rel (0) target = $region33
    $region32: #{_run.1} parent=1 // pred_region
      _
    $region33: #{_run.1} parent=1 // pred_fallthru
      _
    // Predicated region
    $region34: #{_run.1} parent=1 // pred_check
      _
    $region35: #{_run.1} parent=1 // pred_check_branch
      %53 = sbr.rel (0) target = $region37
    $region36: #{_run.1} parent=1 // pred_region
      _
    $region37: #{_run.1} parent=1 // pred_fallthru
      _
    // Predicated region
    $region38: #{_run.1} parent=1 // pred_check
      _
    $region39: #{_run.1} parent=1 // pred_check_branch
      %55 = sbr.rel (0) target = $region41
    $region40: #{_run.1} parent=1 // pred_region
      _
    $region41: #{_run.1} parent=1 // pred_fallthru
      _
    // Predicated region
    $region42: #{_run.1} parent=1 // pred_check
      _
    $region43: #{_run.1} parent=1 // pred_check_branch
      %57 = sbr.rel (0) target = $region45
    $region44: #{_run.1} parent=1 // pred_region
      _
    $region45: #{_run.1} parent=1 // pred_fallthru
      _
    // Predicated region
    $region46: #{_run.1} parent=1 // pred_check
      _
    $region47: #{_run.1} parent=1 // pred_check_branch
      %59 = sbr.rel (0) target = $region49
    $region48: #{_run.1} parent=1 // pred_region
      %60 = dma.done [#allocation6], 16
    $region49: #{_run.1} parent=1 // pred_fallthru
      _
    // Predicated region
    $region50: #{_run.1} parent=1 // pred_check
      _
    $region51: #{_run.1} parent=1 // pred_check_branch
      %62 = sbr.rel (0) target = $region53
    $region52: #{_run.1} parent=1 // pred_region
      %63 = dma.done [#allocation4], 256
    $region53: #{_run.1} parent=1 // pred_fallthru
      _
    %64 = sfence
    %v66 = vld [vmem:[%s5] sm:$0xff]
    %v67 = vld [vmem:[%s5 + $0x8] sm:$0xff]
    %v68 = vld [vmem:[%s5 + $0x10] sm:$0xff]
    %v69 = vld [vmem:[%s5 + $0x18] sm:$0xff]
    %v70 = vld [vmem:[%s5 + $0x20] sm:$0xff]
    %v71 = vld [vmem:[%s5 + $0x28] sm:$0xff]
    %v72 = vld [vmem:[%s5 + $0x30] sm:$0xff]
    %v73 = vld [vmem:[%s5 + $0x38] sm:$0xff]
    %v74 = vpack.c.bf16 %v67, %v66
    %v75 = vpack.c.bf16 %v69, %v68
    %v76 = vpack.c.bf16 %v71, %v70
    %v77 = vpack.c.bf16 %v73, %v72
    %v78 = vld [vmem:[%s7] sm:$0xff]
    %v79 = vpack.c.bf16 %v78, %v78
    %v80 = vld [vmem:[%s8] sm:$0xff]
    %v81 = vld [vmem:[%s8 + $0x8] sm:$0xff]
    %v82 = vld [vmem:[%s8 + $0x10] sm:$0xff]
    %v83 = vld [vmem:[%s8 + $0x18] sm:$0xff]
    %v84 = vld [vmem:[%s8 + $0x20] sm:$0xff]
    %v85 = vld [vmem:[%s8 + $0x28] sm:$0xff]
    %v86 = vld [vmem:[%s8 + $0x30] sm:$0xff]
    %v87 = vld [vmem:[%s8 + $0x38] sm:$0xff]
    %v88 = vld [vmem:[%s9] sm:$0xff]
    %v89 = vld [vmem:[%s9 + $0x8] sm:$0xff]
    %v90 = vld [vmem:[%s9 + $0x10] sm:$0xff]
    %v91 = vld [vmem:[%s9 + $0x18] sm:$0xff]
    %v92 = vld [vmem:[%s9 + $0x20] sm:$0xff]
    %v93 = vld [vmem:[%s9 + $0x28] sm:$0xff]
    %v94 = vld [vmem:[%s9 + $0x30] sm:$0xff]
    %v95 = vld [vmem:[%s9 + $0x38] sm:$0xff]
    %v96 = vld [vmem:[%s10] sm:$0xff]
    %v97 = vld [vmem:[%s6] sm:$0xff]
    %v98 = vld [vmem:[%s6 + $0x8] sm:$0xff]
    %v99 = vld [vmem:[%s6 + $0x10] sm:$0xff]
    %v100 = vld [vmem:[%s6 + $0x18] sm:$0xff]
    %v101 = vld [vmem:[%s6 + $0x20] sm:$0xff]
    %v102 = vld [vmem:[%s6 + $0x28] sm:$0xff]
    %v103 = vld [vmem:[%s6 + $0x30] sm:$0xff]
    %v104 = vld [vmem:[%s6 + $0x38] sm:$0xff]
    %v105 = vpack.c.bf16 %v98, %v97
    %v106 = vpack.c.bf16 %v100, %v99
    %v107 = vpack.c.bf16 %v102, %v101
    %v108 = vpack.c.bf16 %v104, %v103
    %v109 = vld [vmem:[%s3] sm:$0xff]
    %v110 = vld [vmem:[%s3 + $0x8] sm:$0xff]
    %v111 = vpack.c.bf16 %v109, %v109
    %v112 = vpack.c.bf16 %v110, %v110
    %vm113 = vcmask 64512
    %v115 = vsel %vm113, %v105, 0
    %v118 = vsel %vm113, %v106, 0
    %v121 = vsel %vm113, %v107, 0
    %v124 = vsel %vm113, %v108, 0
    %vm126 = vcmask 1043456
    %v128 = vsel %vm126, %v111, 0
    %v131 = vsel %vm126, %v112, 0
    %133 = vmatprep.subr.bf16.mxu0 0
    %134 = vmatpush1.bf16.msra.mxu0 0
    %135 = vmatprep.subr.bf16.mxu0 0
    %136 = vmatpush1.bf16.msra.mxu0 0
    %137 = vmatprep.subr.bf16.mxu0 0
    %138 = vmatpush1.bf16.msra.mxu0 0
    %139 = vmatprep.subr.bf16.mxu0 0
    %140 = vmatpush1.bf16.msra.mxu0 0
    %141 = vmatprep.subr.bf16.mxu0 0
    %142 = vmatpush1.bf16.msra.mxu0 0
    %143 = vmatprep.subr.bf16.mxu0 0
    %144 = vmatpush1.bf16.msra.mxu0 0
    %145 = vmatprep.subr.bf16.mxu0 0
    %146 = vmatpush1.bf16.msra.mxu0 0
    %147 = vmatprep.subr.bf16.mxu0 %v131
    %148 = vmatpush1.bf16.msra.mxu0 %v128
    %149 = vmatprep.subr.bf16.mxu0 0
    %150 = vmatpush2.bf16.msra.mxu0 0
    %151 = vmatprep.subr.bf16.mxu0 0
    %152 = vmatpush2.bf16.msra.mxu0 0
    %153 = vmatprep.subr.bf16.mxu0 0
    %154 = vmatpush2.bf16.msra.mxu0 0
    %155 = vmatprep.subr.bf16.mxu0 0
    %156 = vmatpush2.bf16.msra.mxu0 0
    %157 = vmatprep.subr.bf16.mxu0 0
    %158 = vmatpush2.bf16.msra.mxu0 0
    %159 = vmatprep.subr.bf16.mxu0 0
    %160 = vmatpush2.bf16.msra.mxu0 0
    %161 = vmatprep.subr.bf16.mxu0 0
    %162 = vmatpush2.bf16.msra.mxu0 0
    %163 = vmatprep.subr.bf16.mxu0 0
    %164 = vmatpush2.bf16.msra.mxu0 0
    %165 = vmatprep.mubr.bf16.mxu0 0
    %166 = vmatmul.mubr.bf16.gmra.mxu0 %v115
    %v167 = vpop.f32.mrf.mxu0
    %v168 = vadd.f32 0.0, %v167
    %v169 = vpop.f32.mrf.mxu0
    %v170 = vadd.f32 0.0, %v169
    %v171 = vpop.f32.mrf.mxu0
    %v172 = vadd.f32 0.0, %v171
    %v173 = vpop.f32.mrf.mxu0
    %v174 = vadd.f32 0.0, %v173
    %175 = vmatprep.mubr.bf16.mxu0 0
    %176 = vmatmul.mubr.bf16.gmra.mxu0 %v118
    %v177 = vpop.f32.mrf.mxu0
    %v178 = vadd.f32 0.0, %v177
    %v179 = vpop.f32.mrf.mxu0
    %v180 = vadd.f32 0.0, %v179
    %v181 = vpop.f32.mrf.mxu0
    %v182 = vadd.f32 0.0, %v181
    %v183 = vpop.f32.mrf.mxu0
    %v184 = vadd.f32 0.0, %v183
    %185 = vmatprep.mubr.bf16.mxu0 0
    %186 = vmatmul.mubr.bf16.gmra.mxu0 %v121
    %v187 = vpop.f32.mrf.mxu0
    %v188 = vadd.f32 0.0, %v187
    %v189 = vpop.f32.mrf.mxu0
    %v190 = vadd.f32 0.0, %v189
    %v191 = vpop.f32.mrf.mxu0
    %v192 = vadd.f32 0.0, %v191
    %v193 = vpop.f32.mrf.mxu0
    %v194 = vadd.f32 0.0, %v193
    %195 = vmatprep.mubr.bf16.mxu0 0
    %196 = vmatmul.mubr.bf16.gmra.mxu0 %v124
    %v197 = vpop.f32.mrf.mxu0
    %v198 = vadd.f32 0.0, %v197
    %v199 = vpop.f32.mrf.mxu0
    %v200 = vadd.f32 0.0, %v199
    %v201 = vpop.f32.mrf.mxu0
    %v202 = vadd.f32 0.0, %v201
    %v203 = vpop.f32.mrf.mxu0
    %v204 = vadd.f32 0.0, %v203
    %205 = vdwg.mxu0
    %s206 = sld [smem:[#allocation2]]
    %v207 = vld [vmem:[#allocation7] sm:$0xff]
    %v208 = vld [vmem:[#allocation7 + $0x8] sm:$0xff]
    %v209 = vstv %s206
    %v210 = vmul.f32 %v209, %v207
    %v211 = vmul.f32 %v209, %v208
    %s212 = sld [smem:[#allocation3]]
    %s213 = sld [smem:[#allocation3 + $0x1]]
    %s214 = sld [smem:[#allocation3 + $0x2]]
    %s215 = sld [smem:[#allocation3 + $0x3]]
    %s216 = sld [smem:[#allocation3 + $0x4]]
    %s217 = sld [smem:[#allocation3 + $0x5]]
    %s218 = sld [smem:[#allocation3 + $0x6]]
    %s219 = sld [smem:[#allocation3 + $0x7]]
    %v220 = vld [vmem:[%s4] sm:$0xff]
    %v221 = vld [vmem:[%s4 + $0x8] sm:$0xff]
    %v222 = vstv %s212
    %v223 = vmul.f32 %v222, %v220
    %v224 = vmul.f32 %v222, %v221
    %v225 = vadd.f32 %v210, %v223
    %v226 = vadd.f32 %v211, %v224
    %v227 = vstv %s213
    %v228 = vmul.f32 %v227, %v88
    %v229 = vmul.f32 %v227, %v89
    %v230 = vmul.f32 %v227, %v90
    %v231 = vmul.f32 %v227, %v91
    %v232 = vmul.f32 %v227, %v92
    %v233 = vmul.f32 %v227, %v93
    %v234 = vmul.f32 %v227, %v94
    %v235 = vmul.f32 %v227, %v95
    %v236 = vadd.f32 %v80, %v228
    %v237 = vadd.f32 %v81, %v229
    %v238 = vadd.f32 %v82, %v230
    %v239 = vadd.f32 %v83, %v231
    %v240 = vadd.f32 %v84, %v232
    %v241 = vadd.f32 %v85, %v233
    %v242 = vadd.f32 %v86, %v234
    %v243 = vadd.f32 %v87, %v235
    %v244 = vpack.c.bf16 %v225, %v225
    %v245 = vpack.c.bf16 %v226, %v226
    %v247 = vsel %vm113, %v74, 0
    %v250 = vsel %vm113, %v75, 0
    %v253 = vsel %vm113, %v76, 0
    %v256 = vsel %vm113, %v77, 0
    %v259 = vsel %vm126, %v244, 0
    %v262 = vsel %vm126, %v245, 0
    %264 = vmatprep.subr.bf16.mxu0 0
    %265 = vmatpush1.bf16.msra.mxu0 0
    %266 = vmatprep.subr.bf16.mxu0 0
    %267 = vmatpush1.bf16.msra.mxu0 0
    %268 = vmatprep.subr.bf16.mxu0 0
    %269 = vmatpush1.bf16.msra.mxu0 0
    %270 = vmatprep.subr.bf16.mxu0 0
    %271 = vmatpush1.bf16.msra.mxu0 0
    %272 = vmatprep.subr.bf16.mxu0 0
    %273 = vmatpush1.bf16.msra.mxu0 0
    %274 = vmatprep.subr.bf16.mxu0 0
    %275 = vmatpush1.bf16.msra.mxu0 0
    %276 = vmatprep.subr.bf16.mxu0 0
    %277 = vmatpush1.bf16.msra.mxu0 0
    %278 = vmatprep.subr.bf16.mxu0 %v262
    %279 = vmatpush1.bf16.msra.mxu0 %v259
    %280 = vmatprep.subr.bf16.mxu0 0
    %281 = vmatpush2.bf16.msra.mxu0 0
    %282 = vmatprep.subr.bf16.mxu0 0
    %283 = vmatpush2.bf16.msra.mxu0 0
    %284 = vmatprep.subr.bf16.mxu0 0
    %285 = vmatpush2.bf16.msra.mxu0 0
    %286 = vmatprep.subr.bf16.mxu0 0
    %287 = vmatpush2.bf16.msra.mxu0 0
    %288 = vmatprep.subr.bf16.mxu0 0
    %289 = vmatpush2.bf16.msra.mxu0 0
    %290 = vmatprep.subr.bf16.mxu0 0
    %291 = vmatpush2.bf16.msra.mxu0 0
    %292 = vmatprep.subr.bf16.mxu0 0
    %293 = vmatpush2.bf16.msra.mxu0 0
    %294 = vmatprep.subr.bf16.mxu0 0
    %295 = vmatpush2.bf16.msra.mxu0 0
    %296 = vmatprep.mubr.bf16.mxu0 0
    %297 = vmatmul.mubr.bf16.gmra.mxu0 %v247
    %v298 = vpop.f32.mrf.mxu0
    %v299 = vadd.f32 %v168, %v298
    %v300 = vpop.f32.mrf.mxu0
    %v301 = vadd.f32 %v170, %v300
    %v302 = vpop.f32.mrf.mxu0
    %v303 = vadd.f32 %v172, %v302
    %v304 = vpop.f32.mrf.mxu0
    %v305 = vadd.f32 %v174, %v304
    %306 = vmatprep.mubr.bf16.mxu0 0
    %307 = vmatmul.mubr.bf16.gmra.mxu0 %v250
    %v308 = vpop.f32.mrf.mxu0
    %v309 = vadd.f32 %v178, %v308
    %v310 = vpop.f32.mrf.mxu0
    %v311 = vadd.f32 %v180, %v310
    %v312 = vpop.f32.mrf.mxu0
    %v313 = vadd.f32 %v182, %v312
    %v314 = vpop.f32.mrf.mxu0
    %v315 = vadd.f32 %v184, %v314
    %316 = vmatprep.mubr.bf16.mxu0 0
    %317 = vmatmul.mubr.bf16.gmra.mxu0 %v253
    %v318 = vpop.f32.mrf.mxu0
    %v319 = vadd.f32 %v188, %v318
    %v320 = vpop.f32.mrf.mxu0
    %v321 = vadd.f32 %v190, %v320
    %v322 = vpop.f32.mrf.mxu0
    %v323 = vadd.f32 %v192, %v322
    %v324 = vpop.f32.mrf.mxu0
    %v325 = vadd.f32 %v194, %v324
    %326 = vmatprep.mubr.bf16.mxu0 0
    %327 = vmatmul.mubr.bf16.gmra.mxu0 %v256
    %v328 = vpop.f32.mrf.mxu0
    %v329 = vadd.f32 %v198, %v328
    %v330 = vpop.f32.mrf.mxu0
    %v331 = vadd.f32 %v200, %v330
    %v332 = vpop.f32.mrf.mxu0
    %v333 = vadd.f32 %v202, %v332
    %v334 = vpop.f32.mrf.mxu0
    %v335 = vadd.f32 %v204, %v334
    %336 = vdwg.mxu0
    %338 = vset.pattern.permute.xlu0 0
    %339 = vperm.xlu0 %338, %v236
    %v340 = vpop.permute.xlu0 %339
    %343 = vset.pattern.permute.xlu0 0
    %344 = vperm.xlu0 %343, %v237
    %v345 = vpop.permute.xlu0 %344
    %348 = vset.pattern.permute.xlu0 0
    %349 = vperm.xlu0 %348, %v238
    %v350 = vpop.permute.xlu0 %349
    %353 = vset.pattern.permute.xlu0 0
    %354 = vperm.xlu0 %353, %v239
    %v355 = vpop.permute.xlu0 %354
    %358 = vset.pattern.permute.xlu0 0
    %359 = vperm.xlu0 %358, %v240
    %v360 = vpop.permute.xlu0 %359
    %363 = vset.pattern.permute.xlu0 0
    %364 = vperm.xlu0 %363, %v241
    %v365 = vpop.permute.xlu0 %364
    %368 = vset.pattern.permute.xlu0 0
    %369 = vperm.xlu0 %368, %v242
    %v370 = vpop.permute.xlu0 %369
    %373 = vset.pattern.permute.xlu0 0
    %374 = vperm.xlu0 %373, %v243
    %v375 = vpop.permute.xlu0 %374
    %v377 = vadd.f32 %v299, %v340
    %v378 = vadd.f32 %v301, %v340
    %v379 = vadd.f32 %v303, %v345
    %v380 = vadd.f32 %v305, %v345
    %v381 = vadd.f32 %v309, %v350
    %v382 = vadd.f32 %v311, %v350
    %v383 = vadd.f32 %v313, %v355
    %v384 = vadd.f32 %v315, %v355
    %v385 = vadd.f32 %v319, %v360
    %v386 = vadd.f32 %v321, %v360
    %v387 = vadd.f32 %v323, %v365
    %v388 = vadd.f32 %v325, %v365
    %v389 = vadd.f32 %v329, %v370
    %v390 = vadd.f32 %v331, %v370
    %v391 = vadd.f32 %v333, %v375
    %v392 = vadd.f32 %v335, %v375
    %v393 = vmax.f32 %v377, 0.0
    %v394 = vmax.f32 %v378, 0.0
    %v395 = vmax.f32 %v379, 0.0
    %v396 = vmax.f32 %v380, 0.0
    %v397 = vmax.f32 %v381, 0.0
    %v398 = vmax.f32 %v382, 0.0
    %v399 = vmax.f32 %v383, 0.0
    %v400 = vmax.f32 %v384, 0.0
    %v401 = vmax.f32 %v385, 0.0
    %v402 = vmax.f32 %v386, 0.0
    %v403 = vmax.f32 %v387, 0.0
    %v404 = vmax.f32 %v388, 0.0
    %v405 = vmax.f32 %v389, 0.0
    %v406 = vmax.f32 %v390, 0.0
    %v407 = vmax.f32 %v391, 0.0
    %v408 = vmax.f32 %v392, 0.0
    %v409 = vpack.c.bf16 %v395, %v393
    %v410 = vpack.c.bf16 %v396, %v394
    %v411 = vpack.c.bf16 %v399, %v397
    %v412 = vpack.c.bf16 %v400, %v398
    %v413 = vpack.c.bf16 %v403, %v401
    %v414 = vpack.c.bf16 %v404, %v402
    %v415 = vpack.c.bf16 %v407, %v405
    %v416 = vpack.c.bf16 %v408, %v406
    %418 = vset.pattern.permute.xlu0 0
    %419 = vperm.xlu0 %418, %v96
    %v420 = vpop.permute.xlu0 %419
    %vm422 = vcmask 523264
    %v424 = vsel %vm422, %v79, 0
    %426 = vmatprep.subr.bf16.mxu0 0
    %427 = vmatpush1.bf16.msra.mxu0 0
    %428 = vmatprep.subr.bf16.mxu0 0
    %429 = vmatpush1.bf16.msra.mxu0 0
    %430 = vmatprep.subr.bf16.mxu0 0
    %431 = vmatpush1.bf16.msra.mxu0 0
    %432 = vmatprep.subr.bf16.mxu0 0
    %433 = vmatpush1.bf16.msra.mxu0 0
    %434 = vmatprep.subr.bf16.mxu0 %v416
    %435 = vmatpush1.bf16.msra.mxu0 %v415
    %436 = vmatprep.subr.bf16.mxu0 %v414
    %437 = vmatpush1.bf16.msra.mxu0 %v413
    %438 = vmatprep.subr.bf16.mxu0 %v412
    %439 = vmatpush1.bf16.msra.mxu0 %v411
    %440 = vmatprep.subr.bf16.mxu0 %v410
    %441 = vmatpush1.bf16.msra.mxu0 %v409
    %442 = vmatprep.subr.bf16.mxu0 0
    %443 = vmatpush2.bf16.msra.mxu0 0
    %444 = vmatprep.subr.bf16.mxu0 0
    %445 = vmatpush2.bf16.msra.mxu0 0
    %446 = vmatprep.subr.bf16.mxu0 0
    %447 = vmatpush2.bf16.msra.mxu0 0
    %448 = vmatprep.subr.bf16.mxu0 0
    %449 = vmatpush2.bf16.msra.mxu0 0
    %450 = vmatprep.subr.bf16.mxu0 0
    %451 = vmatpush2.bf16.msra.mxu0 0
    %452 = vmatprep.subr.bf16.mxu0 0
    %453 = vmatpush2.bf16.msra.mxu0 0
    %454 = vmatprep.subr.bf16.mxu0 0
    %455 = vmatpush2.bf16.msra.mxu0 0
    %456 = vmatprep.subr.bf16.mxu0 0
    %457 = vmatpush2.bf16.msra.mxu0 0
    %458 = vmatprep.mubr.bf16.mxu0 0
    %459 = vmatmul.mubr.bf16.gmra.mxu0 %v424
    %v460 = vpop.f32.mrf.mxu0
    %v461 = vadd.f32 %v420, %v460
    %v462 = vpop.f32.mrf.mxu0
    %v463 = vadd.f32 %v420, %v462
    %v464 = vpop.f32.mrf.mxu0
    %v465 = vpop.f32.mrf.mxu0
    %466 = vdwg.mxu0
    %v467 = vsub.f32 %v225, %v461
    %v468 = vsub.f32 %v226, %v463
    %v469 = vstv %s214
    %v470 = vmul.f32 %v467, %v469
    %v471 = vmul.f32 %v468, %v469
    %v472 = vstv %s217
    %v473 = vmul.f32 %v472, %v470
    %v474 = vmul.f32 %v472, %v471
    %v475 = vadd.f32 %v225, %v473
    %v476 = vadd.f32 %v226, %v474
    %v477 = vstv %s215
    %v478 = vmul.f32 %v477, %v88
    %v479 = vmul.f32 %v477, %v89
    %v480 = vmul.f32 %v477, %v90
    %v481 = vmul.f32 %v477, %v91
    %v482 = vmul.f32 %v477, %v92
    %v483 = vmul.f32 %v477, %v93
    %v484 = vmul.f32 %v477, %v94
    %v485 = vmul.f32 %v477, %v95
    %v486 = vadd.f32 %v80, %v478
    %v487 = vadd.f32 %v81, %v479
    %v488 = vadd.f32 %v82, %v480
    %v489 = vadd.f32 %v83, %v481
    %v490 = vadd.f32 %v84, %v482
    %v491 = vadd.f32 %v85, %v483
    %v492 = vadd.f32 %v86, %v484
    %v493 = vadd.f32 %v87, %v485
    %v494 = vpack.c.bf16 %v475, %v475
    %v495 = vpack.c.bf16 %v476, %v476
    %v497 = vsel %vm126, %v494, 0
    %v500 = vsel %vm126, %v495, 0
    %502 = vmatprep.subr.bf16.mxu0 0
    %503 = vmatpush1.bf16.msra.mxu0 0
    %504 = vmatprep.subr.bf16.mxu0 0
    %505 = vmatpush1.bf16.msra.mxu0 0
    %506 = vmatprep.subr.bf16.mxu0 0
    %507 = vmatpush1.bf16.msra.mxu0 0
    %508 = vmatprep.subr.bf16.mxu0 0
    %509 = vmatpush1.bf16.msra.mxu0 0
    %510 = vmatprep.subr.bf16.mxu0 0
    %511 = vmatpush1.bf16.msra.mxu0 0
    %512 = vmatprep.subr.bf16.mxu0 0
    %513 = vmatpush1.bf16.msra.mxu0 0
    %514 = vmatprep.subr.bf16.mxu0 0
    %515 = vmatpush1.bf16.msra.mxu0 0
    %516 = vmatprep.subr.bf16.mxu0 %v500
    %517 = vmatpush1.bf16.msra.mxu0 %v497
    %518 = vmatprep.subr.bf16.mxu0 0
    %519 = vmatpush2.bf16.msra.mxu0 0
    %520 = vmatprep.subr.bf16.mxu0 0
    %521 = vmatpush2.bf16.msra.mxu0 0
    %522 = vmatprep.subr.bf16.mxu0 0
    %523 = vmatpush2.bf16.msra.mxu0 0
    %524 = vmatprep.subr.bf16.mxu0 0
    %525 = vmatpush2.bf16.msra.mxu0 0
    %526 = vmatprep.subr.bf16.mxu0 0
    %527 = vmatpush2.bf16.msra.mxu0 0
    %528 = vmatprep.subr.bf16.mxu0 0
    %529 = vmatpush2.bf16.msra.mxu0 0
    %530 = vmatprep.subr.bf16.mxu0 0
    %531 = vmatpush2.bf16.msra.mxu0 0
    %532 = vmatprep.subr.bf16.mxu0 0
    %533 = vmatpush2.bf16.msra.mxu0 0
    %534 = vmatprep.mubr.bf16.mxu0 0
    %535 = vmatmul.mubr.bf16.gmra.mxu0 %v247
    %v536 = vpop.f32.mrf.mxu0
    %v537 = vadd.f32 %v168, %v536
    %v538 = vpop.f32.mrf.mxu0
    %v539 = vadd.f32 %v170, %v538
    %v540 = vpop.f32.mrf.mxu0
    %v541 = vadd.f32 %v172, %v540
    %v542 = vpop.f32.mrf.mxu0
    %v543 = vadd.f32 %v174, %v542
    %544 = vmatprep.mubr.bf16.mxu0 0
    %545 = vmatmul.mubr.bf16.gmra.mxu0 %v250
    %v546 = vpop.f32.mrf.mxu0
    %v547 = vadd.f32 %v178, %v546
    %v548 = vpop.f32.mrf.mxu0
    %v549 = vadd.f32 %v180, %v548
    %v550 = vpop.f32.mrf.mxu0
    %v551 = vadd.f32 %v182, %v550
    %v552 = vpop.f32.mrf.mxu0
    %v553 = vadd.f32 %v184, %v552
    %554 = vmatprep.mubr.bf16.mxu0 0
    %555 = vmatmul.mubr.bf16.gmra.mxu0 %v253
    %v556 = vpop.f32.mrf.mxu0
    %v557 = vadd.f32 %v188, %v556
    %v558 = vpop.f32.mrf.mxu0
    %v559 = vadd.f32 %v190, %v558
    %v560 = vpop.f32.mrf.mxu0
    %v561 = vadd.f32 %v192, %v560
    %v562 = vpop.f32.mrf.mxu0
    %v563 = vadd.f32 %v194, %v562
    %564 = vmatprep.mubr.bf16.mxu0 0
    %565 = vmatmul.mubr.bf16.gmra.mxu0 %v256
    %v566 = vpop.f32.mrf.mxu0
    %v567 = vadd.f32 %v198, %v566
    %v568 = vpop.f32.mrf.mxu0
    %v569 = vadd.f32 %v200, %v568
    %v570 = vpop.f32.mrf.mxu0
    %v571 = vadd.f32 %v202, %v570
    %v572 = vpop.f32.mrf.mxu0
    %v573 = vadd.f32 %v204, %v572
    %574 = vdwg.mxu0
    %576 = vset.pattern.permute.xlu0 0
    %577 = vperm.xlu0 %576, %v486
    %v578 = vpop.permute.xlu0 %577
    %581 = vset.pattern.permute.xlu0 0
    %582 = vperm.xlu0 %581, %v487
    %v583 = vpop.permute.xlu0 %582
    %586 = vset.pattern.permute.xlu0 0
    %587 = vperm.xlu0 %586, %v488
    %v588 = vpop.permute.xlu0 %587
    %591 = vset.pattern.permute.xlu0 0
    %592 = vperm.xlu0 %591, %v489
    %v593 = vpop.permute.xlu0 %592
    %596 = vset.pattern.permute.xlu0 0
    %597 = vperm.xlu0 %596, %v490
    %v598 = vpop.permute.xlu0 %597
    %601 = vset.pattern.permute.xlu0 0
    %602 = vperm.xlu0 %601, %v491
    %v603 = vpop.permute.xlu0 %602
    %606 = vset.pattern.permute.xlu0 0
    %607 = vperm.xlu0 %606, %v492
    %v608 = vpop.permute.xlu0 %607
    %611 = vset.pattern.permute.xlu0 0
    %612 = vperm.xlu0 %611, %v493
    %v613 = vpop.permute.xlu0 %612
    %v615 = vadd.f32 %v537, %v578
    %v616 = vadd.f32 %v539, %v578
    %v617 = vadd.f32 %v541, %v583
    %v618 = vadd.f32 %v543, %v583
    %v619 = vadd.f32 %v547, %v588
    %v620 = vadd.f32 %v549, %v588
    %v621 = vadd.f32 %v551, %v593
    %v622 = vadd.f32 %v553, %v593
    %v623 = vadd.f32 %v557, %v598
    %v624 = vadd.f32 %v559, %v598
    %v625 = vadd.f32 %v561, %v603
    %v626 = vadd.f32 %v563, %v603
    %v627 = vadd.f32 %v567, %v608
    %v628 = vadd.f32 %v569, %v608
    %v629 = vadd.f32 %v571, %v613
    %v630 = vadd.f32 %v573, %v613
    %v631 = vmax.f32 %v615, 0.0
    %v632 = vmax.f32 %v616, 0.0
    %v633 = vmax.f32 %v617, 0.0
    %v634 = vmax.f32 %v618, 0.0
    %v635 = vmax.f32 %v619, 0.0
    %v636 = vmax.f32 %v620, 0.0
    %v637 = vmax.f32 %v621, 0.0
    %v638 = vmax.f32 %v622, 0.0
    %v639 = vmax.f32 %v623, 0.0
    %v640 = vmax.f32 %v624, 0.0
    %v641 = vmax.f32 %v625, 0.0
    %v642 = vmax.f32 %v626, 0.0
    %v643 = vmax.f32 %v627, 0.0
    %v644 = vmax.f32 %v628, 0.0
    %v645 = vmax.f32 %v629, 0.0
    %v646 = vmax.f32 %v630, 0.0
    %v647 = vpack.c.bf16 %v633, %v631
    %v648 = vpack.c.bf16 %v634, %v632
    %v649 = vpack.c.bf16 %v637, %v635
    %v650 = vpack.c.bf16 %v638, %v636
    %v651 = vpack.c.bf16 %v641, %v639
    %v652 = vpack.c.bf16 %v642, %v640
    %v653 = vpack.c.bf16 %v645, %v643
    %v654 = vpack.c.bf16 %v646, %v644
    %655 = vmatprep.subr.bf16.mxu0 0
    %656 = vmatpush1.bf16.msra.mxu0 0
    %657 = vmatprep.subr.bf16.mxu0 0
    %658 = vmatpush1.bf16.msra.mxu0 0
    %659 = vmatprep.subr.bf16.mxu0 0
    %660 = vmatpush1.bf16.msra.mxu0 0
    %661 = vmatprep.subr.bf16.mxu0 0
    %662 = vmatpush1.bf16.msra.mxu0 0
    %663 = vmatprep.subr.bf16.mxu0 %v654
    %664 = vmatpush1.bf16.msra.mxu0 %v653
    %665 = vmatprep.subr.bf16.mxu0 %v652
    %666 = vmatpush1.bf16.msra.mxu0 %v651
    %667 = vmatprep.subr.bf16.mxu0 %v650
    %668 = vmatpush1.bf16.msra.mxu0 %v649
    %669 = vmatprep.subr.bf16.mxu0 %v648
    %670 = vmatpush1.bf16.msra.mxu0 %v647
    %671 = vmatprep.subr.bf16.mxu0 0
    %672 = vmatpush2.bf16.msra.mxu0 0
    %673 = vmatprep.subr.bf16.mxu0 0
    %674 = vmatpush2.bf16.msra.mxu0 0
    %675 = vmatprep.subr.bf16.mxu0 0
    %676 = vmatpush2.bf16.msra.mxu0 0
    %677 = vmatprep.subr.bf16.mxu0 0
    %678 = vmatpush2.bf16.msra.mxu0 0
    %679 = vmatprep.subr.bf16.mxu0 0
    %680 = vmatpush2.bf16.msra.mxu0 0
    %681 = vmatprep.subr.bf16.mxu0 0
    %682 = vmatpush2.bf16.msra.mxu0 0
    %683 = vmatprep.subr.bf16.mxu0 0
    %684 = vmatpush2.bf16.msra.mxu0 0
    %685 = vmatprep.subr.bf16.mxu0 0
    %686 = vmatpush2.bf16.msra.mxu0 0
    %687 = vmatprep.mubr.bf16.mxu0 0
    %688 = vmatmul.mubr.bf16.gmra.mxu0 %v424
    %v689 = vpop.f32.mrf.mxu0
    %v690 = vadd.f32 %v420, %v689
    %v691 = vpop.f32.mrf.mxu0
    %v692 = vadd.f32 %v420, %v691
    %v693 = vpop.f32.mrf.mxu0
    %v694 = vpop.f32.mrf.mxu0
    %695 = vdwg.mxu0
    %v696 = vsub.f32 %v475, %v690
    %v697 = vsub.f32 %v476, %v692
    %v698 = vstv %s216
    %v699 = vmul.f32 %v696, %v698
    %v700 = vmul.f32 %v697, %v698
    %v701 = vstv %s218
    %v702 = vmul.f32 %v701, %v470
    %v703 = vmul.f32 %v701, %v471
    %v704 = vstv %s219
    %v705 = vmul.f32 %v704, %v699
    %v706 = vmul.f32 %v704, %v700
    %v707 = vadd.f32 %v702, %v705
    %v708 = vadd.f32 %v703, %v706
    %v709 = vmul.f32 %v472, %v707
    %v710 = vmul.f32 %v472, %v708
    %v711 = vadd.f32 %v225, %v709
    %v712 = vadd.f32 %v226, %v710
    %s713 = sld [smem:[#allocation3 + $0x8]]
    %s714 = sld [smem:[#allocation3 + $0x9]]
    %s715 = sld [smem:[#allocation3 + $0xa]]
    %s716 = sld [smem:[#allocation3 + $0xb]]
    %s717 = sld [smem:[#allocation3 + $0xc]]
    %s718 = sld [smem:[#allocation3 + $0xd]]
    %s719 = sld [smem:[#allocation3 + $0xe]]
    %s720 = sld [smem:[#allocation3 + $0xf]]
    %s721 = scalar_lea.vmem %s4, 16
    %v722 = vld [vmem:[%s721] sm:$0xff]
    %v723 = vld [vmem:[%s721 + $0x8] sm:$0xff]
    %v724 = vstv %s713
    %v725 = vmul.f32 %v724, %v722
    %v726 = vmul.f32 %v724, %v723
    %v727 = vadd.f32 %v711, %v725
    %v728 = vadd.f32 %v712, %v726
    %v729 = vstv %s714
    %v730 = vmul.f32 %v729, %v88
    %v731 = vmul.f32 %v729, %v89
    %v732 = vmul.f32 %v729, %v90
    %v733 = vmul.f32 %v729, %v91
    %v734 = vmul.f32 %v729, %v92
    %v735 = vmul.f32 %v729, %v93
    %v736 = vmul.f32 %v729, %v94
    %v737 = vmul.f32 %v729, %v95
    %v738 = vadd.f32 %v80, %v730
    %v739 = vadd.f32 %v81, %v731
    %v740 = vadd.f32 %v82, %v732
    %v741 = vadd.f32 %v83, %v733
    %v742 = vadd.f32 %v84, %v734
    %v743 = vadd.f32 %v85, %v735
    %v744 = vadd.f32 %v86, %v736
    %v745 = vadd.f32 %v87, %v737
    %v746 = vpack.c.bf16 %v727, %v727
    %v747 = vpack.c.bf16 %v728, %v728
    %v749 = vsel %vm126, %v746, 0
    %v752 = vsel %vm126, %v747, 0
    %754 = vmatprep.subr.bf16.mxu0 0
    %755 = vmatpush1.bf16.msra.mxu0 0
    %756 = vmatprep.subr.bf16.mxu0 0
    %757 = vmatpush1.bf16.msra.mxu0 0
    %758 = vmatprep.subr.bf16.mxu0 0
    %759 = vmatpush1.bf16.msra.mxu0 0
    %760 = vmatprep.subr.bf16.mxu0 0
    %761 = vmatpush1.bf16.msra.mxu0 0
    %762 = vmatprep.subr.bf16.mxu0 0
    %763 = vmatpush1.bf16.msra.mxu0 0
    %764 = vmatprep.subr.bf16.mxu0 0
    %765 = vmatpush1.bf16.msra.mxu0 0
    %766 = vmatprep.subr.bf16.mxu0 0
    %767 = vmatpush1.bf16.msra.mxu0 0
    %768 = vmatprep.subr.bf16.mxu0 %v752
    %769 = vmatpush1.bf16.msra.mxu0 %v749
    %770 = vmatprep.subr.bf16.mxu0 0
    %771 = vmatpush2.bf16.msra.mxu0 0
    %772 = vmatprep.subr.bf16.mxu0 0
    %773 = vmatpush2.bf16.msra.mxu0 0
    %774 = vmatprep.subr.bf16.mxu0 0
    %775 = vmatpush2.bf16.msra.mxu0 0
    %776 = vmatprep.subr.bf16.mxu0 0
    %777 = vmatpush2.bf16.msra.mxu0 0
    %778 = vmatprep.subr.bf16.mxu0 0
    %779 = vmatpush2.bf16.msra.mxu0 0
    %780 = vmatprep.subr.bf16.mxu0 0
    %781 = vmatpush2.bf16.msra.mxu0 0
    %782 = vmatprep.subr.bf16.mxu0 0
    %783 = vmatpush2.bf16.msra.mxu0 0
    %784 = vmatprep.subr.bf16.mxu0 0
    %785 = vmatpush2.bf16.msra.mxu0 0
    %786 = vmatprep.mubr.bf16.mxu0 0
    %787 = vmatmul.mubr.bf16.gmra.mxu0 %v247
    %v788 = vpop.f32.mrf.mxu0
    %v789 = vadd.f32 %v168, %v788
    %v790 = vpop.f32.mrf.mxu0
    %v791 = vadd.f32 %v170, %v790
    %v792 = vpop.f32.mrf.mxu0
    %v793 = vadd.f32 %v172, %v792
    %v794 = vpop.f32.mrf.mxu0
    %v795 = vadd.f32 %v174, %v794
    %796 = vmatprep.mubr.bf16.mxu0 0
    %797 = vmatmul.mubr.bf16.gmra.mxu0 %v250
    %v798 = vpop.f32.mrf.mxu0
    %v799 = vadd.f32 %v178, %v798
    %v800 = vpop.f32.mrf.mxu0
    %v801 = vadd.f32 %v180, %v800
    %v802 = vpop.f32.mrf.mxu0
    %v803 = vadd.f32 %v182, %v802
    %v804 = vpop.f32.mrf.mxu0
    %v805 = vadd.f32 %v184, %v804
    %806 = vmatprep.mubr.bf16.mxu0 0
    %807 = vmatmul.mubr.bf16.gmra.mxu0 %v253
    %v808 = vpop.f32.mrf.mxu0
    %v809 = vadd.f32 %v188, %v808
    %v810 = vpop.f32.mrf.mxu0
    %v811 = vadd.f32 %v190, %v810
    %v812 = vpop.f32.mrf.mxu0
    %v813 = vadd.f32 %v192, %v812
    %v814 = vpop.f32.mrf.mxu0
    %v815 = vadd.f32 %v194, %v814
    %816 = vmatprep.mubr.bf16.mxu0 0
    %817 = vmatmul.mubr.bf16.gmra.mxu0 %v256
    %v818 = vpop.f32.mrf.mxu0
    %v819 = vadd.f32 %v198, %v818
    %v820 = vpop.f32.mrf.mxu0
    %v821 = vadd.f32 %v200, %v820
    %v822 = vpop.f32.mrf.mxu0
    %v823 = vadd.f32 %v202, %v822
    %v824 = vpop.f32.mrf.mxu0
    %v825 = vadd.f32 %v204, %v824
    %826 = vdwg.mxu0
    %828 = vset.pattern.permute.xlu0 0
    %829 = vperm.xlu0 %828, %v738
    %v830 = vpop.permute.xlu0 %829
    %833 = vset.pattern.permute.xlu0 0
    %834 = vperm.xlu0 %833, %v739
    %v835 = vpop.permute.xlu0 %834
    %838 = vset.pattern.permute.xlu0 0
    %839 = vperm.xlu0 %838, %v740
    %v840 = vpop.permute.xlu0 %839
    %843 = vset.pattern.permute.xlu0 0
    %844 = vperm.xlu0 %843, %v741
    %v845 = vpop.permute.xlu0 %844
    %848 = vset.pattern.permute.xlu0 0
    %849 = vperm.xlu0 %848, %v742
    %v850 = vpop.permute.xlu0 %849
    %853 = vset.pattern.permute.xlu0 0
    %854 = vperm.xlu0 %853, %v743
    %v855 = vpop.permute.xlu0 %854
    %858 = vset.pattern.permute.xlu0 0
    %859 = vperm.xlu0 %858, %v744
    %v860 = vpop.permute.xlu0 %859
    %863 = vset.pattern.permute.xlu0 0
    %864 = vperm.xlu0 %863, %v745
    %v865 = vpop.permute.xlu0 %864
    %v867 = vadd.f32 %v789, %v830
    %v868 = vadd.f32 %v791, %v830
    %v869 = vadd.f32 %v793, %v835
    %v870 = vadd.f32 %v795, %v835
    %v871 = vadd.f32 %v799, %v840
    %v872 = vadd.f32 %v801, %v840
    %v873 = vadd.f32 %v803, %v845
    %v874 = vadd.f32 %v805, %v845
    %v875 = vadd.f32 %v809, %v850
    %v876 = vadd.f32 %v811, %v850
    %v877 = vadd.f32 %v813, %v855
    %v878 = vadd.f32 %v815, %v855
    %v879 = vadd.f32 %v819, %v860
    %v880 = vadd.f32 %v821, %v860
    %v881 = vadd.f32 %v823, %v865
    %v882 = vadd.f32 %v825, %v865
    %v883 = vmax.f32 %v867, 0.0
    %v884 = vmax.f32 %v868, 0.0
    %v885 = vmax.f32 %v869, 0.0
    %v886 = vmax.f32 %v870, 0.0
    %v887 = vmax.f32 %v871, 0.0
    %v888 = vmax.f32 %v872, 0.0
    %v889 = vmax.f32 %v873, 0.0
    %v890 = vmax.f32 %v874, 0.0
    %v891 = vmax.f32 %v875, 0.0
    %v892 = vmax.f32 %v876, 0.0
    %v893 = vmax.f32 %v877, 0.0
    %v894 = vmax.f32 %v878, 0.0
    %v895 = vmax.f32 %v879, 0.0
    %v896 = vmax.f32 %v880, 0.0
    %v897 = vmax.f32 %v881, 0.0
    %v898 = vmax.f32 %v882, 0.0
    %v899 = vpack.c.bf16 %v885, %v883
    %v900 = vpack.c.bf16 %v886, %v884
    %v901 = vpack.c.bf16 %v889, %v887
    %v902 = vpack.c.bf16 %v890, %v888
    %v903 = vpack.c.bf16 %v893, %v891
    %v904 = vpack.c.bf16 %v894, %v892
    %v905 = vpack.c.bf16 %v897, %v895
    %v906 = vpack.c.bf16 %v898, %v896
    %907 = vmatprep.subr.bf16.mxu0 0
    %908 = vmatpush1.bf16.msra.mxu0 0
    %909 = vmatprep.subr.bf16.mxu0 0
    %910 = vmatpush1.bf16.msra.mxu0 0
    %911 = vmatprep.subr.bf16.mxu0 0
    %912 = vmatpush1.bf16.msra.mxu0 0
    %913 = vmatprep.subr.bf16.mxu0 0
    %914 = vmatpush1.bf16.msra.mxu0 0
    %915 = vmatprep.subr.bf16.mxu0 %v906
    %916 = vmatpush1.bf16.msra.mxu0 %v905
    %917 = vmatprep.subr.bf16.mxu0 %v904
    %918 = vmatpush1.bf16.msra.mxu0 %v903
    %919 = vmatprep.subr.bf16.mxu0 %v902
    %920 = vmatpush1.bf16.msra.mxu0 %v901
    %921 = vmatprep.subr.bf16.mxu0 %v900
    %922 = vmatpush1.bf16.msra.mxu0 %v899
    %923 = vmatprep.subr.bf16.mxu0 0
    %924 = vmatpush2.bf16.msra.mxu0 0
    %925 = vmatprep.subr.bf16.mxu0 0
    %926 = vmatpush2.bf16.msra.mxu0 0
    %927 = vmatprep.subr.bf16.mxu0 0
    %928 = vmatpush2.bf16.msra.mxu0 0
    %929 = vmatprep.subr.bf16.mxu0 0
    %930 = vmatpush2.bf16.msra.mxu0 0
    %931 = vmatprep.subr.bf16.mxu0 0
    %932 = vmatpush2.bf16.msra.mxu0 0
    %933 = vmatprep.subr.bf16.mxu0 0
    %934 = vmatpush2.bf16.msra.mxu0 0
    %935 = vmatprep.subr.bf16.mxu0 0
    %936 = vmatpush2.bf16.msra.mxu0 0
    %937 = vmatprep.subr.bf16.mxu0 0
    %938 = vmatpush2.bf16.msra.mxu0 0
    %939 = vmatprep.mubr.bf16.mxu0 0
    %940 = vmatmul.mubr.bf16.gmra.mxu0 %v424
    %v941 = vpop.f32.mrf.mxu0
    %v942 = vadd.f32 %v420, %v941
    %v943 = vpop.f32.mrf.mxu0
    %v944 = vadd.f32 %v420, %v943
    %v945 = vpop.f32.mrf.mxu0
    %v946 = vpop.f32.mrf.mxu0
    %947 = vdwg.mxu0
    %v948 = vsub.f32 %v727, %v942
    %v949 = vsub.f32 %v728, %v944
    %v950 = vstv %s715
    %v951 = vmul.f32 %v948, %v950
    %v952 = vmul.f32 %v949, %v950
    %v953 = vstv %s718
    %v954 = vmul.f32 %v953, %v951
    %v955 = vmul.f32 %v953, %v952
    %v956 = vadd.f32 %v727, %v954
    %v957 = vadd.f32 %v728, %v955
    %v958 = vstv %s716
    %v959 = vmul.f32 %v958, %v88
    %v960 = vmul.f32 %v958, %v89
    %v961 = vmul.f32 %v958, %v90
    %v962 = vmul.f32 %v958, %v91
    %v963 = vmul.f32 %v958, %v92
    %v964 = vmul.f32 %v958, %v93
    %v965 = vmul.f32 %v958, %v94
    %v966 = vmul.f32 %v958, %v95
    %v967 = vadd.f32 %v80, %v959
    %v968 = vadd.f32 %v81, %v960
    %v969 = vadd.f32 %v82, %v961
    %v970 = vadd.f32 %v83, %v962
    %v971 = vadd.f32 %v84, %v963
    %v972 = vadd.f32 %v85, %v964
    %v973 = vadd.f32 %v86, %v965
    %v974 = vadd.f32 %v87, %v966
    %v975 = vpack.c.bf16 %v956, %v956
    %v976 = vpack.c.bf16 %v957, %v957
    %v978 = vsel %vm126, %v975, 0
    %v981 = vsel %vm126, %v976, 0
    %983 = vmatprep.subr.bf16.mxu0 0
    %984 = vmatpush1.bf16.msra.mxu0 0
    %985 = vmatprep.subr.bf16.mxu0 0
    %986 = vmatpush1.bf16.msra.mxu0 0
    %987 = vmatprep.subr.bf16.mxu0 0
    %988 = vmatpush1.bf16.msra.mxu0 0
    %989 = vmatprep.subr.bf16.mxu0 0
    %990 = vmatpush1.bf16.msra.mxu0 0
    %991 = vmatprep.subr.bf16.mxu0 0
    %992 = vmatpush1.bf16.msra.mxu0 0
    %993 = vmatprep.subr.bf16.mxu0 0
    %994 = vmatpush1.bf16.msra.mxu0 0
    %995 = vmatprep.subr.bf16.mxu0 0
    %996 = vmatpush1.bf16.msra.mxu0 0
    %997 = vmatprep.subr.bf16.mxu0 %v981
    %998 = vmatpush1.bf16.msra.mxu0 %v978
    %999 = vmatprep.subr.bf16.mxu0 0
    %1000 = vmatpush2.bf16.msra.mxu0 0
    %1001 = vmatprep.subr.bf16.mxu0 0
    %1002 = vmatpush2.bf16.msra.mxu0 0
    %1003 = vmatprep.subr.bf16.mxu0 0
    %1004 = vmatpush2.bf16.msra.mxu0 0
    %1005 = vmatprep.subr.bf16.mxu0 0
    %1006 = vmatpush2.bf16.msra.mxu0 0
    %1007 = vmatprep.subr.bf16.mxu0 0
    %1008 = vmatpush2.bf16.msra.mxu0 0
    %1009 = vmatprep.subr.bf16.mxu0 0
    %1010 = vmatpush2.bf16.msra.mxu0 0
    %1011 = vmatprep.subr.bf16.mxu0 0
    %1012 = vmatpush2.bf16.msra.mxu0 0
    %1013 = vmatprep.subr.bf16.mxu0 0
    %1014 = vmatpush2.bf16.msra.mxu0 0
    %1015 = vmatprep.mubr.bf16.mxu0 0
    %1016 = vmatmul.mubr.bf16.gmra.mxu0 %v247
    %v1017 = vpop.f32.mrf.mxu0
    %v1018 = vadd.f32 %v168, %v1017
    %v1019 = vpop.f32.mrf.mxu0
    %v1020 = vadd.f32 %v170, %v1019
    %v1021 = vpop.f32.mrf.mxu0
    %v1022 = vadd.f32 %v172, %v1021
    %v1023 = vpop.f32.mrf.mxu0
    %v1024 = vadd.f32 %v174, %v1023
    %1025 = vmatprep.mubr.bf16.mxu0 0
    %1026 = vmatmul.mubr.bf16.gmra.mxu0 %v250
    %v1027 = vpop.f32.mrf.mxu0
    %v1028 = vadd.f32 %v178, %v1027
    %v1029 = vpop.f32.mrf.mxu0
    %v1030 = vadd.f32 %v180, %v1029
    %v1031 = vpop.f32.mrf.mxu0
    %v1032 = vadd.f32 %v182, %v1031
    %v1033 = vpop.f32.mrf.mxu0
    %v1034 = vadd.f32 %v184, %v1033
    %1035 = vmatprep.mubr.bf16.mxu0 0
    %1036 = vmatmul.mubr.bf16.gmra.mxu0 %v253
    %v1037 = vpop.f32.mrf.mxu0
    %v1038 = vadd.f32 %v188, %v1037
    %v1039 = vpop.f32.mrf.mxu0
    %v1040 = vadd.f32 %v190, %v1039
    %v1041 = vpop.f32.mrf.mxu0
    %v1042 = vadd.f32 %v192, %v1041
    %v1043 = vpop.f32.mrf.mxu0
    %v1044 = vadd.f32 %v194, %v1043
    %1045 = vmatprep.mubr.bf16.mxu0 0
    %1046 = vmatmul.mubr.bf16.gmra.mxu0 %v256
    %v1047 = vpop.f32.mrf.mxu0
    %v1048 = vadd.f32 %v198, %v1047
    %v1049 = vpop.f32.mrf.mxu0
    %v1050 = vadd.f32 %v200, %v1049
    %v1051 = vpop.f32.mrf.mxu0
    %v1052 = vadd.f32 %v202, %v1051
    %v1053 = vpop.f32.mrf.mxu0
    %v1054 = vadd.f32 %v204, %v1053
    %1055 = vdwg.mxu0
    %1057 = vset.pattern.permute.xlu0 0
    %1058 = vperm.xlu0 %1057, %v967
    %v1059 = vpop.permute.xlu0 %1058
    %1062 = vset.pattern.permute.xlu0 0
    %1063 = vperm.xlu0 %1062, %v968
    %v1064 = vpop.permute.xlu0 %1063
    %1067 = vset.pattern.permute.xlu0 0
    %1068 = vperm.xlu0 %1067, %v969
    %v1069 = vpop.permute.xlu0 %1068
    %1072 = vset.pattern.permute.xlu0 0
    %1073 = vperm.xlu0 %1072, %v970
    %v1074 = vpop.permute.xlu0 %1073
    %1077 = vset.pattern.permute.xlu0 0
    %1078 = vperm.xlu0 %1077, %v971
    %v1079 = vpop.permute.xlu0 %1078
    %1082 = vset.pattern.permute.xlu0 0
    %1083 = vperm.xlu0 %1082, %v972
    %v1084 = vpop.permute.xlu0 %1083
    %1087 = vset.pattern.permute.xlu0 0
    %1088 = vperm.xlu0 %1087, %v973
    %v1089 = vpop.permute.xlu0 %1088
    %1092 = vset.pattern.permute.xlu0 0
    %1093 = vperm.xlu0 %1092, %v974
    %v1094 = vpop.permute.xlu0 %1093
    %v1096 = vadd.f32 %v1018, %v1059
    %v1097 = vadd.f32 %v1020, %v1059
    %v1098 = vadd.f32 %v1022, %v1064
    %v1099 = vadd.f32 %v1024, %v1064
    %v1100 = vadd.f32 %v1028, %v1069
    %v1101 = vadd.f32 %v1030, %v1069
    %v1102 = vadd.f32 %v1032, %v1074
    %v1103 = vadd.f32 %v1034, %v1074
    %v1104 = vadd.f32 %v1038, %v1079
    %v1105 = vadd.f32 %v1040, %v1079
    %v1106 = vadd.f32 %v1042, %v1084
    %v1107 = vadd.f32 %v1044, %v1084
    %v1108 = vadd.f32 %v1048, %v1089
    %v1109 = vadd.f32 %v1050, %v1089
    %v1110 = vadd.f32 %v1052, %v1094
    %v1111 = vadd.f32 %v1054, %v1094
    %v1112 = vmax.f32 %v1096, 0.0
    %v1113 = vmax.f32 %v1097, 0.0
    %v1114 = vmax.f32 %v1098, 0.0
    %v1115 = vmax.f32 %v1099, 0.0
    %v1116 = vmax.f32 %v1100, 0.0
    %v1117 = vmax.f32 %v1101, 0.0
    %v1118 = vmax.f32 %v1102, 0.0
    %v1119 = vmax.f32 %v1103, 0.0
    %v1120 = vmax.f32 %v1104, 0.0
    %v1121 = vmax.f32 %v1105, 0.0
    %v1122 = vmax.f32 %v1106, 0.0
    %v1123 = vmax.f32 %v1107, 0.0
    %v1124 = vmax.f32 %v1108, 0.0
    %v1125 = vmax.f32 %v1109, 0.0
    %v1126 = vmax.f32 %v1110, 0.0
    %v1127 = vmax.f32 %v1111, 0.0
    %v1128 = vpack.c.bf16 %v1114, %v1112
    %v1129 = vpack.c.bf16 %v1115, %v1113
    %v1130 = vpack.c.bf16 %v1118, %v1116
    %v1131 = vpack.c.bf16 %v1119, %v1117
    %v1132 = vpack.c.bf16 %v1122, %v1120
    %v1133 = vpack.c.bf16 %v1123, %v1121
    %v1134 = vpack.c.bf16 %v1126, %v1124
    %v1135 = vpack.c.bf16 %v1127, %v1125
    %1136 = vmatprep.subr.bf16.mxu0 0
    %1137 = vmatpush1.bf16.msra.mxu0 0
    %1138 = vmatprep.subr.bf16.mxu0 0
    %1139 = vmatpush1.bf16.msra.mxu0 0
    %1140 = vmatprep.subr.bf16.mxu0 0
    %1141 = vmatpush1.bf16.msra.mxu0 0
    %1142 = vmatprep.subr.bf16.mxu0 0
    %1143 = vmatpush1.bf16.msra.mxu0 0
    %1144 = vmatprep.subr.bf16.mxu0 %v1135
    %1145 = vmatpush1.bf16.msra.mxu0 %v1134
    %1146 = vmatprep.subr.bf16.mxu0 %v1133
    %1147 = vmatpush1.bf16.msra.mxu0 %v1132
    %1148 = vmatprep.subr.bf16.mxu0 %v1131
    %1149 = vmatpush1.bf16.msra.mxu0 %v1130
    %1150 = vmatprep.subr.bf16.mxu0 %v1129
    %1151 = vmatpush1.bf16.msra.mxu0 %v1128
    %1152 = vmatprep.subr.bf16.mxu0 0
    %1153 = vmatpush2.bf16.msra.mxu0 0
    %1154 = vmatprep.subr.bf16.mxu0 0
    %1155 = vmatpush2.bf16.msra.mxu0 0
    %1156 = vmatprep.subr.bf16.mxu0 0
    %1157 = vmatpush2.bf16.msra.mxu0 0
    %1158 = vmatprep.subr.bf16.mxu0 0
    %1159 = vmatpush2.bf16.msra.mxu0 0
    %1160 = vmatprep.subr.bf16.mxu0 0
    %1161 = vmatpush2.bf16.msra.mxu0 0
    %1162 = vmatprep.subr.bf16.mxu0 0
    %1163 = vmatpush2.bf16.msra.mxu0 0
    %1164 = vmatprep.subr.bf16.mxu0 0
    %1165 = vmatpush2.bf16.msra.mxu0 0
    %1166 = vmatprep.subr.bf16.mxu0 0
    %1167 = vmatpush2.bf16.msra.mxu0 0
    %1168 = vmatprep.mubr.bf16.mxu0 0
    %1169 = vmatmul.mubr.bf16.gmra.mxu0 %v424
    %v1170 = vpop.f32.mrf.mxu0
    %v1171 = vadd.f32 %v420, %v1170
    %v1172 = vpop.f32.mrf.mxu0
    %v1173 = vadd.f32 %v420, %v1172
    %v1174 = vpop.f32.mrf.mxu0
    %v1175 = vpop.f32.mrf.mxu0
    %1176 = vdwg.mxu0
    %v1177 = vsub.f32 %v956, %v1171
    %v1178 = vsub.f32 %v957, %v1173
    %v1179 = vstv %s717
    %v1180 = vmul.f32 %v1177, %v1179
    %v1181 = vmul.f32 %v1178, %v1179
    %v1182 = vstv %s719
    %v1183 = vmul.f32 %v1182, %v951
    %v1184 = vmul.f32 %v1182, %v952
    %v1185 = vstv %s720
    %v1186 = vmul.f32 %v1185, %v1180
    %v1187 = vmul.f32 %v1185, %v1181
    %v1188 = vadd.f32 %v1183, %v1186
    %v1189 = vadd.f32 %v1184, %v1187
    %v1190 = vmul.f32 %v953, %v1188
    %v1191 = vmul.f32 %v953, %v1189
    %v1192 = vadd.f32 %v727, %v1190
    %v1193 = vadd.f32 %v728, %v1191
    %s1194 = sld [smem:[#allocation3 + $0x10]]
    %s1195 = sld [smem:[#allocation3 + $0x11]]
    %s1196 = sld [smem:[#allocation3 + $0x12]]
    %s1197 = sld [smem:[#allocation3 + $0x13]]
    %s1198 = sld [smem:[#allocation3 + $0x14]]
    %s1199 = sld [smem:[#allocation3 + $0x15]]
    %s1200 = sld [smem:[#allocation3 + $0x16]]
    %s1201 = sld [smem:[#allocation3 + $0x17]]
    %s1202 = scalar_lea.vmem %s4, 32
    %v1203 = vld [vmem:[%s1202] sm:$0xff]
    %v1204 = vld [vmem:[%s1202 + $0x8] sm:$0xff]
    %v1205 = vstv %s1194
    %v1206 = vmul.f32 %v1205, %v1203
    %v1207 = vmul.f32 %v1205, %v1204
    %v1208 = vadd.f32 %v1192, %v1206
    %v1209 = vadd.f32 %v1193, %v1207
    %v1210 = vstv %s1195
    %v1211 = vmul.f32 %v1210, %v88
    %v1212 = vmul.f32 %v1210, %v89
    %v1213 = vmul.f32 %v1210, %v90
    %v1214 = vmul.f32 %v1210, %v91
    %v1215 = vmul.f32 %v1210, %v92
    %v1216 = vmul.f32 %v1210, %v93
    %v1217 = vmul.f32 %v1210, %v94
    %v1218 = vmul.f32 %v1210, %v95
    %v1219 = vadd.f32 %v80, %v1211
    %v1220 = vadd.f32 %v81, %v1212
    %v1221 = vadd.f32 %v82, %v1213
    %v1222 = vadd.f32 %v83, %v1214
    %v1223 = vadd.f32 %v84, %v1215
    %v1224 = vadd.f32 %v85, %v1216
    %v1225 = vadd.f32 %v86, %v1217
    %v1226 = vadd.f32 %v87, %v1218
    %v1227 = vpack.c.bf16 %v1208, %v1208
    %v1228 = vpack.c.bf16 %v1209, %v1209
    %v1230 = vsel %vm126, %v1227, 0
    %v1233 = vsel %vm126, %v1228, 0
    %1235 = vmatprep.subr.bf16.mxu0 0
    %1236 = vmatpush1.bf16.msra.mxu0 0
    %1237 = vmatprep.subr.bf16.mxu0 0
    %1238 = vmatpush1.bf16.msra.mxu0 0
    %1239 = vmatprep.subr.bf16.mxu0 0
    %1240 = vmatpush1.bf16.msra.mxu0 0
    %1241 = vmatprep.subr.bf16.mxu0 0
    %1242 = vmatpush1.bf16.msra.mxu0 0
    %1243 = vmatprep.subr.bf16.mxu0 0
    %1244 = vmatpush1.bf16.msra.mxu0 0
    %1245 = vmatprep.subr.bf16.mxu0 0
    %1246 = vmatpush1.bf16.msra.mxu0 0
    %1247 = vmatprep.subr.bf16.mxu0 0
    %1248 = vmatpush1.bf16.msra.mxu0 0
    %1249 = vmatprep.subr.bf16.mxu0 %v1233
    %1250 = vmatpush1.bf16.msra.mxu0 %v1230
    %1251 = vmatprep.subr.bf16.mxu0 0
    %1252 = vmatpush2.bf16.msra.mxu0 0
    %1253 = vmatprep.subr.bf16.mxu0 0
    %1254 = vmatpush2.bf16.msra.mxu0 0
    %1255 = vmatprep.subr.bf16.mxu0 0
    %1256 = vmatpush2.bf16.msra.mxu0 0
    %1257 = vmatprep.subr.bf16.mxu0 0
    %1258 = vmatpush2.bf16.msra.mxu0 0
    %1259 = vmatprep.subr.bf16.mxu0 0
    %1260 = vmatpush2.bf16.msra.mxu0 0
    %1261 = vmatprep.subr.bf16.mxu0 0
    %1262 = vmatpush2.bf16.msra.mxu0 0
    %1263 = vmatprep.subr.bf16.mxu0 0
    %1264 = vmatpush2.bf16.msra.mxu0 0
    %1265 = vmatprep.subr.bf16.mxu0 0
    %1266 = vmatpush2.bf16.msra.mxu0 0
    %1267 = vmatprep.mubr.bf16.mxu0 0
    %1268 = vmatmul.mubr.bf16.gmra.mxu0 %v247
    %v1269 = vpop.f32.mrf.mxu0
    %v1270 = vadd.f32 %v168, %v1269
    %v1271 = vpop.f32.mrf.mxu0
    %v1272 = vadd.f32 %v170, %v1271
    %v1273 = vpop.f32.mrf.mxu0
    %v1274 = vadd.f32 %v172, %v1273
    %v1275 = vpop.f32.mrf.mxu0
    %v1276 = vadd.f32 %v174, %v1275
    %1277 = vmatprep.mubr.bf16.mxu0 0
    %1278 = vmatmul.mubr.bf16.gmra.mxu0 %v250
    %v1279 = vpop.f32.mrf.mxu0
    %v1280 = vadd.f32 %v178, %v1279
    %v1281 = vpop.f32.mrf.mxu0
    %v1282 = vadd.f32 %v180, %v1281
    %v1283 = vpop.f32.mrf.mxu0
    %v1284 = vadd.f32 %v182, %v1283
    %v1285 = vpop.f32.mrf.mxu0
    %v1286 = vadd.f32 %v184, %v1285
    %1287 = vmatprep.mubr.bf16.mxu0 0
    %1288 = vmatmul.mubr.bf16.gmra.mxu0 %v253
    %v1289 = vpop.f32.mrf.mxu0
    %v1290 = vadd.f32 %v188, %v1289
    %v1291 = vpop.f32.mrf.mxu0
    %v1292 = vadd.f32 %v190, %v1291
    %v1293 = vpop.f32.mrf.mxu0
    %v1294 = vadd.f32 %v192, %v1293
    %v1295 = vpop.f32.mrf.mxu0
    %v1296 = vadd.f32 %v194, %v1295
    %1297 = vmatprep.mubr.bf16.mxu0 0
    %1298 = vmatmul.mubr.bf16.gmra.mxu0 %v256
    %v1299 = vpop.f32.mrf.mxu0
    %v1300 = vadd.f32 %v198, %v1299
    %v1301 = vpop.f32.mrf.mxu0
    %v1302 = vadd.f32 %v200, %v1301
    %v1303 = vpop.f32.mrf.mxu0
    %v1304 = vadd.f32 %v202, %v1303
    %v1305 = vpop.f32.mrf.mxu0
    %v1306 = vadd.f32 %v204, %v1305
    %1307 = vdwg.mxu0
    %1309 = vset.pattern.permute.xlu0 0
    %1310 = vperm.xlu0 %1309, %v1219
    %v1311 = vpop.permute.xlu0 %1310
    %1314 = vset.pattern.permute.xlu0 0
    %1315 = vperm.xlu0 %1314, %v1220
    %v1316 = vpop.permute.xlu0 %1315
    %1319 = vset.pattern.permute.xlu0 0
    %1320 = vperm.xlu0 %1319, %v1221
    %v1321 = vpop.permute.xlu0 %1320
    %1324 = vset.pattern.permute.xlu0 0
    %1325 = vperm.xlu0 %1324, %v1222
    %v1326 = vpop.permute.xlu0 %1325
    %1329 = vset.pattern.permute.xlu0 0
    %1330 = vperm.xlu0 %1329, %v1223
    %v1331 = vpop.permute.xlu0 %1330
    %1334 = vset.pattern.permute.xlu0 0
    %1335 = vperm.xlu0 %1334, %v1224
    %v1336 = vpop.permute.xlu0 %1335
    %1339 = vset.pattern.permute.xlu0 0
    %1340 = vperm.xlu0 %1339, %v1225
    %v1341 = vpop.permute.xlu0 %1340
    %1344 = vset.pattern.permute.xlu0 0
    %1345 = vperm.xlu0 %1344, %v1226
    %v1346 = vpop.permute.xlu0 %1345
    %v1348 = vadd.f32 %v1270, %v1311
    %v1349 = vadd.f32 %v1272, %v1311
    %v1350 = vadd.f32 %v1274, %v1316
    %v1351 = vadd.f32 %v1276, %v1316
    %v1352 = vadd.f32 %v1280, %v1321
    %v1353 = vadd.f32 %v1282, %v1321
    %v1354 = vadd.f32 %v1284, %v1326
    %v1355 = vadd.f32 %v1286, %v1326
    %v1356 = vadd.f32 %v1290, %v1331
    %v1357 = vadd.f32 %v1292, %v1331
    %v1358 = vadd.f32 %v1294, %v1336
    %v1359 = vadd.f32 %v1296, %v1336
    %v1360 = vadd.f32 %v1300, %v1341
    %v1361 = vadd.f32 %v1302, %v1341
    %v1362 = vadd.f32 %v1304, %v1346
    %v1363 = vadd.f32 %v1306, %v1346
    %v1364 = vmax.f32 %v1348, 0.0
    %v1365 = vmax.f32 %v1349, 0.0
    %v1366 = vmax.f32 %v1350, 0.0
    %v1367 = vmax.f32 %v1351, 0.0
    %v1368 = vmax.f32 %v1352, 0.0
    %v1369 = vmax.f32 %v1353, 0.0
    %v1370 = vmax.f32 %v1354, 0.0
    %v1371 = vmax.f32 %v1355, 0.0
    %v1372 = vmax.f32 %v1356, 0.0
    %v1373 = vmax.f32 %v1357, 0.0
    %v1374 = vmax.f32 %v1358, 0.0
    %v1375 = vmax.f32 %v1359, 0.0
    %v1376 = vmax.f32 %v1360, 0.0
    %v1377 = vmax.f32 %v1361, 0.0
    %v1378 = vmax.f32 %v1362, 0.0
    %v1379 = vmax.f32 %v1363, 0.0
    %v1380 = vpack.c.bf16 %v1366, %v1364
    %v1381 = vpack.c.bf16 %v1367, %v1365
    %v1382 = vpack.c.bf16 %v1370, %v1368
    %v1383 = vpack.c.bf16 %v1371, %v1369
    %v1384 = vpack.c.bf16 %v1374, %v1372
    %v1385 = vpack.c.bf16 %v1375, %v1373
    %v1386 = vpack.c.bf16 %v1378, %v1376
    %v1387 = vpack.c.bf16 %v1379, %v1377
    %1388 = vmatprep.subr.bf16.mxu0 0
    %1389 = vmatpush1.bf16.msra.mxu0 0
    %1390 = vmatprep.subr.bf16.mxu0 0
    %1391 = vmatpush1.bf16.msra.mxu0 0
    %1392 = vmatprep.subr.bf16.mxu0 0
    %1393 = vmatpush1.bf16.msra.mxu0 0
    %1394 = vmatprep.subr.bf16.mxu0 0
    %1395 = vmatpush1.bf16.msra.mxu0 0
    %1396 = vmatprep.subr.bf16.mxu0 %v1387
    %1397 = vmatpush1.bf16.msra.mxu0 %v1386
    %1398 = vmatprep.subr.bf16.mxu0 %v1385
    %1399 = vmatpush1.bf16.msra.mxu0 %v1384
    %1400 = vmatprep.subr.bf16.mxu0 %v1383
    %1401 = vmatpush1.bf16.msra.mxu0 %v1382
    %1402 = vmatprep.subr.bf16.mxu0 %v1381
    %1403 = vmatpush1.bf16.msra.mxu0 %v1380
    %1404 = vmatprep.subr.bf16.mxu0 0
    %1405 = vmatpush2.bf16.msra.mxu0 0
    %1406 = vmatprep.subr.bf16.mxu0 0
    %1407 = vmatpush2.bf16.msra.mxu0 0
    %1408 = vmatprep.subr.bf16.mxu0 0
    %1409 = vmatpush2.bf16.msra.mxu0 0
    %1410 = vmatprep.subr.bf16.mxu0 0
    %1411 = vmatpush2.bf16.msra.mxu0 0
    %1412 = vmatprep.subr.bf16.mxu0 0
    %1413 = vmatpush2.bf16.msra.mxu0 0
    %1414 = vmatprep.subr.bf16.mxu0 0
    %1415 = vmatpush2.bf16.msra.mxu0 0
    %1416 = vmatprep.subr.bf16.mxu0 0
    %1417 = vmatpush2.bf16.msra.mxu0 0
    %1418 = vmatprep.subr.bf16.mxu0 0
    %1419 = vmatpush2.bf16.msra.mxu0 0
    %1420 = vmatprep.mubr.bf16.mxu0 0
    %1421 = vmatmul.mubr.bf16.gmra.mxu0 %v424
    %v1422 = vpop.f32.mrf.mxu0
    %v1423 = vadd.f32 %v420, %v1422
    %v1424 = vpop.f32.mrf.mxu0
    %v1425 = vadd.f32 %v420, %v1424
    %v1426 = vpop.f32.mrf.mxu0
    %v1427 = vpop.f32.mrf.mxu0
    %1428 = vdwg.mxu0
    %v1429 = vsub.f32 %v1208, %v1423
    %v1430 = vsub.f32 %v1209, %v1425
    %v1431 = vstv %s1196
    %v1432 = vmul.f32 %v1429, %v1431
    %v1433 = vmul.f32 %v1430, %v1431
    %v1434 = vstv %s1199
    %v1435 = vmul.f32 %v1434, %v1432
    %v1436 = vmul.f32 %v1434, %v1433
    %v1437 = vadd.f32 %v1208, %v1435
    %v1438 = vadd.f32 %v1209, %v1436
    %v1439 = vstv %s1197
    %v1440 = vmul.f32 %v1439, %v88
    %v1441 = vmul.f32 %v1439, %v89
    %v1442 = vmul.f32 %v1439, %v90
    %v1443 = vmul.f32 %v1439, %v91
    %v1444 = vmul.f32 %v1439, %v92
    %v1445 = vmul.f32 %v1439, %v93
    %v1446 = vmul.f32 %v1439, %v94
    %v1447 = vmul.f32 %v1439, %v95
    %v1448 = vadd.f32 %v80, %v1440
    %v1449 = vadd.f32 %v81, %v1441
    %v1450 = vadd.f32 %v82, %v1442
    %v1451 = vadd.f32 %v83, %v1443
    %v1452 = vadd.f32 %v84, %v1444
    %v1453 = vadd.f32 %v85, %v1445
    %v1454 = vadd.f32 %v86, %v1446
    %v1455 = vadd.f32 %v87, %v1447
    %v1456 = vpack.c.bf16 %v1437, %v1437
    %v1457 = vpack.c.bf16 %v1438, %v1438
    %v1459 = vsel %vm126, %v1456, 0
    %v1462 = vsel %vm126, %v1457, 0
    %1464 = vmatprep.subr.bf16.mxu0 0
    %1465 = vmatpush1.bf16.msra.mxu0 0
    %1466 = vmatprep.subr.bf16.mxu0 0
    %1467 = vmatpush1.bf16.msra.mxu0 0
    %1468 = vmatprep.subr.bf16.mxu0 0
    %1469 = vmatpush1.bf16.msra.mxu0 0
    %1470 = vmatprep.subr.bf16.mxu0 0
    %1471 = vmatpush1.bf16.msra.mxu0 0
    %1472 = vmatprep.subr.bf16.mxu0 0
    %1473 = vmatpush1.bf16.msra.mxu0 0
    %1474 = vmatprep.subr.bf16.mxu0 0
    %1475 = vmatpush1.bf16.msra.mxu0 0
    %1476 = vmatprep.subr.bf16.mxu0 0
    %1477 = vmatpush1.bf16.msra.mxu0 0
    %1478 = vmatprep.subr.bf16.mxu0 %v1462
    %1479 = vmatpush1.bf16.msra.mxu0 %v1459
    %1480 = vmatprep.subr.bf16.mxu0 0
    %1481 = vmatpush2.bf16.msra.mxu0 0
    %1482 = vmatprep.subr.bf16.mxu0 0
    %1483 = vmatpush2.bf16.msra.mxu0 0
    %1484 = vmatprep.subr.bf16.mxu0 0
    %1485 = vmatpush2.bf16.msra.mxu0 0
    %1486 = vmatprep.subr.bf16.mxu0 0
    %1487 = vmatpush2.bf16.msra.mxu0 0
    %1488 = vmatprep.subr.bf16.mxu0 0
    %1489 = vmatpush2.bf16.msra.mxu0 0
    %1490 = vmatprep.subr.bf16.mxu0 0
    %1491 = vmatpush2.bf16.msra.mxu0 0
    %1492 = vmatprep.subr.bf16.mxu0 0
    %1493 = vmatpush2.bf16.msra.mxu0 0
    %1494 = vmatprep.subr.bf16.mxu0 0
    %1495 = vmatpush2.bf16.msra.mxu0 0
    %1496 = vmatprep.mubr.bf16.mxu0 0
    %1497 = vmatmul.mubr.bf16.gmra.mxu0 %v247
    %v1498 = vpop.f32.mrf.mxu0
    %v1499 = vadd.f32 %v168, %v1498
    %v1500 = vpop.f32.mrf.mxu0
    %v1501 = vadd.f32 %v170, %v1500
    %v1502 = vpop.f32.mrf.mxu0
    %v1503 = vadd.f32 %v172, %v1502
    %v1504 = vpop.f32.mrf.mxu0
    %v1505 = vadd.f32 %v174, %v1504
    %1506 = vmatprep.mubr.bf16.mxu0 0
    %1507 = vmatmul.mubr.bf16.gmra.mxu0 %v250
    %v1508 = vpop.f32.mrf.mxu0
    %v1509 = vadd.f32 %v178, %v1508
    %v1510 = vpop.f32.mrf.mxu0
    %v1511 = vadd.f32 %v180, %v1510
    %v1512 = vpop.f32.mrf.mxu0
    %v1513 = vadd.f32 %v182, %v1512
    %v1514 = vpop.f32.mrf.mxu0
    %v1515 = vadd.f32 %v184, %v1514
    %1516 = vmatprep.mubr.bf16.mxu0 0
    %1517 = vmatmul.mubr.bf16.gmra.mxu0 %v253
    %v1518 = vpop.f32.mrf.mxu0
    %v1519 = vadd.f32 %v188, %v1518
    %v1520 = vpop.f32.mrf.mxu0
    %v1521 = vadd.f32 %v190, %v1520
    %v1522 = vpop.f32.mrf.mxu0
    %v1523 = vadd.f32 %v192, %v1522
    %v1524 = vpop.f32.mrf.mxu0
    %v1525 = vadd.f32 %v194, %v1524
    %1526 = vmatprep.mubr.bf16.mxu0 0
    %1527 = vmatmul.mubr.bf16.gmra.mxu0 %v256
    %v1528 = vpop.f32.mrf.mxu0
    %v1529 = vadd.f32 %v198, %v1528
    %v1530 = vpop.f32.mrf.mxu0
    %v1531 = vadd.f32 %v200, %v1530
    %v1532 = vpop.f32.mrf.mxu0
    %v1533 = vadd.f32 %v202, %v1532
    %v1534 = vpop.f32.mrf.mxu0
    %v1535 = vadd.f32 %v204, %v1534
    %1536 = vdwg.mxu0
    %1538 = vset.pattern.permute.xlu0 0
    %1539 = vperm.xlu0 %1538, %v1448
    %v1540 = vpop.permute.xlu0 %1539
    %1543 = vset.pattern.permute.xlu0 0
    %1544 = vperm.xlu0 %1543, %v1449
    %v1545 = vpop.permute.xlu0 %1544
    %1548 = vset.pattern.permute.xlu0 0
    %1549 = vperm.xlu0 %1548, %v1450
    %v1550 = vpop.permute.xlu0 %1549
    %1553 = vset.pattern.permute.xlu0 0
    %1554 = vperm.xlu0 %1553, %v1451
    %v1555 = vpop.permute.xlu0 %1554
    %1558 = vset.pattern.permute.xlu0 0
    %1559 = vperm.xlu0 %1558, %v1452
    %v1560 = vpop.permute.xlu0 %1559
    %1563 = vset.pattern.permute.xlu0 0
    %1564 = vperm.xlu0 %1563, %v1453
    %v1565 = vpop.permute.xlu0 %1564
    %1568 = vset.pattern.permute.xlu0 0
    %1569 = vperm.xlu0 %1568, %v1454
    %v1570 = vpop.permute.xlu0 %1569
    %1573 = vset.pattern.permute.xlu0 0
    %1574 = vperm.xlu0 %1573, %v1455
    %v1575 = vpop.permute.xlu0 %1574
    %v1577 = vadd.f32 %v1499, %v1540
    %v1578 = vadd.f32 %v1501, %v1540
    %v1579 = vadd.f32 %v1503, %v1545
    %v1580 = vadd.f32 %v1505, %v1545
    %v1581 = vadd.f32 %v1509, %v1550
    %v1582 = vadd.f32 %v1511, %v1550
    %v1583 = vadd.f32 %v1513, %v1555
    %v1584 = vadd.f32 %v1515, %v1555
    %v1585 = vadd.f32 %v1519, %v1560
    %v1586 = vadd.f32 %v1521, %v1560
    %v1587 = vadd.f32 %v1523, %v1565
    %v1588 = vadd.f32 %v1525, %v1565
    %v1589 = vadd.f32 %v1529, %v1570
    %v1590 = vadd.f32 %v1531, %v1570
    %v1591 = vadd.f32 %v1533, %v1575
    %v1592 = vadd.f32 %v1535, %v1575
    %v1593 = vmax.f32 %v1577, 0.0
    %v1594 = vmax.f32 %v1578, 0.0
    %v1595 = vmax.f32 %v1579, 0.0
    %v1596 = vmax.f32 %v1580, 0.0
    %v1597 = vmax.f32 %v1581, 0.0
    %v1598 = vmax.f32 %v1582, 0.0
    %v1599 = vmax.f32 %v1583, 0.0
    %v1600 = vmax.f32 %v1584, 0.0
    %v1601 = vmax.f32 %v1585, 0.0
    %v1602 = vmax.f32 %v1586, 0.0
    %v1603 = vmax.f32 %v1587, 0.0
    %v1604 = vmax.f32 %v1588, 0.0
    %v1605 = vmax.f32 %v1589, 0.0
    %v1606 = vmax.f32 %v1590, 0.0
    %v1607 = vmax.f32 %v1591, 0.0
    %v1608 = vmax.f32 %v1592, 0.0
    %v1609 = vpack.c.bf16 %v1595, %v1593
    %v1610 = vpack.c.bf16 %v1596, %v1594
    %v1611 = vpack.c.bf16 %v1599, %v1597
    %v1612 = vpack.c.bf16 %v1600, %v1598
    %v1613 = vpack.c.bf16 %v1603, %v1601
    %v1614 = vpack.c.bf16 %v1604, %v1602
    %v1615 = vpack.c.bf16 %v1607, %v1605
    %v1616 = vpack.c.bf16 %v1608, %v1606
    %1617 = vmatprep.subr.bf16.mxu0 0
    %1618 = vmatpush1.bf16.msra.mxu0 0
    %1619 = vmatprep.subr.bf16.mxu0 0
    %1620 = vmatpush1.bf16.msra.mxu0 0
    %1621 = vmatprep.subr.bf16.mxu0 0
    %1622 = vmatpush1.bf16.msra.mxu0 0
    %1623 = vmatprep.subr.bf16.mxu0 0
    %1624 = vmatpush1.bf16.msra.mxu0 0
    %1625 = vmatprep.subr.bf16.mxu0 %v1616
    %1626 = vmatpush1.bf16.msra.mxu0 %v1615
    %1627 = vmatprep.subr.bf16.mxu0 %v1614
    %1628 = vmatpush1.bf16.msra.mxu0 %v1613
    %1629 = vmatprep.subr.bf16.mxu0 %v1612
    %1630 = vmatpush1.bf16.msra.mxu0 %v1611
    %1631 = vmatprep.subr.bf16.mxu0 %v1610
    %1632 = vmatpush1.bf16.msra.mxu0 %v1609
    %1633 = vmatprep.subr.bf16.mxu0 0
    %1634 = vmatpush2.bf16.msra.mxu0 0
    %1635 = vmatprep.subr.bf16.mxu0 0
    %1636 = vmatpush2.bf16.msra.mxu0 0
    %1637 = vmatprep.subr.bf16.mxu0 0
    %1638 = vmatpush2.bf16.msra.mxu0 0
    %1639 = vmatprep.subr.bf16.mxu0 0
    %1640 = vmatpush2.bf16.msra.mxu0 0
    %1641 = vmatprep.subr.bf16.mxu0 0
    %1642 = vmatpush2.bf16.msra.mxu0 0
    %1643 = vmatprep.subr.bf16.mxu0 0
    %1644 = vmatpush2.bf16.msra.mxu0 0
    %1645 = vmatprep.subr.bf16.mxu0 0
    %1646 = vmatpush2.bf16.msra.mxu0 0
    %1647 = vmatprep.subr.bf16.mxu0 0
    %1648 = vmatpush2.bf16.msra.mxu0 0
    %1649 = vmatprep.mubr.bf16.mxu0 0
    %1650 = vmatmul.mubr.bf16.gmra.mxu0 %v424
    %v1651 = vpop.f32.mrf.mxu0
    %v1652 = vadd.f32 %v420, %v1651
    %v1653 = vpop.f32.mrf.mxu0
    %v1654 = vadd.f32 %v420, %v1653
    %v1655 = vpop.f32.mrf.mxu0
    %v1656 = vpop.f32.mrf.mxu0
    %1657 = vdwg.mxu0
    %v1658 = vsub.f32 %v1437, %v1652
    %v1659 = vsub.f32 %v1438, %v1654
    %v1660 = vstv %s1198
    %v1661 = vmul.f32 %v1658, %v1660
    %v1662 = vmul.f32 %v1659, %v1660
    %v1663 = vstv %s1200
    %v1664 = vmul.f32 %v1663, %v1432
    %v1665 = vmul.f32 %v1663, %v1433
    %v1666 = vstv %s1201
    %v1667 = vmul.f32 %v1666, %v1661
    %v1668 = vmul.f32 %v1666, %v1662
    %v1669 = vadd.f32 %v1664, %v1667
    %v1670 = vadd.f32 %v1665, %v1668
    %v1671 = vmul.f32 %v1434, %v1669
    %v1672 = vmul.f32 %v1434, %v1670
    %v1673 = vadd.f32 %v1208, %v1671
    %v1674 = vadd.f32 %v1209, %v1672
    %s1675 = sld [smem:[#allocation3 + $0x18]]
    %s1676 = sld [smem:[#allocation3 + $0x19]]
    %s1677 = sld [smem:[#allocation3 + $0x1a]]
    %s1678 = sld [smem:[#allocation3 + $0x1b]]
    %s1679 = sld [smem:[#allocation3 + $0x1c]]
    %s1680 = sld [smem:[#allocation3 + $0x1d]]
    %s1681 = sld [smem:[#allocation3 + $0x1e]]
    %s1682 = sld [smem:[#allocation3 + $0x1f]]
    %s1683 = scalar_lea.vmem %s4, 48
    %v1684 = vld [vmem:[%s1683] sm:$0xff]
    %v1685 = vld [vmem:[%s1683 + $0x8] sm:$0xff]
    %v1686 = vstv %s1675
    %v1687 = vmul.f32 %v1686, %v1684
    %v1688 = vmul.f32 %v1686, %v1685
    %v1689 = vadd.f32 %v1673, %v1687
    %v1690 = vadd.f32 %v1674, %v1688
    %v1691 = vstv %s1676
    %v1692 = vmul.f32 %v1691, %v88
    %v1693 = vmul.f32 %v1691, %v89
    %v1694 = vmul.f32 %v1691, %v90
    %v1695 = vmul.f32 %v1691, %v91
    %v1696 = vmul.f32 %v1691, %v92
    %v1697 = vmul.f32 %v1691, %v93
    %v1698 = vmul.f32 %v1691, %v94
    %v1699 = vmul.f32 %v1691, %v95
    %v1700 = vadd.f32 %v80, %v1692
    %v1701 = vadd.f32 %v81, %v1693
    %v1702 = vadd.f32 %v82, %v1694
    %v1703 = vadd.f32 %v83, %v1695
    %v1704 = vadd.f32 %v84, %v1696
    %v1705 = vadd.f32 %v85, %v1697
    %v1706 = vadd.f32 %v86, %v1698
    %v1707 = vadd.f32 %v87, %v1699
    %v1708 = vpack.c.bf16 %v1689, %v1689
    %v1709 = vpack.c.bf16 %v1690, %v1690
    %v1711 = vsel %vm126, %v1708, 0
    %v1714 = vsel %vm126, %v1709, 0
    %1716 = vmatprep.subr.bf16.mxu0 0
    %1717 = vmatpush1.bf16.msra.mxu0 0
    %1718 = vmatprep.subr.bf16.mxu0 0
    %1719 = vmatpush1.bf16.msra.mxu0 0
    %1720 = vmatprep.subr.bf16.mxu0 0
    %1721 = vmatpush1.bf16.msra.mxu0 0
    %1722 = vmatprep.subr.bf16.mxu0 0
    %1723 = vmatpush1.bf16.msra.mxu0 0
    %1724 = vmatprep.subr.bf16.mxu0 0
    %1725 = vmatpush1.bf16.msra.mxu0 0
    %1726 = vmatprep.subr.bf16.mxu0 0
    %1727 = vmatpush1.bf16.msra.mxu0 0
    %1728 = vmatprep.subr.bf16.mxu0 0
    %1729 = vmatpush1.bf16.msra.mxu0 0
    %1730 = vmatprep.subr.bf16.mxu0 %v1714
    %1731 = vmatpush1.bf16.msra.mxu0 %v1711
    %1732 = vmatprep.subr.bf16.mxu0 0
    %1733 = vmatpush2.bf16.msra.mxu0 0
    %1734 = vmatprep.subr.bf16.mxu0 0
    %1735 = vmatpush2.bf16.msra.mxu0 0
    %1736 = vmatprep.subr.bf16.mxu0 0
    %1737 = vmatpush2.bf16.msra.mxu0 0
    %1738 = vmatprep.subr.bf16.mxu0 0
    %1739 = vmatpush2.bf16.msra.mxu0 0
    %1740 = vmatprep.subr.bf16.mxu0 0
    %1741 = vmatpush2.bf16.msra.mxu0 0
    %1742 = vmatprep.subr.bf16.mxu0 0
    %1743 = vmatpush2.bf16.msra.mxu0 0
    %1744 = vmatprep.subr.bf16.mxu0 0
    %1745 = vmatpush2.bf16.msra.mxu0 0
    %1746 = vmatprep.subr.bf16.mxu0 0
    %1747 = vmatpush2.bf16.msra.mxu0 0
    %1748 = vmatprep.mubr.bf16.mxu0 0
    %1749 = vmatmul.mubr.bf16.gmra.mxu0 %v247
    %v1750 = vpop.f32.mrf.mxu0
    %v1751 = vadd.f32 %v168, %v1750
    %v1752 = vpop.f32.mrf.mxu0
    %v1753 = vadd.f32 %v170, %v1752
    %v1754 = vpop.f32.mrf.mxu0
    %v1755 = vadd.f32 %v172, %v1754
    %v1756 = vpop.f32.mrf.mxu0
    %v1757 = vadd.f32 %v174, %v1756
    %1758 = vmatprep.mubr.bf16.mxu0 0
    %1759 = vmatmul.mubr.bf16.gmra.mxu0 %v250
    %v1760 = vpop.f32.mrf.mxu0
    %v1761 = vadd.f32 %v178, %v1760
    %v1762 = vpop.f32.mrf.mxu0
    %v1763 = vadd.f32 %v180, %v1762
    %v1764 = vpop.f32.mrf.mxu0
    %v1765 = vadd.f32 %v182, %v1764
    %v1766 = vpop.f32.mrf.mxu0
    %v1767 = vadd.f32 %v184, %v1766
    %1768 = vmatprep.mubr.bf16.mxu0 0
    %1769 = vmatmul.mubr.bf16.gmra.mxu0 %v253
    %v1770 = vpop.f32.mrf.mxu0
    %v1771 = vadd.f32 %v188, %v1770
    %v1772 = vpop.f32.mrf.mxu0
    %v1773 = vadd.f32 %v190, %v1772
    %v1774 = vpop.f32.mrf.mxu0
    %v1775 = vadd.f32 %v192, %v1774
    %v1776 = vpop.f32.mrf.mxu0
    %v1777 = vadd.f32 %v194, %v1776
    %1778 = vmatprep.mubr.bf16.mxu0 0
    %1779 = vmatmul.mubr.bf16.gmra.mxu0 %v256
    %v1780 = vpop.f32.mrf.mxu0
    %v1781 = vadd.f32 %v198, %v1780
    %v1782 = vpop.f32.mrf.mxu0
    %v1783 = vadd.f32 %v200, %v1782
    %v1784 = vpop.f32.mrf.mxu0
    %v1785 = vadd.f32 %v202, %v1784
    %v1786 = vpop.f32.mrf.mxu0
    %v1787 = vadd.f32 %v204, %v1786
    %1788 = vdwg.mxu0
    %1790 = vset.pattern.permute.xlu0 0
    %1791 = vperm.xlu0 %1790, %v1700
    %v1792 = vpop.permute.xlu0 %1791
    %1795 = vset.pattern.permute.xlu0 0
    %1796 = vperm.xlu0 %1795, %v1701
    %v1797 = vpop.permute.xlu0 %1796
    %1800 = vset.pattern.permute.xlu0 0
    %1801 = vperm.xlu0 %1800, %v1702
    %v1802 = vpop.permute.xlu0 %1801
    %1805 = vset.pattern.permute.xlu0 0
    %1806 = vperm.xlu0 %1805, %v1703
    %v1807 = vpop.permute.xlu0 %1806
    %1810 = vset.pattern.permute.xlu0 0
    %1811 = vperm.xlu0 %1810, %v1704
    %v1812 = vpop.permute.xlu0 %1811
    %1815 = vset.pattern.permute.xlu0 0
    %1816 = vperm.xlu0 %1815, %v1705
    %v1817 = vpop.permute.xlu0 %1816
    %1820 = vset.pattern.permute.xlu0 0
    %1821 = vperm.xlu0 %1820, %v1706
    %v1822 = vpop.permute.xlu0 %1821
    %1825 = vset.pattern.permute.xlu0 0
    %1826 = vperm.xlu0 %1825, %v1707
    %v1827 = vpop.permute.xlu0 %1826
    %v1829 = vadd.f32 %v1751, %v1792
    %v1830 = vadd.f32 %v1753, %v1792
    %v1831 = vadd.f32 %v1755, %v1797
    %v1832 = vadd.f32 %v1757, %v1797
    %v1833 = vadd.f32 %v1761, %v1802
    %v1834 = vadd.f32 %v1763, %v1802
    %v1835 = vadd.f32 %v1765, %v1807
    %v1836 = vadd.f32 %v1767, %v1807
    %v1837 = vadd.f32 %v1771, %v1812
    %v1838 = vadd.f32 %v1773, %v1812
    %v1839 = vadd.f32 %v1775, %v1817
    %v1840 = vadd.f32 %v1777, %v1817
    %v1841 = vadd.f32 %v1781, %v1822
    %v1842 = vadd.f32 %v1783, %v1822
    %v1843 = vadd.f32 %v1785, %v1827
    %v1844 = vadd.f32 %v1787, %v1827
    %v1845 = vmax.f32 %v1829, 0.0
    %v1846 = vmax.f32 %v1830, 0.0
    %v1847 = vmax.f32 %v1831, 0.0
    %v1848 = vmax.f32 %v1832, 0.0
    %v1849 = vmax.f32 %v1833, 0.0
    %v1850 = vmax.f32 %v1834, 0.0
    %v1851 = vmax.f32 %v1835, 0.0
    %v1852 = vmax.f32 %v1836, 0.0
    %v1853 = vmax.f32 %v1837, 0.0
    %v1854 = vmax.f32 %v1838, 0.0
    %v1855 = vmax.f32 %v1839, 0.0
    %v1856 = vmax.f32 %v1840, 0.0
    %v1857 = vmax.f32 %v1841, 0.0
    %v1858 = vmax.f32 %v1842, 0.0
    %v1859 = vmax.f32 %v1843, 0.0
    %v1860 = vmax.f32 %v1844, 0.0
    %v1861 = vpack.c.bf16 %v1847, %v1845
    %v1862 = vpack.c.bf16 %v1848, %v1846
    %v1863 = vpack.c.bf16 %v1851, %v1849
    %v1864 = vpack.c.bf16 %v1852, %v1850
    %v1865 = vpack.c.bf16 %v1855, %v1853
    %v1866 = vpack.c.bf16 %v1856, %v1854
    %v1867 = vpack.c.bf16 %v1859, %v1857
    %v1868 = vpack.c.bf16 %v1860, %v1858
    %1869 = vmatprep.subr.bf16.mxu0 0
    %1870 = vmatpush1.bf16.msra.mxu0 0
    %1871 = vmatprep.subr.bf16.mxu0 0
    %1872 = vmatpush1.bf16.msra.mxu0 0
    %1873 = vmatprep.subr.bf16.mxu0 0
    %1874 = vmatpush1.bf16.msra.mxu0 0
    %1875 = vmatprep.subr.bf16.mxu0 0
    %1876 = vmatpush1.bf16.msra.mxu0 0
    %1877 = vmatprep.subr.bf16.mxu0 %v1868
    %1878 = vmatpush1.bf16.msra.mxu0 %v1867
    %1879 = vmatprep.subr.bf16.mxu0 %v1866
    %1880 = vmatpush1.bf16.msra.mxu0 %v1865
    %1881 = vmatprep.subr.bf16.mxu0 %v1864
    %1882 = vmatpush1.bf16.msra.mxu0 %v1863
    %1883 = vmatprep.subr.bf16.mxu0 %v1862
    %1884 = vmatpush1.bf16.msra.mxu0 %v1861
    %1885 = vmatprep.subr.bf16.mxu0 0
    %1886 = vmatpush2.bf16.msra.mxu0 0
    %1887 = vmatprep.subr.bf16.mxu0 0
    %1888 = vmatpush2.bf16.msra.mxu0 0
    %1889 = vmatprep.subr.bf16.mxu0 0
    %1890 = vmatpush2.bf16.msra.mxu0 0
    %1891 = vmatprep.subr.bf16.mxu0 0
    %1892 = vmatpush2.bf16.msra.mxu0 0
    %1893 = vmatprep.subr.bf16.mxu0 0
    %1894 = vmatpush2.bf16.msra.mxu0 0
    %1895 = vmatprep.subr.bf16.mxu0 0
    %1896 = vmatpush2.bf16.msra.mxu0 0
    %1897 = vmatprep.subr.bf16.mxu0 0
    %1898 = vmatpush2.bf16.msra.mxu0 0
    %1899 = vmatprep.subr.bf16.mxu0 0
    %1900 = vmatpush2.bf16.msra.mxu0 0
    %1901 = vmatprep.mubr.bf16.mxu0 0
    %1902 = vmatmul.mubr.bf16.gmra.mxu0 %v424
    %v1903 = vpop.f32.mrf.mxu0
    %v1904 = vadd.f32 %v420, %v1903
    %v1905 = vpop.f32.mrf.mxu0
    %v1906 = vadd.f32 %v420, %v1905
    %v1907 = vpop.f32.mrf.mxu0
    %v1908 = vpop.f32.mrf.mxu0
    %1909 = vdwg.mxu0
    %v1910 = vsub.f32 %v1689, %v1904
    %v1911 = vsub.f32 %v1690, %v1906
    %v1912 = vstv %s1677
    %v1913 = vmul.f32 %v1910, %v1912
    %v1914 = vmul.f32 %v1911, %v1912
    %v1915 = vstv %s1680
    %v1916 = vmul.f32 %v1915, %v1913
    %v1917 = vmul.f32 %v1915, %v1914
    %v1918 = vadd.f32 %v1689, %v1916
    %v1919 = vadd.f32 %v1690, %v1917
    %v1920 = vstv %s1678
    %v1921 = vmul.f32 %v1920, %v88
    %v1922 = vmul.f32 %v1920, %v89
    %v1923 = vmul.f32 %v1920, %v90
    %v1924 = vmul.f32 %v1920, %v91
    %v1925 = vmul.f32 %v1920, %v92
    %v1926 = vmul.f32 %v1920, %v93
    %v1927 = vmul.f32 %v1920, %v94
    %v1928 = vmul.f32 %v1920, %v95
    %v1929 = vadd.f32 %v80, %v1921
    %v1930 = vadd.f32 %v81, %v1922
    %v1931 = vadd.f32 %v82, %v1923
    %v1932 = vadd.f32 %v83, %v1924
    %v1933 = vadd.f32 %v84, %v1925
    %v1934 = vadd.f32 %v85, %v1926
    %v1935 = vadd.f32 %v86, %v1927
    %v1936 = vadd.f32 %v87, %v1928
    %v1937 = vpack.c.bf16 %v1918, %v1918
    %v1938 = vpack.c.bf16 %v1919, %v1919
    %v1940 = vsel %vm126, %v1937, 0
    %v1943 = vsel %vm126, %v1938, 0
    %1945 = vmatprep.subr.bf16.mxu0 0
    %1946 = vmatpush1.bf16.msra.mxu0 0
    %1947 = vmatprep.subr.bf16.mxu0 0
    %1948 = vmatpush1.bf16.msra.mxu0 0
    %1949 = vmatprep.subr.bf16.mxu0 0
    %1950 = vmatpush1.bf16.msra.mxu0 0
    %1951 = vmatprep.subr.bf16.mxu0 0
    %1952 = vmatpush1.bf16.msra.mxu0 0
    %1953 = vmatprep.subr.bf16.mxu0 0
    %1954 = vmatpush1.bf16.msra.mxu0 0
    %1955 = vmatprep.subr.bf16.mxu0 0
    %1956 = vmatpush1.bf16.msra.mxu0 0
    %1957 = vmatprep.subr.bf16.mxu0 0
    %1958 = vmatpush1.bf16.msra.mxu0 0
    %1959 = vmatprep.subr.bf16.mxu0 %v1943
    %1960 = vmatpush1.bf16.msra.mxu0 %v1940
    %1961 = vmatprep.subr.bf16.mxu0 0
    %1962 = vmatpush2.bf16.msra.mxu0 0
    %1963 = vmatprep.subr.bf16.mxu0 0
    %1964 = vmatpush2.bf16.msra.mxu0 0
    %1965 = vmatprep.subr.bf16.mxu0 0
    %1966 = vmatpush2.bf16.msra.mxu0 0
    %1967 = vmatprep.subr.bf16.mxu0 0
    %1968 = vmatpush2.bf16.msra.mxu0 0
    %1969 = vmatprep.subr.bf16.mxu0 0
    %1970 = vmatpush2.bf16.msra.mxu0 0
    %1971 = vmatprep.subr.bf16.mxu0 0
    %1972 = vmatpush2.bf16.msra.mxu0 0
    %1973 = vmatprep.subr.bf16.mxu0 0
    %1974 = vmatpush2.bf16.msra.mxu0 0
    %1975 = vmatprep.subr.bf16.mxu0 0
    %1976 = vmatpush2.bf16.msra.mxu0 0
    %1977 = vmatprep.mubr.bf16.mxu0 0
    %1978 = vmatmul.mubr.bf16.gmra.mxu0 %v247
    %v1979 = vpop.f32.mrf.mxu0
    %v1980 = vadd.f32 %v168, %v1979
    %v1981 = vpop.f32.mrf.mxu0
    %v1982 = vadd.f32 %v170, %v1981
    %v1983 = vpop.f32.mrf.mxu0
    %v1984 = vadd.f32 %v172, %v1983
    %v1985 = vpop.f32.mrf.mxu0
    %v1986 = vadd.f32 %v174, %v1985
    %1987 = vmatprep.mubr.bf16.mxu0 0
    %1988 = vmatmul.mubr.bf16.gmra.mxu0 %v250
    %v1989 = vpop.f32.mrf.mxu0
    %v1990 = vadd.f32 %v178, %v1989
    %v1991 = vpop.f32.mrf.mxu0
    %v1992 = vadd.f32 %v180, %v1991
    %v1993 = vpop.f32.mrf.mxu0
    %v1994 = vadd.f32 %v182, %v1993
    %v1995 = vpop.f32.mrf.mxu0
    %v1996 = vadd.f32 %v184, %v1995
    %1997 = vmatprep.mubr.bf16.mxu0 0
    %1998 = vmatmul.mubr.bf16.gmra.mxu0 %v253
    %v1999 = vpop.f32.mrf.mxu0
    %v2000 = vadd.f32 %v188, %v1999
    %v2001 = vpop.f32.mrf.mxu0
    %v2002 = vadd.f32 %v190, %v2001
    %v2003 = vpop.f32.mrf.mxu0
    %v2004 = vadd.f32 %v192, %v2003
    %v2005 = vpop.f32.mrf.mxu0
    %v2006 = vadd.f32 %v194, %v2005
    %2007 = vmatprep.mubr.bf16.mxu0 0
    %2008 = vmatmul.mubr.bf16.gmra.mxu0 %v256
    %v2009 = vpop.f32.mrf.mxu0
    %v2010 = vadd.f32 %v198, %v2009
    %v2011 = vpop.f32.mrf.mxu0
    %v2012 = vadd.f32 %v200, %v2011
    %v2013 = vpop.f32.mrf.mxu0
    %v2014 = vadd.f32 %v202, %v2013
    %v2015 = vpop.f32.mrf.mxu0
    %v2016 = vadd.f32 %v204, %v2015
    %2017 = vdwg.mxu0
    %2019 = vset.pattern.permute.xlu0 0
    %2020 = vperm.xlu0 %2019, %v1929
    %v2021 = vpop.permute.xlu0 %2020
    %2024 = vset.pattern.permute.xlu0 0
    %2025 = vperm.xlu0 %2024, %v1930
    %v2026 = vpop.permute.xlu0 %2025
    %2029 = vset.pattern.permute.xlu0 0
    %2030 = vperm.xlu0 %2029, %v1931
    %v2031 = vpop.permute.xlu0 %2030
    %2034 = vset.pattern.permute.xlu0 0
    %2035 = vperm.xlu0 %2034, %v1932
    %v2036 = vpop.permute.xlu0 %2035
    %2039 = vset.pattern.permute.xlu0 0
    %2040 = vperm.xlu0 %2039, %v1933
    %v2041 = vpop.permute.xlu0 %2040
    %2044 = vset.pattern.permute.xlu0 0
    %2045 = vperm.xlu0 %2044, %v1934
    %v2046 = vpop.permute.xlu0 %2045
    %2049 = vset.pattern.permute.xlu0 0
    %2050 = vperm.xlu0 %2049, %v1935
    %v2051 = vpop.permute.xlu0 %2050
    %2054 = vset.pattern.permute.xlu0 0
    %2055 = vperm.xlu0 %2054, %v1936
    %v2056 = vpop.permute.xlu0 %2055
    %v2058 = vadd.f32 %v1980, %v2021
    %v2059 = vadd.f32 %v1982, %v2021
    %v2060 = vadd.f32 %v1984, %v2026
    %v2061 = vadd.f32 %v1986, %v2026
    %v2062 = vadd.f32 %v1990, %v2031
    %v2063 = vadd.f32 %v1992, %v2031
    %v2064 = vadd.f32 %v1994, %v2036
    %v2065 = vadd.f32 %v1996, %v2036
    %v2066 = vadd.f32 %v2000, %v2041
    %v2067 = vadd.f32 %v2002, %v2041
    %v2068 = vadd.f32 %v2004, %v2046
    %v2069 = vadd.f32 %v2006, %v2046
    %v2070 = vadd.f32 %v2010, %v2051
    %v2071 = vadd.f32 %v2012, %v2051
    %v2072 = vadd.f32 %v2014, %v2056
    %v2073 = vadd.f32 %v2016, %v2056
    %v2074 = vmax.f32 %v2058, 0.0
    %v2075 = vmax.f32 %v2059, 0.0
    %v2076 = vmax.f32 %v2060, 0.0
    %v2077 = vmax.f32 %v2061, 0.0
    %v2078 = vmax.f32 %v2062, 0.0
    %v2079 = vmax.f32 %v2063, 0.0
    %v2080 = vmax.f32 %v2064, 0.0
    %v2081 = vmax.f32 %v2065, 0.0
    %v2082 = vmax.f32 %v2066, 0.0
    %v2083 = vmax.f32 %v2067, 0.0
    %v2084 = vmax.f32 %v2068, 0.0
    %v2085 = vmax.f32 %v2069, 0.0
    %v2086 = vmax.f32 %v2070, 0.0
    %v2087 = vmax.f32 %v2071, 0.0
    %v2088 = vmax.f32 %v2072, 0.0
    %v2089 = vmax.f32 %v2073, 0.0
    %v2090 = vpack.c.bf16 %v2076, %v2074
    %v2091 = vpack.c.bf16 %v2077, %v2075
    %v2092 = vpack.c.bf16 %v2080, %v2078
    %v2093 = vpack.c.bf16 %v2081, %v2079
    %v2094 = vpack.c.bf16 %v2084, %v2082
    %v2095 = vpack.c.bf16 %v2085, %v2083
    %v2096 = vpack.c.bf16 %v2088, %v2086
    %v2097 = vpack.c.bf16 %v2089, %v2087
    %2098 = vmatprep.subr.bf16.mxu0 0
    %2099 = vmatpush1.bf16.msra.mxu0 0
    %2100 = vmatprep.subr.bf16.mxu0 0
    %2101 = vmatpush1.bf16.msra.mxu0 0
    %2102 = vmatprep.subr.bf16.mxu0 0
    %2103 = vmatpush1.bf16.msra.mxu0 0
    %2104 = vmatprep.subr.bf16.mxu0 0
    %2105 = vmatpush1.bf16.msra.mxu0 0
    %2106 = vmatprep.subr.bf16.mxu0 %v2097
    %2107 = vmatpush1.bf16.msra.mxu0 %v2096
    %2108 = vmatprep.subr.bf16.mxu0 %v2095
    %2109 = vmatpush1.bf16.msra.mxu0 %v2094
    %2110 = vmatprep.subr.bf16.mxu0 %v2093
    %2111 = vmatpush1.bf16.msra.mxu0 %v2092
    %2112 = vmatprep.subr.bf16.mxu0 %v2091
    %2113 = vmatpush1.bf16.msra.mxu0 %v2090
    %2114 = vmatprep.subr.bf16.mxu0 0
    %2115 = vmatpush2.bf16.msra.mxu0 0
    %2116 = vmatprep.subr.bf16.mxu0 0
    %2117 = vmatpush2.bf16.msra.mxu0 0
    %2118 = vmatprep.subr.bf16.mxu0 0
    %2119 = vmatpush2.bf16.msra.mxu0 0
    %2120 = vmatprep.subr.bf16.mxu0 0
    %2121 = vmatpush2.bf16.msra.mxu0 0
    %2122 = vmatprep.subr.bf16.mxu0 0
    %2123 = vmatpush2.bf16.msra.mxu0 0
    %2124 = vmatprep.subr.bf16.mxu0 0
    %2125 = vmatpush2.bf16.msra.mxu0 0
    %2126 = vmatprep.subr.bf16.mxu0 0
    %2127 = vmatpush2.bf16.msra.mxu0 0
    %2128 = vmatprep.subr.bf16.mxu0 0
    %2129 = vmatpush2.bf16.msra.mxu0 0
    %2130 = vmatprep.mubr.bf16.mxu0 0
    %2131 = vmatmul.mubr.bf16.gmra.mxu0 %v424
    %v2132 = vpop.f32.mrf.mxu0
    %v2133 = vadd.f32 %v420, %v2132
    %v2134 = vpop.f32.mrf.mxu0
    %v2135 = vadd.f32 %v420, %v2134
    %v2136 = vpop.f32.mrf.mxu0
    %v2137 = vpop.f32.mrf.mxu0
    %2138 = vdwg.mxu0
    %v2139 = vsub.f32 %v1918, %v2133
    %v2140 = vsub.f32 %v1919, %v2135
    %v2141 = vstv %s1679
    %v2142 = vmul.f32 %v2139, %v2141
    %v2143 = vmul.f32 %v2140, %v2141
    %v2144 = vstv %s1681
    %v2145 = vmul.f32 %v2144, %v1913
    %v2146 = vmul.f32 %v2144, %v1914
    %v2147 = vstv %s1682
    %v2148 = vmul.f32 %v2147, %v2142
    %v2149 = vmul.f32 %v2147, %v2143
    %v2150 = vadd.f32 %v2145, %v2148
    %v2151 = vadd.f32 %v2146, %v2149
    %v2152 = vmul.f32 %v1915, %v2150
    %v2153 = vmul.f32 %v1915, %v2151
    %v2154 = vadd.f32 %v1689, %v2152
    %v2155 = vadd.f32 %v1690, %v2153
    %s2156 = sld [smem:[#allocation3 + $0x20]]
    %s2157 = sld [smem:[#allocation3 + $0x21]]
    %s2158 = sld [smem:[#allocation3 + $0x22]]
    %s2159 = sld [smem:[#allocation3 + $0x23]]
    %s2160 = sld [smem:[#allocation3 + $0x24]]
    %s2161 = sld [smem:[#allocation3 + $0x25]]
    %s2162 = sld [smem:[#allocation3 + $0x26]]
    %s2163 = sld [smem:[#allocation3 + $0x27]]
    %s2164 = scalar_lea.vmem %s4, 64
    %v2165 = vld [vmem:[%s2164] sm:$0xff]
    %v2166 = vld [vmem:[%s2164 + $0x8] sm:$0xff]
    %v2167 = vstv %s2156
    %v2168 = vmul.f32 %v2167, %v2165
    %v2169 = vmul.f32 %v2167, %v2166
    %v2170 = vadd.f32 %v2154, %v2168
    %v2171 = vadd.f32 %v2155, %v2169
    %v2172 = vstv %s2157
    %v2173 = vmul.f32 %v2172, %v88
    %v2174 = vmul.f32 %v2172, %v89
    %v2175 = vmul.f32 %v2172, %v90
    %v2176 = vmul.f32 %v2172, %v91
    %v2177 = vmul.f32 %v2172, %v92
    %v2178 = vmul.f32 %v2172, %v93
    %v2179 = vmul.f32 %v2172, %v94
    %v2180 = vmul.f32 %v2172, %v95
    %v2181 = vadd.f32 %v80, %v2173
    %v2182 = vadd.f32 %v81, %v2174
    %v2183 = vadd.f32 %v82, %v2175
    %v2184 = vadd.f32 %v83, %v2176
    %v2185 = vadd.f32 %v84, %v2177
    %v2186 = vadd.f32 %v85, %v2178
    %v2187 = vadd.f32 %v86, %v2179
    %v2188 = vadd.f32 %v87, %v2180
    %v2189 = vpack.c.bf16 %v2170, %v2170
    %v2190 = vpack.c.bf16 %v2171, %v2171
    %v2192 = vsel %vm126, %v2189, 0
    %v2195 = vsel %vm126, %v2190, 0
    %2197 = vmatprep.subr.bf16.mxu0 0
    %2198 = vmatpush1.bf16.msra.mxu0 0
    %2199 = vmatprep.subr.bf16.mxu0 0
    %2200 = vmatpush1.bf16.msra.mxu0 0
    %2201 = vmatprep.subr.bf16.mxu0 0
    %2202 = vmatpush1.bf16.msra.mxu0 0
    %2203 = vmatprep.subr.bf16.mxu0 0
    %2204 = vmatpush1.bf16.msra.mxu0 0
    %2205 = vmatprep.subr.bf16.mxu0 0
    %2206 = vmatpush1.bf16.msra.mxu0 0
    %2207 = vmatprep.subr.bf16.mxu0 0
    %2208 = vmatpush1.bf16.msra.mxu0 0
    %2209 = vmatprep.subr.bf16.mxu0 0
    %2210 = vmatpush1.bf16.msra.mxu0 0
    %2211 = vmatprep.subr.bf16.mxu0 %v2195
    %2212 = vmatpush1.bf16.msra.mxu0 %v2192
    %2213 = vmatprep.subr.bf16.mxu0 0
    %2214 = vmatpush2.bf16.msra.mxu0 0
    %2215 = vmatprep.subr.bf16.mxu0 0
    %2216 = vmatpush2.bf16.msra.mxu0 0
    %2217 = vmatprep.subr.bf16.mxu0 0
    %2218 = vmatpush2.bf16.msra.mxu0 0
    %2219 = vmatprep.subr.bf16.mxu0 0
    %2220 = vmatpush2.bf16.msra.mxu0 0
    %2221 = vmatprep.subr.bf16.mxu0 0
    %2222 = vmatpush2.bf16.msra.mxu0 0
    %2223 = vmatprep.subr.bf16.mxu0 0
    %2224 = vmatpush2.bf16.msra.mxu0 0
    %2225 = vmatprep.subr.bf16.mxu0 0
    %2226 = vmatpush2.bf16.msra.mxu0 0
    %2227 = vmatprep.subr.bf16.mxu0 0
    %2228 = vmatpush2.bf16.msra.mxu0 0
    %2229 = vmatprep.mubr.bf16.mxu0 0
    %2230 = vmatmul.mubr.bf16.gmra.mxu0 %v247
    %v2231 = vpop.f32.mrf.mxu0
    %v2232 = vadd.f32 %v168, %v2231
    %v2233 = vpop.f32.mrf.mxu0
    %v2234 = vadd.f32 %v170, %v2233
    %v2235 = vpop.f32.mrf.mxu0
    %v2236 = vadd.f32 %v172, %v2235
    %v2237 = vpop.f32.mrf.mxu0
    %v2238 = vadd.f32 %v174, %v2237
    %2239 = vmatprep.mubr.bf16.mxu0 0
    %2240 = vmatmul.mubr.bf16.gmra.mxu0 %v250
    %v2241 = vpop.f32.mrf.mxu0
    %v2242 = vadd.f32 %v178, %v2241
    %v2243 = vpop.f32.mrf.mxu0
    %v2244 = vadd.f32 %v180, %v2243
    %v2245 = vpop.f32.mrf.mxu0
    %v2246 = vadd.f32 %v182, %v2245
    %v2247 = vpop.f32.mrf.mxu0
    %v2248 = vadd.f32 %v184, %v2247
    %2249 = vmatprep.mubr.bf16.mxu0 0
    %2250 = vmatmul.mubr.bf16.gmra.mxu0 %v253
    %v2251 = vpop.f32.mrf.mxu0
    %v2252 = vadd.f32 %v188, %v2251
    %v2253 = vpop.f32.mrf.mxu0
    %v2254 = vadd.f32 %v190, %v2253
    %v2255 = vpop.f32.mrf.mxu0
    %v2256 = vadd.f32 %v192, %v2255
    %v2257 = vpop.f32.mrf.mxu0
    %v2258 = vadd.f32 %v194, %v2257
    %2259 = vmatprep.mubr.bf16.mxu0 0
    %2260 = vmatmul.mubr.bf16.gmra.mxu0 %v256
    %v2261 = vpop.f32.mrf.mxu0
    %v2262 = vadd.f32 %v198, %v2261
    %v2263 = vpop.f32.mrf.mxu0
    %v2264 = vadd.f32 %v200, %v2263
    %v2265 = vpop.f32.mrf.mxu0
    %v2266 = vadd.f32 %v202, %v2265
    %v2267 = vpop.f32.mrf.mxu0
    %v2268 = vadd.f32 %v204, %v2267
    %2269 = vdwg.mxu0
    %2271 = vset.pattern.permute.xlu0 0
    %2272 = vperm.xlu0 %2271, %v2181
    %v2273 = vpop.permute.xlu0 %2272
    %2276 = vset.pattern.permute.xlu0 0
    %2277 = vperm.xlu0 %2276, %v2182
    %v2278 = vpop.permute.xlu0 %2277
    %2281 = vset.pattern.permute.xlu0 0
    %2282 = vperm.xlu0 %2281, %v2183
    %v2283 = vpop.permute.xlu0 %2282
    %2286 = vset.pattern.permute.xlu0 0
    %2287 = vperm.xlu0 %2286, %v2184
    %v2288 = vpop.permute.xlu0 %2287
    %2291 = vset.pattern.permute.xlu0 0
    %2292 = vperm.xlu0 %2291, %v2185
    %v2293 = vpop.permute.xlu0 %2292
    %2296 = vset.pattern.permute.xlu0 0
    %2297 = vperm.xlu0 %2296, %v2186
    %v2298 = vpop.permute.xlu0 %2297
    %2301 = vset.pattern.permute.xlu0 0
    %2302 = vperm.xlu0 %2301, %v2187
    %v2303 = vpop.permute.xlu0 %2302
    %2306 = vset.pattern.permute.xlu0 0
    %2307 = vperm.xlu0 %2306, %v2188
    %v2308 = vpop.permute.xlu0 %2307
    %v2310 = vadd.f32 %v2232, %v2273
    %v2311 = vadd.f32 %v2234, %v2273
    %v2312 = vadd.f32 %v2236, %v2278
    %v2313 = vadd.f32 %v2238, %v2278
    %v2314 = vadd.f32 %v2242, %v2283
    %v2315 = vadd.f32 %v2244, %v2283
    %v2316 = vadd.f32 %v2246, %v2288
    %v2317 = vadd.f32 %v2248, %v2288
    %v2318 = vadd.f32 %v2252, %v2293
    %v2319 = vadd.f32 %v2254, %v2293
    %v2320 = vadd.f32 %v2256, %v2298
    %v2321 = vadd.f32 %v2258, %v2298
    %v2322 = vadd.f32 %v2262, %v2303
    %v2323 = vadd.f32 %v2264, %v2303
    %v2324 = vadd.f32 %v2266, %v2308
    %v2325 = vadd.f32 %v2268, %v2308
    %v2326 = vmax.f32 %v2310, 0.0
    %v2327 = vmax.f32 %v2311, 0.0
    %v2328 = vmax.f32 %v2312, 0.0
    %v2329 = vmax.f32 %v2313, 0.0
    %v2330 = vmax.f32 %v2314, 0.0
    %v2331 = vmax.f32 %v2315, 0.0
    %v2332 = vmax.f32 %v2316, 0.0
    %v2333 = vmax.f32 %v2317, 0.0
    %v2334 = vmax.f32 %v2318, 0.0
    %v2335 = vmax.f32 %v2319, 0.0
    %v2336 = vmax.f32 %v2320, 0.0
    %v2337 = vmax.f32 %v2321, 0.0
    %v2338 = vmax.f32 %v2322, 0.0
    %v2339 = vmax.f32 %v2323, 0.0
    %v2340 = vmax.f32 %v2324, 0.0
    %v2341 = vmax.f32 %v2325, 0.0
    %v2342 = vpack.c.bf16 %v2328, %v2326
    %v2343 = vpack.c.bf16 %v2329, %v2327
    %v2344 = vpack.c.bf16 %v2332, %v2330
    %v2345 = vpack.c.bf16 %v2333, %v2331
    %v2346 = vpack.c.bf16 %v2336, %v2334
    %v2347 = vpack.c.bf16 %v2337, %v2335
    %v2348 = vpack.c.bf16 %v2340, %v2338
    %v2349 = vpack.c.bf16 %v2341, %v2339
    %2350 = vmatprep.subr.bf16.mxu0 0
    %2351 = vmatpush1.bf16.msra.mxu0 0
    %2352 = vmatprep.subr.bf16.mxu0 0
    %2353 = vmatpush1.bf16.msra.mxu0 0
    %2354 = vmatprep.subr.bf16.mxu0 0
    %2355 = vmatpush1.bf16.msra.mxu0 0
    %2356 = vmatprep.subr.bf16.mxu0 0
    %2357 = vmatpush1.bf16.msra.mxu0 0
    %2358 = vmatprep.subr.bf16.mxu0 %v2349
    %2359 = vmatpush1.bf16.msra.mxu0 %v2348
    %2360 = vmatprep.subr.bf16.mxu0 %v2347
    %2361 = vmatpush1.bf16.msra.mxu0 %v2346
    %2362 = vmatprep.subr.bf16.mxu0 %v2345
    %2363 = vmatpush1.bf16.msra.mxu0 %v2344
    %2364 = vmatprep.subr.bf16.mxu0 %v2343
    %2365 = vmatpush1.bf16.msra.mxu0 %v2342
    %2366 = vmatprep.subr.bf16.mxu0 0
    %2367 = vmatpush2.bf16.msra.mxu0 0
    %2368 = vmatprep.subr.bf16.mxu0 0
    %2369 = vmatpush2.bf16.msra.mxu0 0
    %2370 = vmatprep.subr.bf16.mxu0 0
    %2371 = vmatpush2.bf16.msra.mxu0 0
    %2372 = vmatprep.subr.bf16.mxu0 0
    %2373 = vmatpush2.bf16.msra.mxu0 0
    %2374 = vmatprep.subr.bf16.mxu0 0
    %2375 = vmatpush2.bf16.msra.mxu0 0
    %2376 = vmatprep.subr.bf16.mxu0 0
    %2377 = vmatpush2.bf16.msra.mxu0 0
    %2378 = vmatprep.subr.bf16.mxu0 0
    %2379 = vmatpush2.bf16.msra.mxu0 0
    %2380 = vmatprep.subr.bf16.mxu0 0
    %2381 = vmatpush2.bf16.msra.mxu0 0
    %2382 = vmatprep.mubr.bf16.mxu0 0
    %2383 = vmatmul.mubr.bf16.gmra.mxu0 %v424
    %v2384 = vpop.f32.mrf.mxu0
    %v2385 = vadd.f32 %v420, %v2384
    %v2386 = vpop.f32.mrf.mxu0
    %v2387 = vadd.f32 %v420, %v2386
    %v2388 = vpop.f32.mrf.mxu0
    %v2389 = vpop.f32.mrf.mxu0
    %2390 = vdwg.mxu0
    %v2391 = vsub.f32 %v2170, %v2385
    %v2392 = vsub.f32 %v2171, %v2387
    %v2393 = vstv %s2158
    %v2394 = vmul.f32 %v2391, %v2393
    %v2395 = vmul.f32 %v2392, %v2393
    %v2396 = vstv %s2161
    %v2397 = vmul.f32 %v2396, %v2394
    %v2398 = vmul.f32 %v2396, %v2395
    %v2399 = vadd.f32 %v2170, %v2397
    %v2400 = vadd.f32 %v2171, %v2398
    %v2401 = vstv %s2159
    %v2402 = vmul.f32 %v2401, %v88
    %v2403 = vmul.f32 %v2401, %v89
    %v2404 = vmul.f32 %v2401, %v90
    %v2405 = vmul.f32 %v2401, %v91
    %v2406 = vmul.f32 %v2401, %v92
    %v2407 = vmul.f32 %v2401, %v93
    %v2408 = vmul.f32 %v2401, %v94
    %v2409 = vmul.f32 %v2401, %v95
    %v2410 = vadd.f32 %v80, %v2402
    %v2411 = vadd.f32 %v81, %v2403
    %v2412 = vadd.f32 %v82, %v2404
    %v2413 = vadd.f32 %v83, %v2405
    %v2414 = vadd.f32 %v84, %v2406
    %v2415 = vadd.f32 %v85, %v2407
    %v2416 = vadd.f32 %v86, %v2408
    %v2417 = vadd.f32 %v87, %v2409
    %v2418 = vpack.c.bf16 %v2399, %v2399
    %v2419 = vpack.c.bf16 %v2400, %v2400
    %v2421 = vsel %vm126, %v2418, 0
    %v2424 = vsel %vm126, %v2419, 0
    %2426 = vmatprep.subr.bf16.mxu0 0
    %2427 = vmatpush1.bf16.msra.mxu0 0
    %2428 = vmatprep.subr.bf16.mxu0 0
    %2429 = vmatpush1.bf16.msra.mxu0 0
    %2430 = vmatprep.subr.bf16.mxu0 0
    %2431 = vmatpush1.bf16.msra.mxu0 0
    %2432 = vmatprep.subr.bf16.mxu0 0
    %2433 = vmatpush1.bf16.msra.mxu0 0
    %2434 = vmatprep.subr.bf16.mxu0 0
    %2435 = vmatpush1.bf16.msra.mxu0 0
    %2436 = vmatprep.subr.bf16.mxu0 0
    %2437 = vmatpush1.bf16.msra.mxu0 0
    %2438 = vmatprep.subr.bf16.mxu0 0
    %2439 = vmatpush1.bf16.msra.mxu0 0
    %2440 = vmatprep.subr.bf16.mxu0 %v2424
    %2441 = vmatpush1.bf16.msra.mxu0 %v2421
    %2442 = vmatprep.subr.bf16.mxu0 0
    %2443 = vmatpush2.bf16.msra.mxu0 0
    %2444 = vmatprep.subr.bf16.mxu0 0
    %2445 = vmatpush2.bf16.msra.mxu0 0
    %2446 = vmatprep.subr.bf16.mxu0 0
    %2447 = vmatpush2.bf16.msra.mxu0 0
    %2448 = vmatprep.subr.bf16.mxu0 0
    %2449 = vmatpush2.bf16.msra.mxu0 0
    %2450 = vmatprep.subr.bf16.mxu0 0
    %2451 = vmatpush2.bf16.msra.mxu0 0
    %2452 = vmatprep.subr.bf16.mxu0 0
    %2453 = vmatpush2.bf16.msra.mxu0 0
    %2454 = vmatprep.subr.bf16.mxu0 0
    %2455 = vmatpush2.bf16.msra.mxu0 0
    %2456 = vmatprep.subr.bf16.mxu0 0
    %2457 = vmatpush2.bf16.msra.mxu0 0
    %2458 = vmatprep.mubr.bf16.mxu0 0
    %2459 = vmatmul.mubr.bf16.gmra.mxu0 %v247
    %v2460 = vpop.f32.mrf.mxu0
    %v2461 = vadd.f32 %v168, %v2460
    %v2462 = vpop.f32.mrf.mxu0
    %v2463 = vadd.f32 %v170, %v2462
    %v2464 = vpop.f32.mrf.mxu0
    %v2465 = vadd.f32 %v172, %v2464
    %v2466 = vpop.f32.mrf.mxu0
    %v2467 = vadd.f32 %v174, %v2466
    %2468 = vmatprep.mubr.bf16.mxu0 0
    %2469 = vmatmul.mubr.bf16.gmra.mxu0 %v250
    %v2470 = vpop.f32.mrf.mxu0
    %v2471 = vadd.f32 %v178, %v2470
    %v2472 = vpop.f32.mrf.mxu0
    %v2473 = vadd.f32 %v180, %v2472
    %v2474 = vpop.f32.mrf.mxu0
    %v2475 = vadd.f32 %v182, %v2474
    %v2476 = vpop.f32.mrf.mxu0
    %v2477 = vadd.f32 %v184, %v2476
    %2478 = vmatprep.mubr.bf16.mxu0 0
    %2479 = vmatmul.mubr.bf16.gmra.mxu0 %v253
    %v2480 = vpop.f32.mrf.mxu0
    %v2481 = vadd.f32 %v188, %v2480
    %v2482 = vpop.f32.mrf.mxu0
    %v2483 = vadd.f32 %v190, %v2482
    %v2484 = vpop.f32.mrf.mxu0
    %v2485 = vadd.f32 %v192, %v2484
    %v2486 = vpop.f32.mrf.mxu0
    %v2487 = vadd.f32 %v194, %v2486
    %2488 = vmatprep.mubr.bf16.mxu0 0
    %2489 = vmatmul.mubr.bf16.gmra.mxu0 %v256
    %v2490 = vpop.f32.mrf.mxu0
    %v2491 = vadd.f32 %v198, %v2490
    %v2492 = vpop.f32.mrf.mxu0
    %v2493 = vadd.f32 %v200, %v2492
    %v2494 = vpop.f32.mrf.mxu0
    %v2495 = vadd.f32 %v202, %v2494
    %v2496 = vpop.f32.mrf.mxu0
    %v2497 = vadd.f32 %v204, %v2496
    %2498 = vdwg.mxu0
    %2500 = vset.pattern.permute.xlu0 0
    %2501 = vperm.xlu0 %2500, %v2410
    %v2502 = vpop.permute.xlu0 %2501
    %2505 = vset.pattern.permute.xlu0 0
    %2506 = vperm.xlu0 %2505, %v2411
    %v2507 = vpop.permute.xlu0 %2506
    %2510 = vset.pattern.permute.xlu0 0
    %2511 = vperm.xlu0 %2510, %v2412
    %v2512 = vpop.permute.xlu0 %2511
    %2515 = vset.pattern.permute.xlu0 0
    %2516 = vperm.xlu0 %2515, %v2413
    %v2517 = vpop.permute.xlu0 %2516
    %2520 = vset.pattern.permute.xlu0 0
    %2521 = vperm.xlu0 %2520, %v2414
    %v2522 = vpop.permute.xlu0 %2521
    %2525 = vset.pattern.permute.xlu0 0
    %2526 = vperm.xlu0 %2525, %v2415
    %v2527 = vpop.permute.xlu0 %2526
    %2530 = vset.pattern.permute.xlu0 0
    %2531 = vperm.xlu0 %2530, %v2416
    %v2532 = vpop.permute.xlu0 %2531
    %2535 = vset.pattern.permute.xlu0 0
    %2536 = vperm.xlu0 %2535, %v2417
    %v2537 = vpop.permute.xlu0 %2536
    %v2539 = vadd.f32 %v2461, %v2502
    %v2540 = vadd.f32 %v2463, %v2502
    %v2541 = vadd.f32 %v2465, %v2507
    %v2542 = vadd.f32 %v2467, %v2507
    %v2543 = vadd.f32 %v2471, %v2512
    %v2544 = vadd.f32 %v2473, %v2512
    %v2545 = vadd.f32 %v2475, %v2517
    %v2546 = vadd.f32 %v2477, %v2517
    %v2547 = vadd.f32 %v2481, %v2522
    %v2548 = vadd.f32 %v2483, %v2522
    %v2549 = vadd.f32 %v2485, %v2527
    %v2550 = vadd.f32 %v2487, %v2527
    %v2551 = vadd.f32 %v2491, %v2532
    %v2552 = vadd.f32 %v2493, %v2532
    %v2553 = vadd.f32 %v2495, %v2537
    %v2554 = vadd.f32 %v2497, %v2537
    %v2555 = vmax.f32 %v2539, 0.0
    %v2556 = vmax.f32 %v2540, 0.0
    %v2557 = vmax.f32 %v2541, 0.0
    %v2558 = vmax.f32 %v2542, 0.0
    %v2559 = vmax.f32 %v2543, 0.0
    %v2560 = vmax.f32 %v2544, 0.0
    %v2561 = vmax.f32 %v2545, 0.0
    %v2562 = vmax.f32 %v2546, 0.0
    %v2563 = vmax.f32 %v2547, 0.0
    %v2564 = vmax.f32 %v2548, 0.0
    %v2565 = vmax.f32 %v2549, 0.0
    %v2566 = vmax.f32 %v2550, 0.0
    %v2567 = vmax.f32 %v2551, 0.0
    %v2568 = vmax.f32 %v2552, 0.0
    %v2569 = vmax.f32 %v2553, 0.0
    %v2570 = vmax.f32 %v2554, 0.0
    %v2571 = vpack.c.bf16 %v2557, %v2555
    %v2572 = vpack.c.bf16 %v2558, %v2556
    %v2573 = vpack.c.bf16 %v2561, %v2559
    %v2574 = vpack.c.bf16 %v2562, %v2560
    %v2575 = vpack.c.bf16 %v2565, %v2563
    %v2576 = vpack.c.bf16 %v2566, %v2564
    %v2577 = vpack.c.bf16 %v2569, %v2567
    %v2578 = vpack.c.bf16 %v2570, %v2568
    %2579 = vmatprep.subr.bf16.mxu0 0
    %2580 = vmatpush1.bf16.msra.mxu0 0
    %2581 = vmatprep.subr.bf16.mxu0 0
    %2582 = vmatpush1.bf16.msra.mxu0 0
    %2583 = vmatprep.subr.bf16.mxu0 0
    %2584 = vmatpush1.bf16.msra.mxu0 0
    %2585 = vmatprep.subr.bf16.mxu0 0
    %2586 = vmatpush1.bf16.msra.mxu0 0
    %2587 = vmatprep.subr.bf16.mxu0 %v2578
    %2588 = vmatpush1.bf16.msra.mxu0 %v2577
    %2589 = vmatprep.subr.bf16.mxu0 %v2576
    %2590 = vmatpush1.bf16.msra.mxu0 %v2575
    %2591 = vmatprep.subr.bf16.mxu0 %v2574
    %2592 = vmatpush1.bf16.msra.mxu0 %v2573
    %2593 = vmatprep.subr.bf16.mxu0 %v2572
    %2594 = vmatpush1.bf16.msra.mxu0 %v2571
    %2595 = vmatprep.subr.bf16.mxu0 0
    %2596 = vmatpush2.bf16.msra.mxu0 0
    %2597 = vmatprep.subr.bf16.mxu0 0
    %2598 = vmatpush2.bf16.msra.mxu0 0
    %2599 = vmatprep.subr.bf16.mxu0 0
    %2600 = vmatpush2.bf16.msra.mxu0 0
    %2601 = vmatprep.subr.bf16.mxu0 0
    %2602 = vmatpush2.bf16.msra.mxu0 0
    %2603 = vmatprep.subr.bf16.mxu0 0
    %2604 = vmatpush2.bf16.msra.mxu0 0
    %2605 = vmatprep.subr.bf16.mxu0 0
    %2606 = vmatpush2.bf16.msra.mxu0 0
    %2607 = vmatprep.subr.bf16.mxu0 0
    %2608 = vmatpush2.bf16.msra.mxu0 0
    %2609 = vmatprep.subr.bf16.mxu0 0
    %2610 = vmatpush2.bf16.msra.mxu0 0
    %2611 = vmatprep.mubr.bf16.mxu0 0
    %2612 = vmatmul.mubr.bf16.gmra.mxu0 %v424
    %v2613 = vpop.f32.mrf.mxu0
    %v2614 = vadd.f32 %v420, %v2613
    %v2615 = vpop.f32.mrf.mxu0
    %v2616 = vadd.f32 %v420, %v2615
    %v2617 = vpop.f32.mrf.mxu0
    %v2618 = vpop.f32.mrf.mxu0
    %2619 = vdwg.mxu0
    %v2620 = vsub.f32 %v2399, %v2614
    %v2621 = vsub.f32 %v2400, %v2616
    %v2622 = vstv %s2160
    %v2623 = vmul.f32 %v2620, %v2622
    %v2624 = vmul.f32 %v2621, %v2622
    %v2625 = vstv %s2162
    %v2626 = vmul.f32 %v2625, %v2394
    %v2627 = vmul.f32 %v2625, %v2395
    %v2628 = vstv %s2163
    %v2629 = vmul.f32 %v2628, %v2623
    %v2630 = vmul.f32 %v2628, %v2624
    %v2631 = vadd.f32 %v2626, %v2629
    %v2632 = vadd.f32 %v2627, %v2630
    %v2633 = vmul.f32 %v2396, %v2631
    %v2634 = vmul.f32 %v2396, %v2632
    %v2635 = vadd.f32 %v2170, %v2633
    %v2636 = vadd.f32 %v2171, %v2634
    %s2637 = sld [smem:[#allocation3 + $0x28]]
    %s2638 = sld [smem:[#allocation3 + $0x29]]
    %s2639 = sld [smem:[#allocation3 + $0x2a]]
    %s2640 = sld [smem:[#allocation3 + $0x2b]]
    %s2641 = sld [smem:[#allocation3 + $0x2c]]
    %s2642 = sld [smem:[#allocation3 + $0x2d]]
    %s2643 = sld [smem:[#allocation3 + $0x2e]]
    %s2644 = sld [smem:[#allocation3 + $0x2f]]
    %s2645 = scalar_lea.vmem %s4, 80
    %v2646 = vld [vmem:[%s2645] sm:$0xff]
    %v2647 = vld [vmem:[%s2645 + $0x8] sm:$0xff]
    %v2648 = vstv %s2637
    %v2649 = vmul.f32 %v2648, %v2646
    %v2650 = vmul.f32 %v2648, %v2647
    %v2651 = vadd.f32 %v2635, %v2649
    %v2652 = vadd.f32 %v2636, %v2650
    %v2653 = vstv %s2638
    %v2654 = vmul.f32 %v2653, %v88
    %v2655 = vmul.f32 %v2653, %v89
    %v2656 = vmul.f32 %v2653, %v90
    %v2657 = vmul.f32 %v2653, %v91
    %v2658 = vmul.f32 %v2653, %v92
    %v2659 = vmul.f32 %v2653, %v93
    %v2660 = vmul.f32 %v2653, %v94
    %v2661 = vmul.f32 %v2653, %v95
    %v2662 = vadd.f32 %v80, %v2654
    %v2663 = vadd.f32 %v81, %v2655
    %v2664 = vadd.f32 %v82, %v2656
    %v2665 = vadd.f32 %v83, %v2657
    %v2666 = vadd.f32 %v84, %v2658
    %v2667 = vadd.f32 %v85, %v2659
    %v2668 = vadd.f32 %v86, %v2660
    %v2669 = vadd.f32 %v87, %v2661
    %v2670 = vpack.c.bf16 %v2651, %v2651
    %v2671 = vpack.c.bf16 %v2652, %v2652
    %v2673 = vsel %vm126, %v2670, 0
    %v2676 = vsel %vm126, %v2671, 0
    %2678 = vmatprep.subr.bf16.mxu0 0
    %2679 = vmatpush1.bf16.msra.mxu0 0
    %2680 = vmatprep.subr.bf16.mxu0 0
    %2681 = vmatpush1.bf16.msra.mxu0 0
    %2682 = vmatprep.subr.bf16.mxu0 0
    %2683 = vmatpush1.bf16.msra.mxu0 0
    %2684 = vmatprep.subr.bf16.mxu0 0
    %2685 = vmatpush1.bf16.msra.mxu0 0
    %2686 = vmatprep.subr.bf16.mxu0 0
    %2687 = vmatpush1.bf16.msra.mxu0 0
    %2688 = vmatprep.subr.bf16.mxu0 0
    %2689 = vmatpush1.bf16.msra.mxu0 0
    %2690 = vmatprep.subr.bf16.mxu0 0
    %2691 = vmatpush1.bf16.msra.mxu0 0
    %2692 = vmatprep.subr.bf16.mxu0 %v2676
    %2693 = vmatpush1.bf16.msra.mxu0 %v2673
    %2694 = vmatprep.subr.bf16.mxu0 0
    %2695 = vmatpush2.bf16.msra.mxu0 0
    %2696 = vmatprep.subr.bf16.mxu0 0
    %2697 = vmatpush2.bf16.msra.mxu0 0
    %2698 = vmatprep.subr.bf16.mxu0 0
    %2699 = vmatpush2.bf16.msra.mxu0 0
    %2700 = vmatprep.subr.bf16.mxu0 0
    %2701 = vmatpush2.bf16.msra.mxu0 0
    %2702 = vmatprep.subr.bf16.mxu0 0
    %2703 = vmatpush2.bf16.msra.mxu0 0
    %2704 = vmatprep.subr.bf16.mxu0 0
    %2705 = vmatpush2.bf16.msra.mxu0 0
    %2706 = vmatprep.subr.bf16.mxu0 0
    %2707 = vmatpush2.bf16.msra.mxu0 0
    %2708 = vmatprep.subr.bf16.mxu0 0
    %2709 = vmatpush2.bf16.msra.mxu0 0
    %2710 = vmatprep.mubr.bf16.mxu0 0
    %2711 = vmatmul.mubr.bf16.gmra.mxu0 %v247
    %v2712 = vpop.f32.mrf.mxu0
    %v2713 = vadd.f32 %v168, %v2712
    %v2714 = vpop.f32.mrf.mxu0
    %v2715 = vadd.f32 %v170, %v2714
    %v2716 = vpop.f32.mrf.mxu0
    %v2717 = vadd.f32 %v172, %v2716
    %v2718 = vpop.f32.mrf.mxu0
    %v2719 = vadd.f32 %v174, %v2718
    %2720 = vmatprep.mubr.bf16.mxu0 0
    %2721 = vmatmul.mubr.bf16.gmra.mxu0 %v250
    %v2722 = vpop.f32.mrf.mxu0
    %v2723 = vadd.f32 %v178, %v2722
    %v2724 = vpop.f32.mrf.mxu0
    %v2725 = vadd.f32 %v180, %v2724
    %v2726 = vpop.f32.mrf.mxu0
    %v2727 = vadd.f32 %v182, %v2726
    %v2728 = vpop.f32.mrf.mxu0
    %v2729 = vadd.f32 %v184, %v2728
    %2730 = vmatprep.mubr.bf16.mxu0 0
    %2731 = vmatmul.mubr.bf16.gmra.mxu0 %v253
    %v2732 = vpop.f32.mrf.mxu0
    %v2733 = vadd.f32 %v188, %v2732
    %v2734 = vpop.f32.mrf.mxu0
    %v2735 = vadd.f32 %v190, %v2734
    %v2736 = vpop.f32.mrf.mxu0
    %v2737 = vadd.f32 %v192, %v2736
    %v2738 = vpop.f32.mrf.mxu0
    %v2739 = vadd.f32 %v194, %v2738
    %2740 = vmatprep.mubr.bf16.mxu0 0
    %2741 = vmatmul.mubr.bf16.gmra.mxu0 %v256
    %v2742 = vpop.f32.mrf.mxu0
    %v2743 = vadd.f32 %v198, %v2742
    %v2744 = vpop.f32.mrf.mxu0
    %v2745 = vadd.f32 %v200, %v2744
    %v2746 = vpop.f32.mrf.mxu0
    %v2747 = vadd.f32 %v202, %v2746
    %v2748 = vpop.f32.mrf.mxu0
    %v2749 = vadd.f32 %v204, %v2748
    %2750 = vdwg.mxu0
    %2752 = vset.pattern.permute.xlu0 0
    %2753 = vperm.xlu0 %2752, %v2662
    %v2754 = vpop.permute.xlu0 %2753
    %2757 = vset.pattern.permute.xlu0 0
    %2758 = vperm.xlu0 %2757, %v2663
    %v2759 = vpop.permute.xlu0 %2758
    %2762 = vset.pattern.permute.xlu0 0
    %2763 = vperm.xlu0 %2762, %v2664
    %v2764 = vpop.permute.xlu0 %2763
    %2767 = vset.pattern.permute.xlu0 0
    %2768 = vperm.xlu0 %2767, %v2665
    %v2769 = vpop.permute.xlu0 %2768
    %2772 = vset.pattern.permute.xlu0 0
    %2773 = vperm.xlu0 %2772, %v2666
    %v2774 = vpop.permute.xlu0 %2773
    %2777 = vset.pattern.permute.xlu0 0
    %2778 = vperm.xlu0 %2777, %v2667
    %v2779 = vpop.permute.xlu0 %2778
    %2782 = vset.pattern.permute.xlu0 0
    %2783 = vperm.xlu0 %2782, %v2668
    %v2784 = vpop.permute.xlu0 %2783
    %2787 = vset.pattern.permute.xlu0 0
    %2788 = vperm.xlu0 %2787, %v2669
    %v2789 = vpop.permute.xlu0 %2788
    %v2791 = vadd.f32 %v2713, %v2754
    %v2792 = vadd.f32 %v2715, %v2754
    %v2793 = vadd.f32 %v2717, %v2759
    %v2794 = vadd.f32 %v2719, %v2759
    %v2795 = vadd.f32 %v2723, %v2764
    %v2796 = vadd.f32 %v2725, %v2764
    %v2797 = vadd.f32 %v2727, %v2769
    %v2798 = vadd.f32 %v2729, %v2769
    %v2799 = vadd.f32 %v2733, %v2774
    %v2800 = vadd.f32 %v2735, %v2774
    %v2801 = vadd.f32 %v2737, %v2779
    %v2802 = vadd.f32 %v2739, %v2779
    %v2803 = vadd.f32 %v2743, %v2784
    %v2804 = vadd.f32 %v2745, %v2784
    %v2805 = vadd.f32 %v2747, %v2789
    %v2806 = vadd.f32 %v2749, %v2789
    %v2807 = vmax.f32 %v2791, 0.0
    %v2808 = vmax.f32 %v2792, 0.0
    %v2809 = vmax.f32 %v2793, 0.0
    %v2810 = vmax.f32 %v2794, 0.0
    %v2811 = vmax.f32 %v2795, 0.0
    %v2812 = vmax.f32 %v2796, 0.0
    %v2813 = vmax.f32 %v2797, 0.0
    %v2814 = vmax.f32 %v2798, 0.0
    %v2815 = vmax.f32 %v2799, 0.0
    %v2816 = vmax.f32 %v2800, 0.0
    %v2817 = vmax.f32 %v2801, 0.0
    %v2818 = vmax.f32 %v2802, 0.0
    %v2819 = vmax.f32 %v2803, 0.0
    %v2820 = vmax.f32 %v2804, 0.0
    %v2821 = vmax.f32 %v2805, 0.0
    %v2822 = vmax.f32 %v2806, 0.0
    %v2823 = vpack.c.bf16 %v2809, %v2807
    %v2824 = vpack.c.bf16 %v2810, %v2808
    %v2825 = vpack.c.bf16 %v2813, %v2811
    %v2826 = vpack.c.bf16 %v2814, %v2812
    %v2827 = vpack.c.bf16 %v2817, %v2815
    %v2828 = vpack.c.bf16 %v2818, %v2816
    %v2829 = vpack.c.bf16 %v2821, %v2819
    %v2830 = vpack.c.bf16 %v2822, %v2820
    %2831 = vmatprep.subr.bf16.mxu0 0
    %2832 = vmatpush1.bf16.msra.mxu0 0
    %2833 = vmatprep.subr.bf16.mxu0 0
    %2834 = vmatpush1.bf16.msra.mxu0 0
    %2835 = vmatprep.subr.bf16.mxu0 0
    %2836 = vmatpush1.bf16.msra.mxu0 0
    %2837 = vmatprep.subr.bf16.mxu0 0
    %2838 = vmatpush1.bf16.msra.mxu0 0
    %2839 = vmatprep.subr.bf16.mxu0 %v2830
    %2840 = vmatpush1.bf16.msra.mxu0 %v2829
    %2841 = vmatprep.subr.bf16.mxu0 %v2828
    %2842 = vmatpush1.bf16.msra.mxu0 %v2827
    %2843 = vmatprep.subr.bf16.mxu0 %v2826
    %2844 = vmatpush1.bf16.msra.mxu0 %v2825
    %2845 = vmatprep.subr.bf16.mxu0 %v2824
    %2846 = vmatpush1.bf16.msra.mxu0 %v2823
    %2847 = vmatprep.subr.bf16.mxu0 0
    %2848 = vmatpush2.bf16.msra.mxu0 0
    %2849 = vmatprep.subr.bf16.mxu0 0
    %2850 = vmatpush2.bf16.msra.mxu0 0
    %2851 = vmatprep.subr.bf16.mxu0 0
    %2852 = vmatpush2.bf16.msra.mxu0 0
    %2853 = vmatprep.subr.bf16.mxu0 0
    %2854 = vmatpush2.bf16.msra.mxu0 0
    %2855 = vmatprep.subr.bf16.mxu0 0
    %2856 = vmatpush2.bf16.msra.mxu0 0
    %2857 = vmatprep.subr.bf16.mxu0 0
    %2858 = vmatpush2.bf16.msra.mxu0 0
    %2859 = vmatprep.subr.bf16.mxu0 0
    %2860 = vmatpush2.bf16.msra.mxu0 0
    %2861 = vmatprep.subr.bf16.mxu0 0
    %2862 = vmatpush2.bf16.msra.mxu0 0
    %2863 = vmatprep.mubr.bf16.mxu0 0
    %2864 = vmatmul.mubr.bf16.gmra.mxu0 %v424
    %v2865 = vpop.f32.mrf.mxu0
    %v2866 = vadd.f32 %v420, %v2865
    %v2867 = vpop.f32.mrf.mxu0
    %v2868 = vadd.f32 %v420, %v2867
    %v2869 = vpop.f32.mrf.mxu0
    %v2870 = vpop.f32.mrf.mxu0
    %2871 = vdwg.mxu0
    %v2872 = vsub.f32 %v2651, %v2866
    %v2873 = vsub.f32 %v2652, %v2868
    %v2874 = vstv %s2639
    %v2875 = vmul.f32 %v2872, %v2874
    %v2876 = vmul.f32 %v2873, %v2874
    %v2877 = vstv %s2642
    %v2878 = vmul.f32 %v2877, %v2875
    %v2879 = vmul.f32 %v2877, %v2876
    %v2880 = vadd.f32 %v2651, %v2878
    %v2881 = vadd.f32 %v2652, %v2879
    %v2882 = vstv %s2640
    %v2883 = vmul.f32 %v2882, %v88
    %v2884 = vmul.f32 %v2882, %v89
    %v2885 = vmul.f32 %v2882, %v90
    %v2886 = vmul.f32 %v2882, %v91
    %v2887 = vmul.f32 %v2882, %v92
    %v2888 = vmul.f32 %v2882, %v93
    %v2889 = vmul.f32 %v2882, %v94
    %v2890 = vmul.f32 %v2882, %v95
    %v2891 = vadd.f32 %v80, %v2883
    %v2892 = vadd.f32 %v81, %v2884
    %v2893 = vadd.f32 %v82, %v2885
    %v2894 = vadd.f32 %v83, %v2886
    %v2895 = vadd.f32 %v84, %v2887
    %v2896 = vadd.f32 %v85, %v2888
    %v2897 = vadd.f32 %v86, %v2889
    %v2898 = vadd.f32 %v87, %v2890
    %v2899 = vpack.c.bf16 %v2880, %v2880
    %v2900 = vpack.c.bf16 %v2881, %v2881
    %v2902 = vsel %vm126, %v2899, 0
    %v2905 = vsel %vm126, %v2900, 0
    %2907 = vmatprep.subr.bf16.mxu0 0
    %2908 = vmatpush1.bf16.msra.mxu0 0
    %2909 = vmatprep.subr.bf16.mxu0 0
    %2910 = vmatpush1.bf16.msra.mxu0 0
    %2911 = vmatprep.subr.bf16.mxu0 0
    %2912 = vmatpush1.bf16.msra.mxu0 0
    %2913 = vmatprep.subr.bf16.mxu0 0
    %2914 = vmatpush1.bf16.msra.mxu0 0
    %2915 = vmatprep.subr.bf16.mxu0 0
    %2916 = vmatpush1.bf16.msra.mxu0 0
    %2917 = vmatprep.subr.bf16.mxu0 0
    %2918 = vmatpush1.bf16.msra.mxu0 0
    %2919 = vmatprep.subr.bf16.mxu0 0
    %2920 = vmatpush1.bf16.msra.mxu0 0
    %2921 = vmatprep.subr.bf16.mxu0 %v2905
    %2922 = vmatpush1.bf16.msra.mxu0 %v2902
    %2923 = vmatprep.subr.bf16.mxu0 0
    %2924 = vmatpush2.bf16.msra.mxu0 0
    %2925 = vmatprep.subr.bf16.mxu0 0
    %2926 = vmatpush2.bf16.msra.mxu0 0
    %2927 = vmatprep.subr.bf16.mxu0 0
    %2928 = vmatpush2.bf16.msra.mxu0 0
    %2929 = vmatprep.subr.bf16.mxu0 0
    %2930 = vmatpush2.bf16.msra.mxu0 0
    %2931 = vmatprep.subr.bf16.mxu0 0
    %2932 = vmatpush2.bf16.msra.mxu0 0
    %2933 = vmatprep.subr.bf16.mxu0 0
    %2934 = vmatpush2.bf16.msra.mxu0 0
    %2935 = vmatprep.subr.bf16.mxu0 0
    %2936 = vmatpush2.bf16.msra.mxu0 0
    %2937 = vmatprep.subr.bf16.mxu0 0
    %2938 = vmatpush2.bf16.msra.mxu0 0
    %2939 = vmatprep.mubr.bf16.mxu0 0
    %2940 = vmatmul.mubr.bf16.gmra.mxu0 %v247
    %v2941 = vpop.f32.mrf.mxu0
    %v2942 = vadd.f32 %v168, %v2941
    %v2943 = vpop.f32.mrf.mxu0
    %v2944 = vadd.f32 %v170, %v2943
    %v2945 = vpop.f32.mrf.mxu0
    %v2946 = vadd.f32 %v172, %v2945
    %v2947 = vpop.f32.mrf.mxu0
    %v2948 = vadd.f32 %v174, %v2947
    %2949 = vmatprep.mubr.bf16.mxu0 0
    %2950 = vmatmul.mubr.bf16.gmra.mxu0 %v250
    %v2951 = vpop.f32.mrf.mxu0
    %v2952 = vadd.f32 %v178, %v2951
    %v2953 = vpop.f32.mrf.mxu0
    %v2954 = vadd.f32 %v180, %v2953
    %v2955 = vpop.f32.mrf.mxu0
    %v2956 = vadd.f32 %v182, %v2955
    %v2957 = vpop.f32.mrf.mxu0
    %v2958 = vadd.f32 %v184, %v2957
    %2959 = vmatprep.mubr.bf16.mxu0 0
    %2960 = vmatmul.mubr.bf16.gmra.mxu0 %v253
    %v2961 = vpop.f32.mrf.mxu0
    %v2962 = vadd.f32 %v188, %v2961
    %v2963 = vpop.f32.mrf.mxu0
    %v2964 = vadd.f32 %v190, %v2963
    %v2965 = vpop.f32.mrf.mxu0
    %v2966 = vadd.f32 %v192, %v2965
    %v2967 = vpop.f32.mrf.mxu0
    %v2968 = vadd.f32 %v194, %v2967
    %2969 = vmatprep.mubr.bf16.mxu0 0
    %2970 = vmatmul.mubr.bf16.gmra.mxu0 %v256
    %v2971 = vpop.f32.mrf.mxu0
    %v2972 = vadd.f32 %v198, %v2971
    %v2973 = vpop.f32.mrf.mxu0
    %v2974 = vadd.f32 %v200, %v2973
    %v2975 = vpop.f32.mrf.mxu0
    %v2976 = vadd.f32 %v202, %v2975
    %v2977 = vpop.f32.mrf.mxu0
    %v2978 = vadd.f32 %v204, %v2977
    %2979 = vdwg.mxu0
    %2981 = vset.pattern.permute.xlu0 0
    %2982 = vperm.xlu0 %2981, %v2891
    %v2983 = vpop.permute.xlu0 %2982
    %2986 = vset.pattern.permute.xlu0 0
    %2987 = vperm.xlu0 %2986, %v2892
    %v2988 = vpop.permute.xlu0 %2987
    %2991 = vset.pattern.permute.xlu0 0
    %2992 = vperm.xlu0 %2991, %v2893
    %v2993 = vpop.permute.xlu0 %2992
    %2996 = vset.pattern.permute.xlu0 0
    %2997 = vperm.xlu0 %2996, %v2894
    %v2998 = vpop.permute.xlu0 %2997
    %3001 = vset.pattern.permute.xlu0 0
    %3002 = vperm.xlu0 %3001, %v2895
    %v3003 = vpop.permute.xlu0 %3002
    %3006 = vset.pattern.permute.xlu0 0
    %3007 = vperm.xlu0 %3006, %v2896
    %v3008 = vpop.permute.xlu0 %3007
    %3011 = vset.pattern.permute.xlu0 0
    %3012 = vperm.xlu0 %3011, %v2897
    %v3013 = vpop.permute.xlu0 %3012
    %3016 = vset.pattern.permute.xlu0 0
    %3017 = vperm.xlu0 %3016, %v2898
    %v3018 = vpop.permute.xlu0 %3017
    %v3020 = vadd.f32 %v2942, %v2983
    %v3021 = vadd.f32 %v2944, %v2983
    %v3022 = vadd.f32 %v2946, %v2988
    %v3023 = vadd.f32 %v2948, %v2988
    %v3024 = vadd.f32 %v2952, %v2993
    %v3025 = vadd.f32 %v2954, %v2993
    %v3026 = vadd.f32 %v2956, %v2998
    %v3027 = vadd.f32 %v2958, %v2998
    %v3028 = vadd.f32 %v2962, %v3003
    %v3029 = vadd.f32 %v2964, %v3003
    %v3030 = vadd.f32 %v2966, %v3008
    %v3031 = vadd.f32 %v2968, %v3008
    %v3032 = vadd.f32 %v2972, %v3013
    %v3033 = vadd.f32 %v2974, %v3013
    %v3034 = vadd.f32 %v2976, %v3018
    %v3035 = vadd.f32 %v2978, %v3018
    %v3036 = vmax.f32 %v3020, 0.0
    %v3037 = vmax.f32 %v3021, 0.0
    %v3038 = vmax.f32 %v3022, 0.0
    %v3039 = vmax.f32 %v3023, 0.0
    %v3040 = vmax.f32 %v3024, 0.0
    %v3041 = vmax.f32 %v3025, 0.0
    %v3042 = vmax.f32 %v3026, 0.0
    %v3043 = vmax.f32 %v3027, 0.0
    %v3044 = vmax.f32 %v3028, 0.0
    %v3045 = vmax.f32 %v3029, 0.0
    %v3046 = vmax.f32 %v3030, 0.0
    %v3047 = vmax.f32 %v3031, 0.0
    %v3048 = vmax.f32 %v3032, 0.0
    %v3049 = vmax.f32 %v3033, 0.0
    %v3050 = vmax.f32 %v3034, 0.0
    %v3051 = vmax.f32 %v3035, 0.0
    %v3052 = vpack.c.bf16 %v3038, %v3036
    %v3053 = vpack.c.bf16 %v3039, %v3037
    %v3054 = vpack.c.bf16 %v3042, %v3040
    %v3055 = vpack.c.bf16 %v3043, %v3041
    %v3056 = vpack.c.bf16 %v3046, %v3044
    %v3057 = vpack.c.bf16 %v3047, %v3045
    %v3058 = vpack.c.bf16 %v3050, %v3048
    %v3059 = vpack.c.bf16 %v3051, %v3049
    %3060 = vmatprep.subr.bf16.mxu0 0
    %3061 = vmatpush1.bf16.msra.mxu0 0
    %3062 = vmatprep.subr.bf16.mxu0 0
    %3063 = vmatpush1.bf16.msra.mxu0 0
    %3064 = vmatprep.subr.bf16.mxu0 0
    %3065 = vmatpush1.bf16.msra.mxu0 0
    %3066 = vmatprep.subr.bf16.mxu0 0
    %3067 = vmatpush1.bf16.msra.mxu0 0
    %3068 = vmatprep.subr.bf16.mxu0 %v3059
    %3069 = vmatpush1.bf16.msra.mxu0 %v3058
    %3070 = vmatprep.subr.bf16.mxu0 %v3057
    %3071 = vmatpush1.bf16.msra.mxu0 %v3056
    %3072 = vmatprep.subr.bf16.mxu0 %v3055
    %3073 = vmatpush1.bf16.msra.mxu0 %v3054
    %3074 = vmatprep.subr.bf16.mxu0 %v3053
    %3075 = vmatpush1.bf16.msra.mxu0 %v3052
    %3076 = vmatprep.subr.bf16.mxu0 0
    %3077 = vmatpush2.bf16.msra.mxu0 0
    %3078 = vmatprep.subr.bf16.mxu0 0
    %3079 = vmatpush2.bf16.msra.mxu0 0
    %3080 = vmatprep.subr.bf16.mxu0 0
    %3081 = vmatpush2.bf16.msra.mxu0 0
    %3082 = vmatprep.subr.bf16.mxu0 0
    %3083 = vmatpush2.bf16.msra.mxu0 0
    %3084 = vmatprep.subr.bf16.mxu0 0
    %3085 = vmatpush2.bf16.msra.mxu0 0
    %3086 = vmatprep.subr.bf16.mxu0 0
    %3087 = vmatpush2.bf16.msra.mxu0 0
    %3088 = vmatprep.subr.bf16.mxu0 0
    %3089 = vmatpush2.bf16.msra.mxu0 0
    %3090 = vmatprep.subr.bf16.mxu0 0
    %3091 = vmatpush2.bf16.msra.mxu0 0
    %3092 = vmatprep.mubr.bf16.mxu0 0
    %3093 = vmatmul.mubr.bf16.gmra.mxu0 %v424
    %v3094 = vpop.f32.mrf.mxu0
    %v3095 = vadd.f32 %v420, %v3094
    %v3096 = vpop.f32.mrf.mxu0
    %v3097 = vadd.f32 %v420, %v3096
    %v3098 = vpop.f32.mrf.mxu0
    %v3099 = vpop.f32.mrf.mxu0
    %3100 = vdwg.mxu0
    %v3101 = vsub.f32 %v2880, %v3095
    %v3102 = vsub.f32 %v2881, %v3097
    %v3103 = vstv %s2641
    %v3104 = vmul.f32 %v3101, %v3103
    %v3105 = vmul.f32 %v3102, %v3103
    %v3106 = vstv %s2643
    %v3107 = vmul.f32 %v3106, %v2875
    %v3108 = vmul.f32 %v3106, %v2876
    %v3109 = vstv %s2644
    %v3110 = vmul.f32 %v3109, %v3104
    %v3111 = vmul.f32 %v3109, %v3105
    %v3112 = vadd.f32 %v3107, %v3110
    %v3113 = vadd.f32 %v3108, %v3111
    %v3114 = vmul.f32 %v2877, %v3112
    %v3115 = vmul.f32 %v2877, %v3113
    %v3116 = vadd.f32 %v2651, %v3114
    %v3117 = vadd.f32 %v2652, %v3115
    %s3118 = sld [smem:[#allocation3 + $0x30]]
    %s3119 = sld [smem:[#allocation3 + $0x31]]
    %s3120 = sld [smem:[#allocation3 + $0x32]]
    %s3121 = sld [smem:[#allocation3 + $0x33]]
    %s3122 = sld [smem:[#allocation3 + $0x34]]
    %s3123 = sld [smem:[#allocation3 + $0x35]]
    %s3124 = sld [smem:[#allocation3 + $0x36]]
    %s3125 = sld [smem:[#allocation3 + $0x37]]
    %s3126 = scalar_lea.vmem %s4, 96
    %v3127 = vld [vmem:[%s3126] sm:$0xff]
    %v3128 = vld [vmem:[%s3126 + $0x8] sm:$0xff]
    %v3129 = vstv %s3118
    %v3130 = vmul.f32 %v3129, %v3127
    %v3131 = vmul.f32 %v3129, %v3128
    %v3132 = vadd.f32 %v3116, %v3130
    %v3133 = vadd.f32 %v3117, %v3131
    %v3134 = vstv %s3119
    %v3135 = vmul.f32 %v3134, %v88
    %v3136 = vmul.f32 %v3134, %v89
    %v3137 = vmul.f32 %v3134, %v90
    %v3138 = vmul.f32 %v3134, %v91
    %v3139 = vmul.f32 %v3134, %v92
    %v3140 = vmul.f32 %v3134, %v93
    %v3141 = vmul.f32 %v3134, %v94
    %v3142 = vmul.f32 %v3134, %v95
    %v3143 = vadd.f32 %v80, %v3135
    %v3144 = vadd.f32 %v81, %v3136
    %v3145 = vadd.f32 %v82, %v3137
    %v3146 = vadd.f32 %v83, %v3138
    %v3147 = vadd.f32 %v84, %v3139
    %v3148 = vadd.f32 %v85, %v3140
    %v3149 = vadd.f32 %v86, %v3141
    %v3150 = vadd.f32 %v87, %v3142
    %v3151 = vpack.c.bf16 %v3132, %v3132
    %v3152 = vpack.c.bf16 %v3133, %v3133
    %v3154 = vsel %vm126, %v3151, 0
    %v3157 = vsel %vm126, %v3152, 0
    %3159 = vmatprep.subr.bf16.mxu0 0
    %3160 = vmatpush1.bf16.msra.mxu0 0
    %3161 = vmatprep.subr.bf16.mxu0 0
    %3162 = vmatpush1.bf16.msra.mxu0 0
    %3163 = vmatprep.subr.bf16.mxu0 0
    %3164 = vmatpush1.bf16.msra.mxu0 0
    %3165 = vmatprep.subr.bf16.mxu0 0
    %3166 = vmatpush1.bf16.msra.mxu0 0
    %3167 = vmatprep.subr.bf16.mxu0 0
    %3168 = vmatpush1.bf16.msra.mxu0 0
    %3169 = vmatprep.subr.bf16.mxu0 0
    %3170 = vmatpush1.bf16.msra.mxu0 0
    %3171 = vmatprep.subr.bf16.mxu0 0
    %3172 = vmatpush1.bf16.msra.mxu0 0
    %3173 = vmatprep.subr.bf16.mxu0 %v3157
    %3174 = vmatpush1.bf16.msra.mxu0 %v3154
    %3175 = vmatprep.subr.bf16.mxu0 0
    %3176 = vmatpush2.bf16.msra.mxu0 0
    %3177 = vmatprep.subr.bf16.mxu0 0
    %3178 = vmatpush2.bf16.msra.mxu0 0
    %3179 = vmatprep.subr.bf16.mxu0 0
    %3180 = vmatpush2.bf16.msra.mxu0 0
    %3181 = vmatprep.subr.bf16.mxu0 0
    %3182 = vmatpush2.bf16.msra.mxu0 0
    %3183 = vmatprep.subr.bf16.mxu0 0
    %3184 = vmatpush2.bf16.msra.mxu0 0
    %3185 = vmatprep.subr.bf16.mxu0 0
    %3186 = vmatpush2.bf16.msra.mxu0 0
    %3187 = vmatprep.subr.bf16.mxu0 0
    %3188 = vmatpush2.bf16.msra.mxu0 0
    %3189 = vmatprep.subr.bf16.mxu0 0
    %3190 = vmatpush2.bf16.msra.mxu0 0
    %3191 = vmatprep.mubr.bf16.mxu0 0
    %3192 = vmatmul.mubr.bf16.gmra.mxu0 %v247
    %v3193 = vpop.f32.mrf.mxu0
    %v3194 = vadd.f32 %v168, %v3193
    %v3195 = vpop.f32.mrf.mxu0
    %v3196 = vadd.f32 %v170, %v3195
    %v3197 = vpop.f32.mrf.mxu0
    %v3198 = vadd.f32 %v172, %v3197
    %v3199 = vpop.f32.mrf.mxu0
    %v3200 = vadd.f32 %v174, %v3199
    %3201 = vmatprep.mubr.bf16.mxu0 0
    %3202 = vmatmul.mubr.bf16.gmra.mxu0 %v250
    %v3203 = vpop.f32.mrf.mxu0
    %v3204 = vadd.f32 %v178, %v3203
    %v3205 = vpop.f32.mrf.mxu0
    %v3206 = vadd.f32 %v180, %v3205
    %v3207 = vpop.f32.mrf.mxu0
    %v3208 = vadd.f32 %v182, %v3207
    %v3209 = vpop.f32.mrf.mxu0
    %v3210 = vadd.f32 %v184, %v3209
    %3211 = vmatprep.mubr.bf16.mxu0 0
    %3212 = vmatmul.mubr.bf16.gmra.mxu0 %v253
    %v3213 = vpop.f32.mrf.mxu0
    %v3214 = vadd.f32 %v188, %v3213
    %v3215 = vpop.f32.mrf.mxu0
    %v3216 = vadd.f32 %v190, %v3215
    %v3217 = vpop.f32.mrf.mxu0
    %v3218 = vadd.f32 %v192, %v3217
    %v3219 = vpop.f32.mrf.mxu0
    %v3220 = vadd.f32 %v194, %v3219
    %3221 = vmatprep.mubr.bf16.mxu0 0
    %3222 = vmatmul.mubr.bf16.gmra.mxu0 %v256
    %v3223 = vpop.f32.mrf.mxu0
    %v3224 = vadd.f32 %v198, %v3223
    %v3225 = vpop.f32.mrf.mxu0
    %v3226 = vadd.f32 %v200, %v3225
    %v3227 = vpop.f32.mrf.mxu0
    %v3228 = vadd.f32 %v202, %v3227
    %v3229 = vpop.f32.mrf.mxu0
    %v3230 = vadd.f32 %v204, %v3229
    %3231 = vdwg.mxu0
    %3233 = vset.pattern.permute.xlu0 0
    %3234 = vperm.xlu0 %3233, %v3143
    %v3235 = vpop.permute.xlu0 %3234
    %3238 = vset.pattern.permute.xlu0 0
    %3239 = vperm.xlu0 %3238, %v3144
    %v3240 = vpop.permute.xlu0 %3239
    %3243 = vset.pattern.permute.xlu0 0
    %3244 = vperm.xlu0 %3243, %v3145
    %v3245 = vpop.permute.xlu0 %3244
    %3248 = vset.pattern.permute.xlu0 0
    %3249 = vperm.xlu0 %3248, %v3146
    %v3250 = vpop.permute.xlu0 %3249
    %3253 = vset.pattern.permute.xlu0 0
    %3254 = vperm.xlu0 %3253, %v3147
    %v3255 = vpop.permute.xlu0 %3254
    %3258 = vset.pattern.permute.xlu0 0
    %3259 = vperm.xlu0 %3258, %v3148
    %v3260 = vpop.permute.xlu0 %3259
    %3263 = vset.pattern.permute.xlu0 0
    %3264 = vperm.xlu0 %3263, %v3149
    %v3265 = vpop.permute.xlu0 %3264
    %3268 = vset.pattern.permute.xlu0 0
    %3269 = vperm.xlu0 %3268, %v3150
    %v3270 = vpop.permute.xlu0 %3269
    %v3272 = vadd.f32 %v3194, %v3235
    %v3273 = vadd.f32 %v3196, %v3235
    %v3274 = vadd.f32 %v3198, %v3240
    %v3275 = vadd.f32 %v3200, %v3240
    %v3276 = vadd.f32 %v3204, %v3245
    %v3277 = vadd.f32 %v3206, %v3245
    %v3278 = vadd.f32 %v3208, %v3250
    %v3279 = vadd.f32 %v3210, %v3250
    %v3280 = vadd.f32 %v3214, %v3255
    %v3281 = vadd.f32 %v3216, %v3255
    %v3282 = vadd.f32 %v3218, %v3260
    %v3283 = vadd.f32 %v3220, %v3260
    %v3284 = vadd.f32 %v3224, %v3265
    %v3285 = vadd.f32 %v3226, %v3265
    %v3286 = vadd.f32 %v3228, %v3270
    %v3287 = vadd.f32 %v3230, %v3270
    %v3288 = vmax.f32 %v3272, 0.0
    %v3289 = vmax.f32 %v3273, 0.0
    %v3290 = vmax.f32 %v3274, 0.0
    %v3291 = vmax.f32 %v3275, 0.0
    %v3292 = vmax.f32 %v3276, 0.0
    %v3293 = vmax.f32 %v3277, 0.0
    %v3294 = vmax.f32 %v3278, 0.0
    %v3295 = vmax.f32 %v3279, 0.0
    %v3296 = vmax.f32 %v3280, 0.0
    %v3297 = vmax.f32 %v3281, 0.0
    %v3298 = vmax.f32 %v3282, 0.0
    %v3299 = vmax.f32 %v3283, 0.0
    %v3300 = vmax.f32 %v3284, 0.0
    %v3301 = vmax.f32 %v3285, 0.0
    %v3302 = vmax.f32 %v3286, 0.0
    %v3303 = vmax.f32 %v3287, 0.0
    %v3304 = vpack.c.bf16 %v3290, %v3288
    %v3305 = vpack.c.bf16 %v3291, %v3289
    %v3306 = vpack.c.bf16 %v3294, %v3292
    %v3307 = vpack.c.bf16 %v3295, %v3293
    %v3308 = vpack.c.bf16 %v3298, %v3296
    %v3309 = vpack.c.bf16 %v3299, %v3297
    %v3310 = vpack.c.bf16 %v3302, %v3300
    %v3311 = vpack.c.bf16 %v3303, %v3301
    %3312 = vmatprep.subr.bf16.mxu0 0
    %3313 = vmatpush1.bf16.msra.mxu0 0
    %3314 = vmatprep.subr.bf16.mxu0 0
    %3315 = vmatpush1.bf16.msra.mxu0 0
    %3316 = vmatprep.subr.bf16.mxu0 0
    %3317 = vmatpush1.bf16.msra.mxu0 0
    %3318 = vmatprep.subr.bf16.mxu0 0
    %3319 = vmatpush1.bf16.msra.mxu0 0
    %3320 = vmatprep.subr.bf16.mxu0 %v3311
    %3321 = vmatpush1.bf16.msra.mxu0 %v3310
    %3322 = vmatprep.subr.bf16.mxu0 %v3309
    %3323 = vmatpush1.bf16.msra.mxu0 %v3308
    %3324 = vmatprep.subr.bf16.mxu0 %v3307
    %3325 = vmatpush1.bf16.msra.mxu0 %v3306
    %3326 = vmatprep.subr.bf16.mxu0 %v3305
    %3327 = vmatpush1.bf16.msra.mxu0 %v3304
    %3328 = vmatprep.subr.bf16.mxu0 0
    %3329 = vmatpush2.bf16.msra.mxu0 0
    %3330 = vmatprep.subr.bf16.mxu0 0
    %3331 = vmatpush2.bf16.msra.mxu0 0
    %3332 = vmatprep.subr.bf16.mxu0 0
    %3333 = vmatpush2.bf16.msra.mxu0 0
    %3334 = vmatprep.subr.bf16.mxu0 0
    %3335 = vmatpush2.bf16.msra.mxu0 0
    %3336 = vmatprep.subr.bf16.mxu0 0
    %3337 = vmatpush2.bf16.msra.mxu0 0
    %3338 = vmatprep.subr.bf16.mxu0 0
    %3339 = vmatpush2.bf16.msra.mxu0 0
    %3340 = vmatprep.subr.bf16.mxu0 0
    %3341 = vmatpush2.bf16.msra.mxu0 0
    %3342 = vmatprep.subr.bf16.mxu0 0
    %3343 = vmatpush2.bf16.msra.mxu0 0
    %3344 = vmatprep.mubr.bf16.mxu0 0
    %3345 = vmatmul.mubr.bf16.gmra.mxu0 %v424
    %v3346 = vpop.f32.mrf.mxu0
    %v3347 = vadd.f32 %v420, %v3346
    %v3348 = vpop.f32.mrf.mxu0
    %v3349 = vadd.f32 %v420, %v3348
    %v3350 = vpop.f32.mrf.mxu0
    %v3351 = vpop.f32.mrf.mxu0
    %3352 = vdwg.mxu0
    %v3353 = vsub.f32 %v3132, %v3347
    %v3354 = vsub.f32 %v3133, %v3349
    %v3355 = vstv %s3120
    %v3356 = vmul.f32 %v3353, %v3355
    %v3357 = vmul.f32 %v3354, %v3355
    %v3358 = vstv %s3123
    %v3359 = vmul.f32 %v3358, %v3356
    %v3360 = vmul.f32 %v3358, %v3357
    %v3361 = vadd.f32 %v3132, %v3359
    %v3362 = vadd.f32 %v3133, %v3360
    %v3363 = vstv %s3121
    %v3364 = vmul.f32 %v3363, %v88
    %v3365 = vmul.f32 %v3363, %v89
    %v3366 = vmul.f32 %v3363, %v90
    %v3367 = vmul.f32 %v3363, %v91
    %v3368 = vmul.f32 %v3363, %v92
    %v3369 = vmul.f32 %v3363, %v93
    %v3370 = vmul.f32 %v3363, %v94
    %v3371 = vmul.f32 %v3363, %v95
    %v3372 = vadd.f32 %v80, %v3364
    %v3373 = vadd.f32 %v81, %v3365
    %v3374 = vadd.f32 %v82, %v3366
    %v3375 = vadd.f32 %v83, %v3367
    %v3376 = vadd.f32 %v84, %v3368
    %v3377 = vadd.f32 %v85, %v3369
    %v3378 = vadd.f32 %v86, %v3370
    %v3379 = vadd.f32 %v87, %v3371
    %v3380 = vpack.c.bf16 %v3361, %v3361
    %v3381 = vpack.c.bf16 %v3362, %v3362
    %v3383 = vsel %vm126, %v3380, 0
    %v3386 = vsel %vm126, %v3381, 0
    %3388 = vmatprep.subr.bf16.mxu0 0
    %3389 = vmatpush1.bf16.msra.mxu0 0
    %3390 = vmatprep.subr.bf16.mxu0 0
    %3391 = vmatpush1.bf16.msra.mxu0 0
    %3392 = vmatprep.subr.bf16.mxu0 0
    %3393 = vmatpush1.bf16.msra.mxu0 0
    %3394 = vmatprep.subr.bf16.mxu0 0
    %3395 = vmatpush1.bf16.msra.mxu0 0
    %3396 = vmatprep.subr.bf16.mxu0 0
    %3397 = vmatpush1.bf16.msra.mxu0 0
    %3398 = vmatprep.subr.bf16.mxu0 0
    %3399 = vmatpush1.bf16.msra.mxu0 0
    %3400 = vmatprep.subr.bf16.mxu0 0
    %3401 = vmatpush1.bf16.msra.mxu0 0
    %3402 = vmatprep.subr.bf16.mxu0 %v3386
    %3403 = vmatpush1.bf16.msra.mxu0 %v3383
    %3404 = vmatprep.subr.bf16.mxu0 0
    %3405 = vmatpush2.bf16.msra.mxu0 0
    %3406 = vmatprep.subr.bf16.mxu0 0
    %3407 = vmatpush2.bf16.msra.mxu0 0
    %3408 = vmatprep.subr.bf16.mxu0 0
    %3409 = vmatpush2.bf16.msra.mxu0 0
    %3410 = vmatprep.subr.bf16.mxu0 0
    %3411 = vmatpush2.bf16.msra.mxu0 0
    %3412 = vmatprep.subr.bf16.mxu0 0
    %3413 = vmatpush2.bf16.msra.mxu0 0
    %3414 = vmatprep.subr.bf16.mxu0 0
    %3415 = vmatpush2.bf16.msra.mxu0 0
    %3416 = vmatprep.subr.bf16.mxu0 0
    %3417 = vmatpush2.bf16.msra.mxu0 0
    %3418 = vmatprep.subr.bf16.mxu0 0
    %3419 = vmatpush2.bf16.msra.mxu0 0
    %3420 = vmatprep.mubr.bf16.mxu0 0
    %3421 = vmatmul.mubr.bf16.gmra.mxu0 %v247
    %v3422 = vpop.f32.mrf.mxu0
    %v3423 = vadd.f32 %v168, %v3422
    %v3424 = vpop.f32.mrf.mxu0
    %v3425 = vadd.f32 %v170, %v3424
    %v3426 = vpop.f32.mrf.mxu0
    %v3427 = vadd.f32 %v172, %v3426
    %v3428 = vpop.f32.mrf.mxu0
    %v3429 = vadd.f32 %v174, %v3428
    %3430 = vmatprep.mubr.bf16.mxu0 0
    %3431 = vmatmul.mubr.bf16.gmra.mxu0 %v250
    %v3432 = vpop.f32.mrf.mxu0
    %v3433 = vadd.f32 %v178, %v3432
    %v3434 = vpop.f32.mrf.mxu0
    %v3435 = vadd.f32 %v180, %v3434
    %v3436 = vpop.f32.mrf.mxu0
    %v3437 = vadd.f32 %v182, %v3436
    %v3438 = vpop.f32.mrf.mxu0
    %v3439 = vadd.f32 %v184, %v3438
    %3440 = vmatprep.mubr.bf16.mxu0 0
    %3441 = vmatmul.mubr.bf16.gmra.mxu0 %v253
    %v3442 = vpop.f32.mrf.mxu0
    %v3443 = vadd.f32 %v188, %v3442
    %v3444 = vpop.f32.mrf.mxu0
    %v3445 = vadd.f32 %v190, %v3444
    %v3446 = vpop.f32.mrf.mxu0
    %v3447 = vadd.f32 %v192, %v3446
    %v3448 = vpop.f32.mrf.mxu0
    %v3449 = vadd.f32 %v194, %v3448
    %3450 = vmatprep.mubr.bf16.mxu0 0
    %3451 = vmatmul.mubr.bf16.gmra.mxu0 %v256
    %v3452 = vpop.f32.mrf.mxu0
    %v3453 = vadd.f32 %v198, %v3452
    %v3454 = vpop.f32.mrf.mxu0
    %v3455 = vadd.f32 %v200, %v3454
    %v3456 = vpop.f32.mrf.mxu0
    %v3457 = vadd.f32 %v202, %v3456
    %v3458 = vpop.f32.mrf.mxu0
    %v3459 = vadd.f32 %v204, %v3458
    %3460 = vdwg.mxu0
    %3462 = vset.pattern.permute.xlu0 0
    %3463 = vperm.xlu0 %3462, %v3372
    %v3464 = vpop.permute.xlu0 %3463
    %3467 = vset.pattern.permute.xlu0 0
    %3468 = vperm.xlu0 %3467, %v3373
    %v3469 = vpop.permute.xlu0 %3468
    %3472 = vset.pattern.permute.xlu0 0
    %3473 = vperm.xlu0 %3472, %v3374
    %v3474 = vpop.permute.xlu0 %3473
    %3477 = vset.pattern.permute.xlu0 0
    %3478 = vperm.xlu0 %3477, %v3375
    %v3479 = vpop.permute.xlu0 %3478
    %3482 = vset.pattern.permute.xlu0 0
    %3483 = vperm.xlu0 %3482, %v3376
    %v3484 = vpop.permute.xlu0 %3483
    %3487 = vset.pattern.permute.xlu0 0
    %3488 = vperm.xlu0 %3487, %v3377
    %v3489 = vpop.permute.xlu0 %3488
    %3492 = vset.pattern.permute.xlu0 0
    %3493 = vperm.xlu0 %3492, %v3378
    %v3494 = vpop.permute.xlu0 %3493
    %3497 = vset.pattern.permute.xlu0 0
    %3498 = vperm.xlu0 %3497, %v3379
    %v3499 = vpop.permute.xlu0 %3498
    %v3501 = vadd.f32 %v3423, %v3464
    %v3502 = vadd.f32 %v3425, %v3464
    %v3503 = vadd.f32 %v3427, %v3469
    %v3504 = vadd.f32 %v3429, %v3469
    %v3505 = vadd.f32 %v3433, %v3474
    %v3506 = vadd.f32 %v3435, %v3474
    %v3507 = vadd.f32 %v3437, %v3479
    %v3508 = vadd.f32 %v3439, %v3479
    %v3509 = vadd.f32 %v3443, %v3484
    %v3510 = vadd.f32 %v3445, %v3484
    %v3511 = vadd.f32 %v3447, %v3489
    %v3512 = vadd.f32 %v3449, %v3489
    %v3513 = vadd.f32 %v3453, %v3494
    %v3514 = vadd.f32 %v3455, %v3494
    %v3515 = vadd.f32 %v3457, %v3499
    %v3516 = vadd.f32 %v3459, %v3499
    %v3517 = vmax.f32 %v3501, 0.0
    %v3518 = vmax.f32 %v3502, 0.0
    %v3519 = vmax.f32 %v3503, 0.0
    %v3520 = vmax.f32 %v3504, 0.0
    %v3521 = vmax.f32 %v3505, 0.0
    %v3522 = vmax.f32 %v3506, 0.0
    %v3523 = vmax.f32 %v3507, 0.0
    %v3524 = vmax.f32 %v3508, 0.0
    %v3525 = vmax.f32 %v3509, 0.0
    %v3526 = vmax.f32 %v3510, 0.0
    %v3527 = vmax.f32 %v3511, 0.0
    %v3528 = vmax.f32 %v3512, 0.0
    %v3529 = vmax.f32 %v3513, 0.0
    %v3530 = vmax.f32 %v3514, 0.0
    %v3531 = vmax.f32 %v3515, 0.0
    %v3532 = vmax.f32 %v3516, 0.0
    %v3533 = vpack.c.bf16 %v3519, %v3517
    %v3534 = vpack.c.bf16 %v3520, %v3518
    %v3535 = vpack.c.bf16 %v3523, %v3521
    %v3536 = vpack.c.bf16 %v3524, %v3522
    %v3537 = vpack.c.bf16 %v3527, %v3525
    %v3538 = vpack.c.bf16 %v3528, %v3526
    %v3539 = vpack.c.bf16 %v3531, %v3529
    %v3540 = vpack.c.bf16 %v3532, %v3530
    %3541 = vmatprep.subr.bf16.mxu0 0
    %3542 = vmatpush1.bf16.msra.mxu0 0
    %3543 = vmatprep.subr.bf16.mxu0 0
    %3544 = vmatpush1.bf16.msra.mxu0 0
    %3545 = vmatprep.subr.bf16.mxu0 0
    %3546 = vmatpush1.bf16.msra.mxu0 0
    %3547 = vmatprep.subr.bf16.mxu0 0
    %3548 = vmatpush1.bf16.msra.mxu0 0
    %3549 = vmatprep.subr.bf16.mxu0 %v3540
    %3550 = vmatpush1.bf16.msra.mxu0 %v3539
    %3551 = vmatprep.subr.bf16.mxu0 %v3538
    %3552 = vmatpush1.bf16.msra.mxu0 %v3537
    %3553 = vmatprep.subr.bf16.mxu0 %v3536
    %3554 = vmatpush1.bf16.msra.mxu0 %v3535
    %3555 = vmatprep.subr.bf16.mxu0 %v3534
    %3556 = vmatpush1.bf16.msra.mxu0 %v3533
    %3557 = vmatprep.subr.bf16.mxu0 0
    %3558 = vmatpush2.bf16.msra.mxu0 0
    %3559 = vmatprep.subr.bf16.mxu0 0
    %3560 = vmatpush2.bf16.msra.mxu0 0
    %3561 = vmatprep.subr.bf16.mxu0 0
    %3562 = vmatpush2.bf16.msra.mxu0 0
    %3563 = vmatprep.subr.bf16.mxu0 0
    %3564 = vmatpush2.bf16.msra.mxu0 0
    %3565 = vmatprep.subr.bf16.mxu0 0
    %3566 = vmatpush2.bf16.msra.mxu0 0
    %3567 = vmatprep.subr.bf16.mxu0 0
    %3568 = vmatpush2.bf16.msra.mxu0 0
    %3569 = vmatprep.subr.bf16.mxu0 0
    %3570 = vmatpush2.bf16.msra.mxu0 0
    %3571 = vmatprep.subr.bf16.mxu0 0
    %3572 = vmatpush2.bf16.msra.mxu0 0
    %3573 = vmatprep.mubr.bf16.mxu0 0
    %3574 = vmatmul.mubr.bf16.gmra.mxu0 %v424
    %v3575 = vpop.f32.mrf.mxu0
    %v3576 = vadd.f32 %v420, %v3575
    %v3577 = vpop.f32.mrf.mxu0
    %v3578 = vadd.f32 %v420, %v3577
    %v3579 = vpop.f32.mrf.mxu0
    %v3580 = vpop.f32.mrf.mxu0
    %3581 = vdwg.mxu0
    %v3582 = vsub.f32 %v3361, %v3576
    %v3583 = vsub.f32 %v3362, %v3578
    %v3584 = vstv %s3122
    %v3585 = vmul.f32 %v3582, %v3584
    %v3586 = vmul.f32 %v3583, %v3584
    %v3587 = vstv %s3124
    %v3588 = vmul.f32 %v3587, %v3356
    %v3589 = vmul.f32 %v3587, %v3357
    %v3590 = vstv %s3125
    %v3591 = vmul.f32 %v3590, %v3585
    %v3592 = vmul.f32 %v3590, %v3586
    %v3593 = vadd.f32 %v3588, %v3591
    %v3594 = vadd.f32 %v3589, %v3592
    %v3595 = vmul.f32 %v3358, %v3593
    %v3596 = vmul.f32 %v3358, %v3594
    %v3597 = vadd.f32 %v3132, %v3595
    %v3598 = vadd.f32 %v3133, %v3596
    %3599 = vst [vmem:[#allocation8] sm:$0xff] %v3597
    %3600 = vst [vmem:[#allocation8 + $0x8] sm:$0xff] %v3598
    // Predicated region
    $region54: #{_run.1} parent=1 // pred_check
      _
    $region55: #{_run.1} parent=1 // pred_check_branch
      %3602 = sbr.rel (0) target = $region57
    $region56: #{_run.1} parent=1 // pred_region
      %s3604 = ssub.s32 256, 256
      %3605 = vsyncadd [#allocation5], %s3604
      %s3607 = sshll.u32 [#allocation8], 4
      %s3608 = int_to_ptr.vmem [resolvable:$true] %s3607
      %3610 = dma.vmem_to_hbm [thread:$0]  %s3608, 256, %s11, [#allocation5]
    $region57: #{_run.1} parent=1 // pred_fallthru
      _
    // Predicated region
    $region58: #{_run.1} parent=1 // pred_check
      _
    $region59: #{_run.1} parent=1 // pred_check_branch
      %3612 = sbr.rel (0) target = $region61
    $region60: #{_run.1} parent=1 // pred_region
      %3613 = dma.done [#allocation5], 256
    $region61: #{_run.1} parent=1 // pred_fallthru
      _
    %3614 = vsyncpa [#allocation4], 1
    %3615 = vsyncpa [#allocation5], 1
    %3616 = vsyncpa [#allocation6], 1

</llo_original>
